<compile_context>
chip_gen: v5e
topology: v5e:2x2
jax: 0.10.0
libtpu: 0.0.40
codegen_flags: <defaults>
</compile_context>

<pallas_src>
import functools
import math

import jax
import jax.numpy as jnp
from jax.experimental import pallas as pl
from jax.experimental.pallas import tpu as pltpu

# ---------------- configuration (small synthetic shapes) ----------------
B = 2               # batch of latent codes z
Z_DIM = 32          # latent dim              (pigan: 256)
MAP_HIDDEN = 64     # mapping-net hidden      (pigan: 256)
HIDDEN = 32         # SIREN hidden dim        (pigan: 256)
NUM_FILM = 8        # FiLM-SIREN layers       (pigan: 8)
IMG = 16            # img_size                (pigan CelebA: 256)
NUM_STEPS = 6       # samples / ray           (CelebA: num_steps * ray_step_multiplier)
FOV = 12.0
RAY_START, RAY_END = 0.88, 1.12
PSI = 0.7           # truncation psi
GRIDWARP = 2.0 / 0.24   # UniformBoxWarp(0.24)

R = IMG * IMG               # rays per image (lane axis of the render epilogue)
N = R * NUM_STEPS           # sample points per batch element, STEP-major: s*R + r

# z_vals is a constant linspace (no hierarchical resampling yet), so per-step
# deltas are compile-time constants baked into the kernel.
# TODO(synk): stochastic camera pose sampling (h_stddev/v_stddev) and
#             hierarchical importance re-sampling (sample_pdf) are not
#             implemented; with per-ray z_vals/poses the precomputed h0 and the
#             compile-time DELTAS become lane-dense (HIDDEN/S, R) inputs instead.
Z_VALS = [RAY_START + i * (RAY_END - RAY_START) / (NUM_STEPS - 1)
          for i in range(NUM_STEPS)]
DELTAS = [Z_VALS[i + 1] - Z_VALS[i] for i in range(NUM_STEPS - 1)] + [1e10]

# ---------------- fast range-reduced sine (VALU FMAs only) ----------------
_TWO_PI = 2.0 * math.pi
_INV_TWO_PI = 1.0 / _TWO_PI
# odd Taylor/minimax-style coefficients in r^2; |err| < ~3e-5 on [-pi, pi]
_SIN_C = (-1.0 / 6.0, 1.0 / 120.0, -1.0 / 5040.0,
          1.0 / 362880.0, -1.0 / 39916800.0, 1.0 / 6227020800.0)


def _fast_sin(x):
    """sin(x) via single range reduction to [-pi, pi] + 7-term odd polynomial."""
    k = jnp.floor(x * _INV_TWO_PI + 0.5)
    r = x - k * _TWO_PI                       # r in [-pi, pi)
    r2 = r * r
    p = _SIN_C[5]
    p = p * r2 + _SIN_C[4]
    p = p * r2 + _SIN_C[3]
    p = p * r2 + _SIN_C[2]
    p = p * r2 + _SIN_C[1]
    p = p * r2 + _SIN_C[0]
    return r * (p * r2 + 1.0)


# =======================================================================
# Fused kernel: FiLM-SIREN MLP over all sample points + volume rendering
# =======================================================================
def siren_render_kernel(h0_ref, freq_ref, phase_ref,
                        whidT_ref, wcombT_ref, bf_ref,
                        wrgbT_ref, brgb_ref, out_ref):
    # Layer 0: h0 = W0^T(GRIDWARP*pts) + b0 precomputed in the wrapper (fixed
    # mean-pose camera), so only the FiLM scale/shift + sine run here.
    a = _fast_sin(freq_ref[0] * h0_ref[...] + phase_ref[0])        # (HIDDEN, N) f32

    # FiLM layers 1..NUM_FILM-1: (H, H) @ (H, N) on the MXU (bf16 operands,
    # f32 accumulation).  Per-layer biases are pre-folded into the phases, so
    # each layer is: sin(freq * (W @ a) + phase').  fori_loop keeps the live
    # activation set to one layer (matters at real H=256 scale).
    def film_body(l, a):
        h = jnp.dot(whidT_ref[l], a.astype(jnp.bfloat16),
                    preferred_element_type=jnp.float32)
        return _fast_sin(freq_ref[l + 1] * h + phase_ref[l + 1])

    a = jax.lax.fori_loop(0, NUM_FILM - 1, film_body, a)

    # Fused heads: color_layer_sine weight (rows 0..H-1) + density weight
    # (row H) in one (H+1, H) matmul.  Color bias (incl. lock_view_dependence
    # fold, dir=(0,0,-1) => -W_dir[2,:]) lives in the color phase; only the
    # scalar sigma bias is added here.
    comb = jnp.dot(wcombT_ref[...], a.astype(jnp.bfloat16),
                   preferred_element_type=jnp.float32)              # (HIDDEN+1, N)
    sigma = jnp.maximum(comb[HIDDEN:HIDDEN + 1, :] + bf_ref[0, 0], 0.0)  # relu, nerf_noise=0
    xc = _fast_sin(freq_ref[NUM_FILM] * comb[:HIDDEN, :] + phase_ref[NUM_FILM])
    rgb = jax.nn.sigmoid(
        jnp.dot(wrgbT_ref[...], xc.astype(jnp.bfloat16),
                preferred_element_type=jnp.float32)
        + brgb_ref[...])                                             # (3, N)

    # ---- fused volume rendering (fancy_integration, last_back=True) ----
    # Samples are step-major (sample (s, ray r) at lane s*R + r), so every
    # per-step slice is a contiguous, 128-aligned block of R lanes.
    T = jnp.ones((1, R), jnp.float32)
    wsum = jnp.zeros((1, R), jnp.float32)
    rgb_acc = jnp.zeros((3, R), jnp.float32)
    depth_acc = jnp.zeros((1, R), jnp.float32)
    for s in range(NUM_STEPS):
        sig_s = sigma[:, s * R:(s + 1) * R]                          # (1, R)
        rgb_s = rgb[:, s * R:(s + 1) * R]                            # (3, R)
        alpha = 1.0 - jnp.exp(-DELTAS[s] * sig_s)                    # last delta = 1e10
        w = alpha * T
        rgb_acc = rgb_acc + w * rgb_s
        depth_acc = depth_acc + w * Z_VALS[s]
        wsum = wsum + w
        T = T * (1.0 - alpha + 1e-10)

    rest = 1.0 - wsum                                                # last_back=True
    rgb_acc = rgb_acc + rest * rgb[:, (NUM_STEPS - 1) * R:]
    depth_acc = depth_acc + rest * Z_VALS[NUM_STEPS - 1]

    # Single lane-dense (4, R) store stream: rows 0..2 pixels in [-1,1], row 3 depth.
    out_ref[0:3, :] = rgb_acc * 2.0 - 1.0
    out_ref[3:4, :] = depth_acc


def siren_render_pallas(freqs, phases, sp):
    # Grid over batch only: at this synthetic size one tile covers the whole
    # per-batch N, amortizing per-step pipeline overhead.
    # Real pi-GAN scale plan (H=256, S~24, IMG=256):
    #   * grid=(B, R//TR), both axes "parallel" so v7x's 2 TensorCores share the
    #     ray-tile axis (B alone won't balance when B is 1 or odd);
    #   * TR ~ 256-512 on v7x (64 MiB VMEM), ~512-1024 on v5e/v6e (128 MiB),
    #     sized against 2-3 live f32 (HIDDEN, S*TR) activation copies;
    #   * single-buffer the grid-invariant weight specs (pipeline_mode=
    #     pl.Buffered(1)) to reclaim VMEM for a larger activation tile.
    full = lambda shp: pl.BlockSpec(shp, lambda b, _s=shp: tuple(0 for _ in _s))
    return pl.pallas_call(
        siren_render_kernel,
        grid=(B,),
        in_specs=[
            full((HIDDEN, N)),                                                   # h0 (shared, 1 copy)
            pl.BlockSpec((None, NUM_FILM + 1, HIDDEN, 1), lambda b: (b, 0, 0, 0)),  # freq' (layer-major)
            pl.BlockSpec((None, NUM_FILM + 1, HIDDEN, 1), lambda b: (b, 0, 0, 0)),  # phase' (bias folded)
            full((NUM_FILM - 1, HIDDEN, HIDDEN)),                                # hidden weights^T (bf16)
            full((HIDDEN + 1, HIDDEN)),                                          # [color_sine ; sigma] W^T (bf16)
            full((1, 1)),                                                        # sigma bias (scalar)
            full((3, HIDDEN)),                                                   # rgb weight^T (bf16)
            full((3, 1)),                                                        # rgb bias (f32)
        ],
        out_specs=pl.BlockSpec((None, 4, R), lambda b: (b, 0, 0)),               # [rgb ; depth], lane-dense
        out_shape=jax.ShapeDtypeStruct((B, 4, R), jnp.float32),
        compiler_params=pltpu.CompilerParams(
            dimension_semantics=("parallel",),
            vmem_limit_bytes=32 * 1024 * 1024),
    )(sp["h0"], freqs, phases,
      sp["whidT"], sp["wcombT"], sp["bf"], sp["wrgbT"], sp["brgb"])


# =======================================================================
# Plain-JAX glue: mapping network, psi-truncation, ray setup
# =======================================================================
def mapping_net(z, mp):
    h = z
    for W, b in mp["hidden"]:
        h = jax.nn.leaky_relu(h @ W + b, negative_slope=0.2)
    out = h @ mp["W_out"] + mp["b_out"]
    half = out.shape[-1] // 2
    return out[..., :half], out[..., half:]


def get_points():
    # Camera fixed at the mean pose (0,0,1) looking at the origin, for which
    # pi-GAN's cam2world rotation is the identity.  Points are produced directly
    # in the step-major, coordinate-major (3, N) layout the kernel wants
    # (sample (s, ray r) at column s*R + r).  Single copy for all batch elems.
    xs = jnp.linspace(-1.0, 1.0, IMG)
    ys = jnp.linspace(1.0, -1.0, IMG)
    yy, xx = jnp.meshgrid(ys, xs, indexing="ij")          # row=y, col=x (image order)
    zc = -jnp.ones_like(xx) / jnp.tan(jnp.deg2rad(FOV) / 2.0)
    dirs = jnp.stack([xx.reshape(-1), yy.reshape(-1), zc.reshape(-1)], axis=-1)
    dirs = dirs / jnp.linalg.norm(dirs, axis=-1, keepdims=True)          # (R, 3)
    z_vals = jnp.asarray(Z_VALS, jnp.float32)                            # (S,)
    pts = dirs[None, :, :] * z_vals[:, None, None]                       # (S, R, 3)
    pts = pts + jnp.array([0.0, 0.0, 1.0], jnp.float32)                  # camera origin
    return pts.transpose(2, 0, 1).reshape(3, N).astype(jnp.float32)      # (3, N)


def implicit_generator_forward(z, params):
    # mapping network + psi truncation (psi=0.7, staged_forward semantics)
    raw_f, raw_p = mapping_net(z, params["mapping"])
    freq = params["avg_freq"] + PSI * (raw_f - params["avg_freq"])
    phase = params["avg_phase"] + PSI * (raw_p - params["avg_phase"])

    # (B, NUM_FILM+1, HIDDEN): per-layer FiLM rows.  FiLM freq transform
    # (*15 + 30) and the bias-into-phase fold (phase' = freq*b + phase) are
    # done here, off the kernel's saturated VALU slot.  Trailing size-1 lane
    # axis lets the kernel broadcast each (HIDDEN, 1) row down the sample axis
    # and lets fori_loop index layers along the leading ref axis.
    sp = params["siren_t"]
    freq = freq.reshape(B, NUM_FILM + 1, HIDDEN) * 15.0 + 30.0
    phase = phase.reshape(B, NUM_FILM + 1, HIDDEN)
    phase = phase + freq * sp["bias_fold"][None]
    freq = freq[..., None]                                   # (B, L+1, H, 1)
    phase = phase[..., None]

    # Single fused hot path: FiLM-SIREN MLP + alpha compositing.
    out = siren_render_pallas(freq, phase, sp)               # (B, 4, R)

    pixels = out[:, 0:3, :].reshape(B, 3, IMG, IMG)          # NCHW, in [-1, 1]
    depth_map = out[:, 3, :].reshape(B, IMG, IMG)
    return pixels, depth_map


# =======================================================================
# Deterministic synthetic parameter initialization
# =======================================================================
def prepare_siren_for_kernel(s, pts):
    """Transposed / folded / bf16 weights for the feature-major kernel layout."""
    # Layer-0 pre-activation for the fixed mean-pose camera (GRIDWARP folded in).
    h0 = s["w0"].T @ (GRIDWARP * pts) + s["bnet"][0][:, None]             # (H, N)
    # Per-layer biases to fold into the phases: row 0 is already inside h0,
    # rows 1..NF-1 are the FiLM biases, row NF is the color bias with the
    # lock_view_dependence direction fold (ray dir = (0,0,-1) => -W_dir[2,:]).
    bias_fold = jnp.concatenate([
        jnp.zeros((1, HIDDEN), jnp.float32),
        s["bnet"][1:],
        (s["bc"][0] - s["wcd"][2])[None, :],
    ], axis=0)                                                            # (NF+1, H)
    wcombT = jnp.concatenate([s["wcx"].T, s["wf"].T], axis=0)             # (H+1, H)
    return {
        "h0": h0.astype(jnp.float32),                                     # (H, N) f32
        "bias_fold": bias_fold.astype(jnp.float32),                       # wrapper-side fold
        "whidT": jnp.transpose(s["whid"], (0, 2, 1)).astype(jnp.bfloat16),  # (NF-1, H, H)
        "wcombT": wcombT.astype(jnp.bfloat16),
        "bf": s["bf"].reshape(1, 1).astype(jnp.float32),                  # sigma bias
        "wrgbT": s["wrgb"].T.astype(jnp.bfloat16),                        # (3, H)
        "brgb": s["brgb"].T.astype(jnp.float32),                          # (3, 1)
    }


def init_params(key):
    ks = iter(jax.random.split(key, 64))
    u = lambda k, shp, lim: jax.random.uniform(k, shp, jnp.float32, -lim, lim)

    # mapping network: 3 hidden Linear+LeakyReLU, then Linear -> 2*(NUM_FILM+1)*HIDDEN
    map_out = (NUM_FILM + 1) * HIDDEN * 2
    hidden = []
    din = Z_DIM
    for _ in range(3):
        hidden.append((u(next(ks), (din, MAP_HIDDEN), (1.0 / din) ** 0.5),
                       jnp.zeros((MAP_HIDDEN,), jnp.float32)))
        din = MAP_HIDDEN
    mapping = {
        "hidden": hidden,
        "W_out": u(next(ks), (MAP_HIDDEN, map_out), (1.0 / MAP_HIDDEN) ** 0.5) * 0.25,
        "b_out": jnp.zeros((map_out,), jnp.float32),
    }

    # SIREN (frequency_init(25)-style scales)
    lim_h = (6.0 / HIDDEN) ** 0.5 / 25.0
    siren = {
        "w0": u(next(ks), (3, HIDDEN), 1.0 / 3.0),
        "whid": u(next(ks), (NUM_FILM - 1, HIDDEN, HIDDEN), lim_h),
        "bnet": u(next(ks), (NUM_FILM, HIDDEN), lim_h),
        "wf": u(next(ks), (HIDDEN, 1), lim_h),
        "bf": u(next(ks), (1, 1), lim_h),
        "wcx": u(next(ks), (HIDDEN, HIDDEN), lim_h),
        "wcd": u(next(ks), (3, HIDDEN), lim_h),
        "bc": u(next(ks), (1, HIDDEN), lim_h),
        "wrgb": u(next(ks), (HIDDEN, 3), lim_h),
        "brgb": u(next(ks), (1, 3), lim_h),
    }

    pts = get_points()   # (3, N), fixed mean-pose camera
    params = {"mapping": mapping, "siren_t": prepare_siren_for_kernel(siren, pts)}

    # avg frequencies / phase shifts (pigan's generate_avg_frequencies, 64 samples)
    z_avg = jax.random.normal(next(ks), (64, Z_DIM), jnp.float32)
    f, p = mapping_net(z_avg, mapping)
    params["avg_freq"] = jnp.mean(f, axis=0, keepdims=True)
    params["avg_phase"] = jnp.mean(p, axis=0, keepdims=True)
    return params


if __name__ == "__main__":
    key = jax.random.PRNGKey(0)
    params = init_params(key)
    z = jax.random.normal(jax.random.PRNGKey(1), (B, Z_DIM), jnp.float32)

    fwd = jax.jit(functools.partial(implicit_generator_forward, params=params))
    pixels, depth_map = fwd(z)
    jax.block_until_ready((pixels, depth_map))

    assert pixels.shape == (B, 3, IMG, IMG), pixels.shape
    assert depth_map.shape == (B, IMG, IMG), depth_map.shape
    assert jnp.all(jnp.isfinite(pixels)) and jnp.all(jnp.isfinite(depth_map))
    print("KERNEL_OK")
</pallas_src>

<mosaic_0001>
module attributes {stable_mosaic.version = 11 : i64} {
  func.func @siren_render_kernel(%arg0: i32, %arg1: memref<32x1536xf32, #tpu.memory_space<vmem>>, %arg2: memref<1x9x32x1xf32, #tpu.memory_space<vmem>>, %arg3: memref<1x9x32x1xf32, #tpu.memory_space<vmem>>, %arg4: memref<7x32x32xbf16, #tpu.memory_space<vmem>>, %arg5: memref<33x32xbf16, #tpu.memory_space<vmem>>, %arg6: memref<1x1xf32, #tpu.memory_space<vmem>>, %arg7: memref<3x32xbf16, #tpu.memory_space<vmem>>, %arg8: memref<3x1xf32, #tpu.memory_space<vmem>>, %arg9: memref<1x4x256xf32, #tpu.memory_space<vmem>>) attributes {dimension_semantics = [#tpu.dimension_semantics<parallel>], iteration_bounds = array<i64: 2>, scalar_prefetch = 0 : i64, scratch_operands = 0 : i64, tpu.core_type = #tpu.core_type<tc>, window_params = [{pipeline_mode = #tpu.pipeline_mode<synchronous>, transform_indices = @transform_0, window_bounds = array<i64: 32, 1536>}, {transform_indices = @transform_1, window_bounds = array<i64: 1, 9, 32, 1>}, {transform_indices = @transform_2, window_bounds = array<i64: 1, 9, 32, 1>}, {pipeline_mode = #tpu.pipeline_mode<synchronous>, transform_indices = @transform_3, window_bounds = array<i64: 7, 32, 32>}, {pipeline_mode = #tpu.pipeline_mode<synchronous>, transform_indices = @transform_4, window_bounds = array<i64: 33, 32>}, {pipeline_mode = #tpu.pipeline_mode<synchronous>, transform_indices = @transform_5, window_bounds = array<i64: 1, 1>}, {pipeline_mode = #tpu.pipeline_mode<synchronous>, transform_indices = @transform_6, window_bounds = array<i64: 3, 32>}, {pipeline_mode = #tpu.pipeline_mode<synchronous>, transform_indices = @transform_7, window_bounds = array<i64: 3, 1>}, {transform_indices = @transform_8, window_bounds = array<i64: 1, 4, 256>}]} {
    %c0 = arith.constant 0 : index
    %c0_0 = arith.constant 0 : index
    %c0_1 = arith.constant 0 : index
    %c0_2 = arith.constant 0 : index
    %0 = vector.load %arg2[%c0, %c0_0, %c0_1, %c0_2] : memref<1x9x32x1xf32, #tpu.memory_space<vmem>>, vector<1x1x32x1xf32>
    %1 = vector.shape_cast %0 : vector<1x1x32x1xf32> to vector<32x1xf32>
    %c0_3 = arith.constant 0 : index
    %c0_4 = arith.constant 0 : index
    %2 = vector.load %arg1[%c0_3, %c0_4] : memref<32x1536xf32, #tpu.memory_space<vmem>>, vector<32x1536xf32>
    %3 = vector.broadcast %1 : vector<32x1xf32> to vector<32x1536xf32>
    %4 = arith.mulf %3, %2 : vector<32x1536xf32>
    %c0_5 = arith.constant 0 : index
    %c0_6 = arith.constant 0 : index
    %c0_7 = arith.constant 0 : index
    %c0_8 = arith.constant 0 : index
    %5 = vector.load %arg3[%c0_5, %c0_6, %c0_7, %c0_8] : memref<1x9x32x1xf32, #tpu.memory_space<vmem>>, vector<1x1x32x1xf32>
    %6 = vector.shape_cast %5 : vector<1x1x32x1xf32> to vector<32x1xf32>
    %7 = vector.broadcast %6 : vector<32x1xf32> to vector<32x1536xf32>
    %8 = arith.addf %4, %7 : vector<32x1536xf32>
    %cst = arith.constant 0.159154937 : f32
    %9 = vector.broadcast %cst : f32 to vector<32x1536xf32>
    %10 = arith.mulf %8, %9 : vector<32x1536xf32>
    %cst_9 = arith.constant 5.000000e-01 : f32
    %11 = vector.broadcast %cst_9 : f32 to vector<32x1536xf32>
    %12 = arith.addf %10, %11 : vector<32x1536xf32>
    %13 = math.floor %12 : vector<32x1536xf32>
    %cst_10 = arith.constant 6.28318548 : f32
    %14 = vector.broadcast %cst_10 : f32 to vector<32x1536xf32>
    %15 = arith.mulf %13, %14 : vector<32x1536xf32>
    %16 = arith.subf %8, %15 : vector<32x1536xf32>
    %17 = arith.mulf %16, %16 : vector<32x1536xf32>
    %cst_11 = arith.constant 1.60590444E-10 : f32
    %18 = vector.broadcast %cst_11 : f32 to vector<32x1536xf32>
    %19 = arith.mulf %18, %17 : vector<32x1536xf32>
    %cst_12 = arith.constant -2.50521079E-8 : f32
    %20 = vector.broadcast %cst_12 : f32 to vector<32x1536xf32>
    %21 = arith.addf %19, %20 : vector<32x1536xf32>
    %22 = arith.mulf %21, %17 : vector<32x1536xf32>
    %cst_13 = arith.constant 2.75573188E-6 : f32
    %23 = vector.broadcast %cst_13 : f32 to vector<32x1536xf32>
    %24 = arith.addf %22, %23 : vector<32x1536xf32>
    %25 = arith.mulf %24, %17 : vector<32x1536xf32>
    %cst_14 = arith.constant -1.98412701E-4 : f32
    %26 = vector.broadcast %cst_14 : f32 to vector<32x1536xf32>
    %27 = arith.addf %25, %26 : vector<32x1536xf32>
    %28 = arith.mulf %27, %17 : vector<32x1536xf32>
    %cst_15 = arith.constant 0.00833333377 : f32
    %29 = vector.broadcast %cst_15 : f32 to vector<32x1536xf32>
    %30 = arith.addf %28, %29 : vector<32x1536xf32>
    %31 = arith.mulf %30, %17 : vector<32x1536xf32>
    %cst_16 = arith.constant -0.166666672 : f32
    %32 = vector.broadcast %cst_16 : f32 to vector<32x1536xf32>
    %33 = arith.addf %31, %32 : vector<32x1536xf32>
    %34 = arith.mulf %33, %17 : vector<32x1536xf32>
    %cst_17 = arith.constant 1.000000e+00 : f32
    %35 = vector.broadcast %cst_17 : f32 to vector<32x1536xf32>
    %36 = arith.addf %34, %35 : vector<32x1536xf32>
    %37 = arith.mulf %16, %36 : vector<32x1536xf32>
    %c0_i32 = arith.constant 0 : i32
    %c7_i32 = arith.constant 7 : i32
    %38 = arith.addi %c0_i32, %c7_i32 : i32
    %c1_i32 = arith.constant 1 : i32
    %39 = scf.for %arg10 = %c0_i32 to %38 step %c1_i32 iter_args(%arg11 = %37) -> (vector<32x1536xf32>)  : i32 {
      %237 = arith.index_cast %arg10 : i32 to index
      %c0_89 = arith.constant 0 : index
      %c0_90 = arith.constant 0 : index
      %238 = vector.load %arg4[%237, %c0_89, %c0_90] : memref<7x32x32xbf16, #tpu.memory_space<vmem>>, vector<1x32x32xbf16>
      %239 = vector.shape_cast %238 : vector<1x32x32xbf16> to vector<32x32xbf16>
      %240 = arith.truncf %arg11 : vector<32x1536xf32> to vector<32x1536xbf16>
      %cst_91 = arith.constant dense<0.000000e+00> : vector<32x1536xf32>
      %241 = tpu.matmul %239, %240, %cst_91 {dimension_numbers = #tpu.dot_dimension_numbers<[1], [0], [0], [1], [0, 0, 1, 1], [], []>} : vector<32x32xbf16>, vector<32x1536xbf16>, vector<32x1536xf32> -> vector<32x1536xf32>
      %c1_i32_92 = arith.constant 1 : i32
      %242 = arith.addi %arg10, %c1_i32_92 : i32
      %c0_93 = arith.constant 0 : index
      %243 = arith.index_cast %242 : i32 to index
      %c0_94 = arith.constant 0 : index
      %c0_95 = arith.constant 0 : index
      %244 = vector.load %arg2[%c0_93, %243, %c0_94, %c0_95] : memref<1x9x32x1xf32, #tpu.memory_space<vmem>>, vector<1x1x32x1xf32>
      %245 = vector.shape_cast %244 : vector<1x1x32x1xf32> to vector<32x1xf32>
      %246 = vector.broadcast %245 : vector<32x1xf32> to vector<32x1536xf32>
      %247 = arith.mulf %246, %241 : vector<32x1536xf32>
      %c1_i32_96 = arith.constant 1 : i32
      %248 = arith.addi %arg10, %c1_i32_96 : i32
      %c0_97 = arith.constant 0 : index
      %249 = arith.index_cast %248 : i32 to index
      %c0_98 = arith.constant 0 : index
      %c0_99 = arith.constant 0 : index
      %250 = vector.load %arg3[%c0_97, %249, %c0_98, %c0_99] : memref<1x9x32x1xf32, #tpu.memory_space<vmem>>, vector<1x1x32x1xf32>
      %251 = vector.shape_cast %250 : vector<1x1x32x1xf32> to vector<32x1xf32>
      %252 = vector.broadcast %251 : vector<32x1xf32> to vector<32x1536xf32>
      %253 = arith.addf %247, %252 : vector<32x1536xf32>
      %cst_100 = arith.constant 0.159154937 : f32
      %254 = vector.broadcast %cst_100 : f32 to vector<32x1536xf32>
      %255 = arith.mulf %253, %254 : vector<32x1536xf32>
      %cst_101 = arith.constant 5.000000e-01 : f32
      %256 = vector.broadcast %cst_101 : f32 to vector<32x1536xf32>
      %257 = arith.addf %255, %256 : vector<32x1536xf32>
      %258 = math.floor %257 : vector<32x1536xf32>
      %cst_102 = arith.constant 6.28318548 : f32
      %259 = vector.broadcast %cst_102 : f32 to vector<32x1536xf32>
      %260 = arith.mulf %258, %259 : vector<32x1536xf32>
      %261 = arith.subf %253, %260 : vector<32x1536xf32>
      %262 = arith.mulf %261, %261 : vector<32x1536xf32>
      %cst_103 = arith.constant 1.60590444E-10 : f32
      %263 = vector.broadcast %cst_103 : f32 to vector<32x1536xf32>
      %264 = arith.mulf %263, %262 : vector<32x1536xf32>
      %cst_104 = arith.constant -2.50521079E-8 : f32
      %265 = vector.broadcast %cst_104 : f32 to vector<32x1536xf32>
      %266 = arith.addf %264, %265 : vector<32x1536xf32>
      %267 = arith.mulf %266, %262 : vector<32x1536xf32>
      %cst_105 = arith.constant 2.75573188E-6 : f32
      %268 = vector.broadcast %cst_105 : f32 to vector<32x1536xf32>
      %269 = arith.addf %267, %268 : vector<32x1536xf32>
      %270 = arith.mulf %269, %262 : vector<32x1536xf32>
      %cst_106 = arith.constant -1.98412701E-4 : f32
      %271 = vector.broadcast %cst_106 : f32 to vector<32x1536xf32>
      %272 = arith.addf %270, %271 : vector<32x1536xf32>
      %273 = arith.mulf %272, %262 : vector<32x1536xf32>
      %cst_107 = arith.constant 0.00833333377 : f32
      %274 = vector.broadcast %cst_107 : f32 to vector<32x1536xf32>
      %275 = arith.addf %273, %274 : vector<32x1536xf32>
      %276 = arith.mulf %275, %262 : vector<32x1536xf32>
      %cst_108 = arith.constant -0.166666672 : f32
      %277 = vector.broadcast %cst_108 : f32 to vector<32x1536xf32>
      %278 = arith.addf %276, %277 : vector<32x1536xf32>
      %279 = arith.mulf %278, %262 : vector<32x1536xf32>
      %cst_109 = arith.constant 1.000000e+00 : f32
      %280 = vector.broadcast %cst_109 : f32 to vector<32x1536xf32>
      %281 = arith.addf %279, %280 : vector<32x1536xf32>
      %282 = arith.mulf %261, %281 : vector<32x1536xf32>
      scf.yield %282 : vector<32x1536xf32>
    }
    %c7_i32_18 = arith.constant 7 : i32
    %c0_19 = arith.constant 0 : index
    %c0_20 = arith.constant 0 : index
    %40 = vector.load %arg5[%c0_19, %c0_20] : memref<33x32xbf16, #tpu.memory_space<vmem>>, vector<33x32xbf16>
    %41 = arith.truncf %39 : vector<32x1536xf32> to vector<32x1536xbf16>
    %cst_21 = arith.constant dense<0.000000e+00> : vector<33x1536xf32>
    %42 = tpu.matmul %40, %41, %cst_21 {dimension_numbers = #tpu.dot_dimension_numbers<[1], [0], [0], [1], [0, 0, 1, 1], [], []>} : vector<33x32xbf16>, vector<32x1536xbf16>, vector<33x1536xf32> -> vector<33x1536xf32>
    %43 = vector.extract_strided_slice %42 {offsets = [32, 0], sizes = [1, 1536], strides = [1, 1]} : vector<33x1536xf32> to vector<1x1536xf32>
    %c0_22 = arith.constant 0 : index
    %c0_23 = arith.constant 0 : index
    %44 = vector.load %arg6[%c0_22, %c0_23] : memref<1x1xf32, #tpu.memory_space<vmem>>, vector<1x1xf32>
    %45 = vector.extract %44[0, 0] : f32 from vector<1x1xf32>
    %46 = vector.broadcast %45 : f32 to vector<1x1536xf32>
    %47 = arith.addf %43, %46 : vector<1x1536xf32>
    %cst_24 = arith.constant 0.000000e+00 : f32
    %48 = vector.broadcast %cst_24 : f32 to vector<1x1536xf32>
    %49 = arith.maximumf %47, %48 : vector<1x1536xf32>
    %c0_25 = arith.constant 0 : index
    %c8 = arith.constant 8 : index
    %c0_26 = arith.constant 0 : index
    %c0_27 = arith.constant 0 : index
    %50 = vector.load %arg2[%c0_25, %c8, %c0_26, %c0_27] : memref<1x9x32x1xf32, #tpu.memory_space<vmem>>, vector<1x1x32x1xf32>
    %51 = vector.shape_cast %50 : vector<1x1x32x1xf32> to vector<32x1xf32>
    %52 = vector.extract_strided_slice %42 {offsets = [0, 0], sizes = [32, 1536], strides = [1, 1]} : vector<33x1536xf32> to vector<32x1536xf32>
    %53 = vector.broadcast %51 : vector<32x1xf32> to vector<32x1536xf32>
    %54 = arith.mulf %53, %52 : vector<32x1536xf32>
    %c0_28 = arith.constant 0 : index
    %c8_29 = arith.constant 8 : index
    %c0_30 = arith.constant 0 : index
    %c0_31 = arith.constant 0 : index
    %55 = vector.load %arg3[%c0_28, %c8_29, %c0_30, %c0_31] : memref<1x9x32x1xf32, #tpu.memory_space<vmem>>, vector<1x1x32x1xf32>
    %56 = vector.shape_cast %55 : vector<1x1x32x1xf32> to vector<32x1xf32>
    %57 = vector.broadcast %56 : vector<32x1xf32> to vector<32x1536xf32>
    %58 = arith.addf %54, %57 : vector<32x1536xf32>
    %cst_32 = arith.constant 0.159154937 : f32
    %59 = vector.broadcast %cst_32 : f32 to vector<32x1536xf32>
    %60 = arith.mulf %58, %59 : vector<32x1536xf32>
    %cst_33 = arith.constant 5.000000e-01 : f32
    %61 = vector.broadcast %cst_33 : f32 to vector<32x1536xf32>
    %62 = arith.addf %60, %61 : vector<32x1536xf32>
    %63 = math.floor %62 : vector<32x1536xf32>
    %cst_34 = arith.constant 6.28318548 : f32
    %64 = vector.broadcast %cst_34 : f32 to vector<32x1536xf32>
    %65 = arith.mulf %63, %64 : vector<32x1536xf32>
    %66 = arith.subf %58, %65 : vector<32x1536xf32>
    %67 = arith.mulf %66, %66 : vector<32x1536xf32>
    %cst_35 = arith.constant 1.60590444E-10 : f32
    %68 = vector.broadcast %cst_35 : f32 to vector<32x1536xf32>
    %69 = arith.mulf %68, %67 : vector<32x1536xf32>
    %cst_36 = arith.constant -2.50521079E-8 : f32
    %70 = vector.broadcast %cst_36 : f32 to vector<32x1536xf32>
    %71 = arith.addf %69, %70 : vector<32x1536xf32>
    %72 = arith.mulf %71, %67 : vector<32x1536xf32>
    %cst_37 = arith.constant 2.75573188E-6 : f32
    %73 = vector.broadcast %cst_37 : f32 to vector<32x1536xf32>
    %74 = arith.addf %72, %73 : vector<32x1536xf32>
    %75 = arith.mulf %74, %67 : vector<32x1536xf32>
    %cst_38 = arith.constant -1.98412701E-4 : f32
    %76 = vector.broadcast %cst_38 : f32 to vector<32x1536xf32>
    %77 = arith.addf %75, %76 : vector<32x1536xf32>
    %78 = arith.mulf %77, %67 : vector<32x1536xf32>
    %cst_39 = arith.constant 0.00833333377 : f32
    %79 = vector.broadcast %cst_39 : f32 to vector<32x1536xf32>
    %80 = arith.addf %78, %79 : vector<32x1536xf32>
    %81 = arith.mulf %80, %67 : vector<32x1536xf32>
    %cst_40 = arith.constant -0.166666672 : f32
    %82 = vector.broadcast %cst_40 : f32 to vector<32x1536xf32>
    %83 = arith.addf %81, %82 : vector<32x1536xf32>
    %84 = arith.mulf %83, %67 : vector<32x1536xf32>
    %cst_41 = arith.constant 1.000000e+00 : f32
    %85 = vector.broadcast %cst_41 : f32 to vector<32x1536xf32>
    %86 = arith.addf %84, %85 : vector<32x1536xf32>
    %87 = arith.mulf %66, %86 : vector<32x1536xf32>
    %c0_42 = arith.constant 0 : index
    %c0_43 = arith.constant 0 : index
    %88 = vector.load %arg7[%c0_42, %c0_43] : memref<3x32xbf16, #tpu.memory_space<vmem>>, vector<3x32xbf16>
    %89 = arith.truncf %87 : vector<32x1536xf32> to vector<32x1536xbf16>
    %cst_44 = arith.constant dense<0.000000e+00> : vector<3x1536xf32>
    %90 = tpu.matmul %88, %89, %cst_44 {dimension_numbers = #tpu.dot_dimension_numbers<[1], [0], [0], [1], [0, 0, 1, 1], [], []>} : vector<3x32xbf16>, vector<32x1536xbf16>, vector<3x1536xf32> -> vector<3x1536xf32>
    %c0_45 = arith.constant 0 : index
    %c0_46 = arith.constant 0 : index
    %91 = vector.load %arg8[%c0_45, %c0_46] : memref<3x1xf32, #tpu.memory_space<vmem>>, vector<3x1xf32>
    %92 = vector.broadcast %91 : vector<3x1xf32> to vector<3x1536xf32>
    %93 = arith.addf %90, %92 : vector<3x1536xf32>
    %94 = arith.negf %93 : vector<3x1536xf32>
    %95 = math.exp %94 : vector<3x1536xf32>
    %cst_47 = arith.constant 1.000000e+00 : f32
    %96 = vector.broadcast %cst_47 : f32 to vector<3x1536xf32>
    %97 = arith.addf %96, %95 : vector<3x1536xf32>
    %98 = arith.divf %96, %97 : vector<3x1536xf32>
    %cst_48 = arith.constant 1.000000e+00 : f32
    %99 = vector.broadcast %cst_48 : f32 to vector<1x256xf32>
    %cst_49 = arith.constant 0.000000e+00 : f32
    %100 = vector.broadcast %cst_49 : f32 to vector<1x256xf32>
    %cst_50 = arith.constant 0.000000e+00 : f32
    %101 = vector.broadcast %cst_50 : f32 to vector<3x256xf32>
    %cst_51 = arith.constant 0.000000e+00 : f32
    %102 = vector.broadcast %cst_51 : f32 to vector<1x256xf32>
    %103 = vector.extract_strided_slice %49 {offsets = [0, 0], sizes = [1, 256], strides = [1, 1]} : vector<1x1536xf32> to vector<1x256xf32>
    %104 = vector.extract_strided_slice %98 {offsets = [0, 0], sizes = [3, 256], strides = [1, 1]} : vector<3x1536xf32> to vector<3x256xf32>
    %cst_52 = arith.constant -4.800000e-02 : f32
    %105 = vector.broadcast %cst_52 : f32 to vector<1x256xf32>
    %106 = arith.mulf %105, %103 : vector<1x256xf32>
    %107 = math.exp %106 : vector<1x256xf32>
    %cst_53 = arith.constant 1.000000e+00 : f32
    %108 = vector.broadcast %cst_53 : f32 to vector<1x256xf32>
    %109 = arith.subf %108, %107 : vector<1x256xf32>
    %110 = arith.mulf %109, %99 : vector<1x256xf32>
    %111 = vector.broadcast %110 : vector<1x256xf32> to vector<3x256xf32>
    %112 = arith.mulf %111, %104 : vector<3x256xf32>
    %113 = arith.addf %101, %112 : vector<3x256xf32>
    %cst_54 = arith.constant 0.879999995 : f32
    %114 = vector.broadcast %cst_54 : f32 to vector<1x256xf32>
    %115 = arith.mulf %110, %114 : vector<1x256xf32>
    %116 = arith.addf %102, %115 : vector<1x256xf32>
    %117 = arith.addf %100, %110 : vector<1x256xf32>
    %cst_55 = arith.constant 1.000000e+00 : f32
    %118 = vector.broadcast %cst_55 : f32 to vector<1x256xf32>
    %119 = arith.subf %118, %109 : vector<1x256xf32>
    %cst_56 = arith.constant 1.000000e-10 : f32
    %120 = vector.broadcast %cst_56 : f32 to vector<1x256xf32>
    %121 = arith.addf %119, %120 : vector<1x256xf32>
    %122 = arith.mulf %99, %121 : vector<1x256xf32>
    %123 = vector.extract_strided_slice %49 {offsets = [0, 256], sizes = [1, 256], strides = [1, 1]} : vector<1x1536xf32> to vector<1x256xf32>
    %124 = vector.extract_strided_slice %98 {offsets = [0, 256], sizes = [3, 256], strides = [1, 1]} : vector<3x1536xf32> to vector<3x256xf32>
    %cst_57 = arith.constant -4.800000e-02 : f32
    %125 = vector.broadcast %cst_57 : f32 to vector<1x256xf32>
    %126 = arith.mulf %125, %123 : vector<1x256xf32>
    %127 = math.exp %126 : vector<1x256xf32>
    %cst_58 = arith.constant 1.000000e+00 : f32
    %128 = vector.broadcast %cst_58 : f32 to vector<1x256xf32>
    %129 = arith.subf %128, %127 : vector<1x256xf32>
    %130 = arith.mulf %129, %122 : vector<1x256xf32>
    %131 = vector.broadcast %130 : vector<1x256xf32> to vector<3x256xf32>
    %132 = arith.mulf %131, %124 : vector<3x256xf32>
    %133 = arith.addf %113, %132 : vector<3x256xf32>
    %cst_59 = arith.constant 0.927999973 : f32
    %134 = vector.broadcast %cst_59 : f32 to vector<1x256xf32>
    %135 = arith.mulf %130, %134 : vector<1x256xf32>
    %136 = arith.addf %116, %135 : vector<1x256xf32>
    %137 = arith.addf %117, %130 : vector<1x256xf32>
    %cst_60 = arith.constant 1.000000e+00 : f32
    %138 = vector.broadcast %cst_60 : f32 to vector<1x256xf32>
    %139 = arith.subf %138, %129 : vector<1x256xf32>
    %cst_61 = arith.constant 1.000000e-10 : f32
    %140 = vector.broadcast %cst_61 : f32 to vector<1x256xf32>
    %141 = arith.addf %139, %140 : vector<1x256xf32>
    %142 = arith.mulf %122, %141 : vector<1x256xf32>
    %143 = vector.extract_strided_slice %49 {offsets = [0, 512], sizes = [1, 256], strides = [1, 1]} : vector<1x1536xf32> to vector<1x256xf32>
    %144 = vector.extract_strided_slice %98 {offsets = [0, 512], sizes = [3, 256], strides = [1, 1]} : vector<3x1536xf32> to vector<3x256xf32>
    %cst_62 = arith.constant -4.800000e-02 : f32
    %145 = vector.broadcast %cst_62 : f32 to vector<1x256xf32>
    %146 = arith.mulf %145, %143 : vector<1x256xf32>
    %147 = math.exp %146 : vector<1x256xf32>
    %cst_63 = arith.constant 1.000000e+00 : f32
    %148 = vector.broadcast %cst_63 : f32 to vector<1x256xf32>
    %149 = arith.subf %148, %147 : vector<1x256xf32>
    %150 = arith.mulf %149, %142 : vector<1x256xf32>
    %151 = vector.broadcast %150 : vector<1x256xf32> to vector<3x256xf32>
    %152 = arith.mulf %151, %144 : vector<3x256xf32>
    %153 = arith.addf %133, %152 : vector<3x256xf32>
    %cst_64 = arith.constant 9.760000e-01 : f32
    %154 = vector.broadcast %cst_64 : f32 to vector<1x256xf32>
    %155 = arith.mulf %150, %154 : vector<1x256xf32>
    %156 = arith.addf %136, %155 : vector<1x256xf32>
    %157 = arith.addf %137, %150 : vector<1x256xf32>
    %cst_65 = arith.constant 1.000000e+00 : f32
    %158 = vector.broadcast %cst_65 : f32 to vector<1x256xf32>
    %159 = arith.subf %158, %149 : vector<1x256xf32>
    %cst_66 = arith.constant 1.000000e-10 : f32
    %160 = vector.broadcast %cst_66 : f32 to vector<1x256xf32>
    %161 = arith.addf %159, %160 : vector<1x256xf32>
    %162 = arith.mulf %142, %161 : vector<1x256xf32>
    %163 = vector.extract_strided_slice %49 {offsets = [0, 768], sizes = [1, 256], strides = [1, 1]} : vector<1x1536xf32> to vector<1x256xf32>
    %164 = vector.extract_strided_slice %98 {offsets = [0, 768], sizes = [3, 256], strides = [1, 1]} : vector<3x1536xf32> to vector<3x256xf32>
    %cst_67 = arith.constant -4.800000e-02 : f32
    %165 = vector.broadcast %cst_67 : f32 to vector<1x256xf32>
    %166 = arith.mulf %165, %163 : vector<1x256xf32>
    %167 = math.exp %166 : vector<1x256xf32>
    %cst_68 = arith.constant 1.000000e+00 : f32
    %168 = vector.broadcast %cst_68 : f32 to vector<1x256xf32>
    %169 = arith.subf %168, %167 : vector<1x256xf32>
    %170 = arith.mulf %169, %162 : vector<1x256xf32>
    %171 = vector.broadcast %170 : vector<1x256xf32> to vector<3x256xf32>
    %172 = arith.mulf %171, %164 : vector<3x256xf32>
    %173 = arith.addf %153, %172 : vector<3x256xf32>
    %cst_69 = arith.constant 1.024000e+00 : f32
    %174 = vector.broadcast %cst_69 : f32 to vector<1x256xf32>
    %175 = arith.mulf %170, %174 : vector<1x256xf32>
    %176 = arith.addf %156, %175 : vector<1x256xf32>
    %177 = arith.addf %157, %170 : vector<1x256xf32>
    %cst_70 = arith.constant 1.000000e+00 : f32
    %178 = vector.broadcast %cst_70 : f32 to vector<1x256xf32>
    %179 = arith.subf %178, %169 : vector<1x256xf32>
    %cst_71 = arith.constant 1.000000e-10 : f32
    %180 = vector.broadcast %cst_71 : f32 to vector<1x256xf32>
    %181 = arith.addf %179, %180 : vector<1x256xf32>
    %182 = arith.mulf %162, %181 : vector<1x256xf32>
    %183 = vector.extract_strided_slice %49 {offsets = [0, 1024], sizes = [1, 256], strides = [1, 1]} : vector<1x1536xf32> to vector<1x256xf32>
    %184 = vector.extract_strided_slice %98 {offsets = [0, 1024], sizes = [3, 256], strides = [1, 1]} : vector<3x1536xf32> to vector<3x256xf32>
    %cst_72 = arith.constant -4.800000e-02 : f32
    %185 = vector.broadcast %cst_72 : f32 to vector<1x256xf32>
    %186 = arith.mulf %185, %183 : vector<1x256xf32>
    %187 = math.exp %186 : vector<1x256xf32>
    %cst_73 = arith.constant 1.000000e+00 : f32
    %188 = vector.broadcast %cst_73 : f32 to vector<1x256xf32>
    %189 = arith.subf %188, %187 : vector<1x256xf32>
    %190 = arith.mulf %189, %182 : vector<1x256xf32>
    %191 = vector.broadcast %190 : vector<1x256xf32> to vector<3x256xf32>
    %192 = arith.mulf %191, %184 : vector<3x256xf32>
    %193 = arith.addf %173, %192 : vector<3x256xf32>
    %cst_74 = arith.constant 1.072000e+00 : f32
    %194 = vector.broadcast %cst_74 : f32 to vector<1x256xf32>
    %195 = arith.mulf %190, %194 : vector<1x256xf32>
    %196 = arith.addf %176, %195 : vector<1x256xf32>
    %197 = arith.addf %177, %190 : vector<1x256xf32>
    %cst_75 = arith.constant 1.000000e+00 : f32
    %198 = vector.broadcast %cst_75 : f32 to vector<1x256xf32>
    %199 = arith.subf %198, %189 : vector<1x256xf32>
    %cst_76 = arith.constant 1.000000e-10 : f32
    %200 = vector.broadcast %cst_76 : f32 to vector<1x256xf32>
    %201 = arith.addf %199, %200 : vector<1x256xf32>
    %202 = arith.mulf %182, %201 : vector<1x256xf32>
    %203 = vector.extract_strided_slice %49 {offsets = [0, 1280], sizes = [1, 256], strides = [1, 1]} : vector<1x1536xf32> to vector<1x256xf32>
    %204 = vector.extract_strided_slice %98 {offsets = [0, 1280], sizes = [3, 256], strides = [1, 1]} : vector<3x1536xf32> to vector<3x256xf32>
    %cst_77 = arith.constant -1.000000e+10 : f32
    %205 = vector.broadcast %cst_77 : f32 to vector<1x256xf32>
    %206 = arith.mulf %205, %203 : vector<1x256xf32>
    %207 = math.exp %206 : vector<1x256xf32>
    %cst_78 = arith.constant 1.000000e+00 : f32
    %208 = vector.broadcast %cst_78 : f32 to vector<1x256xf32>
    %209 = arith.subf %208, %207 : vector<1x256xf32>
    %210 = arith.mulf %209, %202 : vector<1x256xf32>
    %211 = vector.broadcast %210 : vector<1x256xf32> to vector<3x256xf32>
    %212 = arith.mulf %211, %204 : vector<3x256xf32>
    %213 = arith.addf %193, %212 : vector<3x256xf32>
    %cst_79 = arith.constant 1.120000e+00 : f32
    %214 = vector.broadcast %cst_79 : f32 to vector<1x256xf32>
    %215 = arith.mulf %210, %214 : vector<1x256xf32>
    %216 = arith.addf %196, %215 : vector<1x256xf32>
    %217 = arith.addf %197, %210 : vector<1x256xf32>
    %cst_80 = arith.constant 1.000000e+00 : f32
    %218 = vector.broadcast %cst_80 : f32 to vector<1x256xf32>
    %219 = arith.subf %218, %217 : vector<1x256xf32>
    %220 = vector.extract_strided_slice %98 {offsets = [0, 1280], sizes = [3, 256], strides = [1, 1]} : vector<3x1536xf32> to vector<3x256xf32>
    %221 = vector.broadcast %219 : vector<1x256xf32> to vector<3x256xf32>
    %222 = arith.mulf %221, %220 : vector<3x256xf32>
    %223 = arith.addf %213, %222 : vector<3x256xf32>
    %cst_81 = arith.constant 1.120000e+00 : f32
    %224 = vector.broadcast %cst_81 : f32 to vector<1x256xf32>
    %225 = arith.mulf %219, %224 : vector<1x256xf32>
    %226 = arith.addf %216, %225 : vector<1x256xf32>
    %cst_82 = arith.constant 2.000000e+00 : f32
    %227 = vector.broadcast %cst_82 : f32 to vector<3x256xf32>
    %228 = arith.mulf %223, %227 : vector<3x256xf32>
    %cst_83 = arith.constant 1.000000e+00 : f32
    %229 = vector.broadcast %cst_83 : f32 to vector<3x256xf32>
    %230 = arith.subf %228, %229 : vector<3x256xf32>
    %c0_84 = arith.constant 0 : index
    %c0_85 = arith.constant 0 : index
    %c0_86 = arith.constant 0 : index
    %231 = vector.load %arg9[%c0_84, %c0_85, %c0_86] : memref<1x4x256xf32, #tpu.memory_space<vmem>>, vector<1x3x256xf32>
    %232 = vector.shape_cast %231 : vector<1x3x256xf32> to vector<3x256xf32>
    %233 = vector.shape_cast %230 : vector<3x256xf32> to vector<1x3x256xf32>
    tpu.vector_store %arg9[%c0_84, %c0_85, %c0_86], %233 {strides = array<i32>} : memref<1x4x256xf32, #tpu.memory_space<vmem>>, vector<1x3x256xf32>,
    %c0_87 = arith.constant 0 : index
    %c3 = arith.constant 3 : index
    %c0_88 = arith.constant 0 : index
    %234 = vector.load %arg9[%c0_87, %c3, %c0_88] : memref<1x4x256xf32, #tpu.memory_space<vmem>>, vector<1x1x256xf32>
    %235 = vector.shape_cast %234 : vector<1x1x256xf32> to vector<1x256xf32>
    %236 = vector.shape_cast %226 : vector<1x256xf32> to vector<1x1x256xf32>
    tpu.vector_store %arg9[%c0_87, %c3, %c0_88], %236 {strides = array<i32>} : memref<1x4x256xf32, #tpu.memory_space<vmem>>, vector<1x1x256xf32>,
    return
  }
  func.func @transform_0(%arg0: i32) -> (i32, i32) {
    %c0_i32 = arith.constant 0 : i32
    %c0_i32_0 = arith.constant 0 : i32
    %c0_i32_1 = arith.constant 0 : i32
    return %c0_i32, %c0_i32_0 : i32, i32
  }
  func.func @transform_1(%arg0: i32) -> (i32, i32, i32, i32) {
    %c0_i32 = arith.constant 0 : i32
    %c0_i32_0 = arith.constant 0 : i32
    %c0_i32_1 = arith.constant 0 : i32
    %c0_i32_2 = arith.constant 0 : i32
    return %arg0, %c0_i32, %c0_i32_0, %c0_i32_1 : i32, i32, i32, i32
  }
  func.func @transform_2(%arg0: i32) -> (i32, i32, i32, i32) {
    %c0_i32 = arith.constant 0 : i32
    %c0_i32_0 = arith.constant 0 : i32
    %c0_i32_1 = arith.constant 0 : i32
    %c0_i32_2 = arith.constant 0 : i32
    return %arg0, %c0_i32, %c0_i32_0, %c0_i32_1 : i32, i32, i32, i32
  }
  func.func @transform_3(%arg0: i32) -> (i32, i32, i32) {
    %c0_i32 = arith.constant 0 : i32
    %c0_i32_0 = arith.constant 0 : i32
    %c0_i32_1 = arith.constant 0 : i32
    %c0_i32_2 = arith.constant 0 : i32
    return %c0_i32, %c0_i32_0, %c0_i32_1 : i32, i32, i32
  }
  func.func @transform_4(%arg0: i32) -> (i32, i32) {
    %c0_i32 = arith.constant 0 : i32
    %c0_i32_0 = arith.constant 0 : i32
    %c0_i32_1 = arith.constant 0 : i32
    return %c0_i32, %c0_i32_0 : i32, i32
  }
  func.func @transform_5(%arg0: i32) -> (i32, i32) {
    %c0_i32 = arith.constant 0 : i32
    %c0_i32_0 = arith.constant 0 : i32
    %c0_i32_1 = arith.constant 0 : i32
    return %c0_i32, %c0_i32_0 : i32, i32
  }
  func.func @transform_6(%arg0: i32) -> (i32, i32) {
    %c0_i32 = arith.constant 0 : i32
    %c0_i32_0 = arith.constant 0 : i32
    %c0_i32_1 = arith.constant 0 : i32
    return %c0_i32, %c0_i32_0 : i32, i32
  }
  func.func @transform_7(%arg0: i32) -> (i32, i32) {
    %c0_i32 = arith.constant 0 : i32
    %c0_i32_0 = arith.constant 0 : i32
    %c0_i32_1 = arith.constant 0 : i32
    return %c0_i32, %c0_i32_0 : i32, i32
  }
  func.func @transform_8(%arg0: i32) -> (i32, i32, i32) {
    %c0_i32 = arith.constant 0 : i32
    %c0_i32_0 = arith.constant 0 : i32
    %c0_i32_1 = arith.constant 0 : i32
    return %arg0, %c0_i32, %c0_i32_0 : i32, i32, i32
  }
}

</mosaic_0001>

<llo_original>
// kernel: squeeze.1
$region0: #{squeeze.1}
  %s0 = inlined_call_operand.vmem [shape: f32[2,256], index: 0, kind: input, shape index: {}]
  %s1 = inlined_call_operand.hbm [shape: f32[2,16,16], index: 1, kind: output, shape index: {}]
  $region1: #{squeeze.1} parent=0
    #allocation0 [shape = 'u8[16384]{0}', space=vmem, size = 0x4000, scoped, tag = 'operand span for operand 1']
    #allocation1 [shape = 's32[1]{0}', space=sflag, size = 0x4, scoped, tag = 'scoped memory for squeeze.1']
    #allocation2 [shape = 'u8[8192]{0}', space=vmem, size = 0x2000, scoped, tag = 'scoped mem for input reshape']
    %2 = vsyncpa [#allocation1], 0
    %s4 = ssub.s32 4, 1
    %s5 = scalar_lea.vmem %s0, 2
    %v6 = vld [vmem:[%s5] sm:%s4]
    %s7 = scalar_lea.vmem [#allocation2], 8
    %8 = vst [vmem:[%s7] sm:%s4] %v6
    %v9 = vld [vmem:[%s0] sm:%s4]
    %10 = vst [vmem:[#allocation2] sm:%s4] %v9
    %v11 = vld [vmem:[#allocation2] sm:$0x3]
    %vm12 = vcmask 130048
    %13 = vst.msk [vmem:[#allocation0] ss:$16 sm:$0x3] %vm12, %v11
    %s14 = scalar_lea.vmem [#allocation2], 8
    %v15 = vld [vmem:[%s14] sm:$0x3]
    %vm16 = vcmask 130048
    %s17 = scalar_lea.vmem [#allocation0], 8
    %18 = vst.msk [vmem:[%s17] ss:$16 sm:$0x3] %vm16, %v15
    %v19 = vld.sshfl [vmem:[#allocation2] sm:$0xff pattern:$0x99999180]
    %20 = vrot.lane.b32.xlu0 %v19, 112
    %v21 = vpop.permute.xlu0 %20
    %vm22 = vcmask 130048
    %s23 = scalar_lea.vmem [#allocation0], 1
    %24 = vst.msk [vmem:[%s23] ss:$8 sm:$0xf] %vm22, %v21
    %v25 = vld.sshfl [vmem:[#allocation2] sm:$0xff pattern:$0x99999180]
    %26 = vrot.lane.b32.xlu0 %v25, 96
    %v27 = vpop.permute.xlu0 %26
    %vm28 = vcmask 130048
    %s29 = scalar_lea.vmem [#allocation0], 2
    %30 = vst.msk [vmem:[%s29] ss:$8 sm:$0xf] %vm28, %v27
    %v31 = vld.sshfl [vmem:[#allocation2] sm:$0xff pattern:$0x99999180]
    %32 = vrot.lane.b32.xlu0 %v31, 80
    %v33 = vpop.permute.xlu0 %32
    %vm34 = vcmask 130048
    %s35 = scalar_lea.vmem [#allocation0], 3
    %36 = vst.msk [vmem:[%s35] ss:$8 sm:$0xf] %vm34, %v33
    %v37 = vld.sshfl [vmem:[#allocation2] sm:$0xff pattern:$0x99999180]
    %38 = vrot.lane.b32.xlu0 %v37, 64
    %v39 = vpop.permute.xlu0 %38
    %vm40 = vcmask 130048
    %s41 = scalar_lea.vmem [#allocation0], 4
    %42 = vst.msk [vmem:[%s41] ss:$8 sm:$0xf] %vm40, %v39
    %v43 = vld.sshfl [vmem:[#allocation2] sm:$0xff pattern:$0x99999180]
    %44 = vrot.lane.b32.xlu0 %v43, 48
    %v45 = vpop.permute.xlu0 %44
    %vm46 = vcmask 130048
    %s47 = scalar_lea.vmem [#allocation0], 5
    %48 = vst.msk [vmem:[%s47] ss:$8 sm:$0xf] %vm46, %v45
    %v49 = vld.sshfl [vmem:[#allocation2] sm:$0xff pattern:$0x99999180]
    %50 = vrot.lane.b32.xlu0 %v49, 32
    %v51 = vpop.permute.xlu0 %50
    %vm52 = vcmask 130048
    %s53 = scalar_lea.vmem [#allocation0], 6
    %54 = vst.msk [vmem:[%s53] ss:$8 sm:$0xf] %vm52, %v51
    %v55 = vld.sshfl [vmem:[#allocation2] sm:$0xff pattern:$0x99999180]
    %56 = vrot.lane.b32.xlu0 %v55, 16
    %v57 = vpop.permute.xlu0 %56
    %vm58 = vcmask 130048
    %s59 = scalar_lea.vmem [#allocation0], 7
    %60 = vst.msk [vmem:[%s59] ss:$8 sm:$0xf] %vm58, %v57
    %62 = vsyncadd [#allocation1], 0
    %s64 = sshll.u32 [#allocation0], 4
    %s65 = int_to_ptr.vmem [resolvable:$true] %s64
    %s66 = sshll.u32 %s1, 4
    %s67 = int_to_ptr.hbm [resolvable:$true] %s66
    %69 = dma.vmem_to_hbm [thread:$0]  %s65, 512, %s67, [#allocation1]
    %71 = dma.done [#allocation1], 512
    %72 = vsyncpa [#allocation1], 1

// kernel: implicit_generator_forward.1
$region0: #{implicit_generator_forward.1}
  #allocation0 [shape = 'u32[]', space=smem, size = 0x4, offset = 0x4, fixed_abs, tag = 'smem constant byte address 0x4 - core index']
  #allocation1 [shape = 'u32[72,128]{1,0:T(1,128)}', space=vmem, size = 0x9000, scoped, tag = 'internal scratch']
  #allocation2 [shape = 'f32[1,1]{1,0:T(1,128)S(1)}', space=vmem, size = 0x200, scoped, tag = 'scoped memory for implicit_generator_forward.1']
  %s0 = inlined_call_operand.vmem [shape: f32[32,1536], index: 0, kind: input, shape index: {}]
  %s1 = inlined_call_operand.vmem [shape: f32[2,9,32,1], index: 1, kind: input, shape index: {}]
  %s2 = inlined_call_operand.vmem [shape: f32[2,9,32,1], index: 2, kind: input, shape index: {}]
  %s3 = inlined_call_operand.vmem [shape: bf16[7,32,32], index: 3, kind: input, shape index: {}]
  %s4 = inlined_call_operand.vmem [shape: bf16[33,32], index: 4, kind: input, shape index: {}]
  %s5 = inlined_call_operand.<no memory space> [shape: f32[1,1], index: 5, kind: input, shape index: {}]
  %s6 = inlined_call_operand.vmem [shape: bf16[3,32], index: 6, kind: input, shape index: {}]
  %s7 = inlined_call_operand.vmem [shape: f32[3,1], index: 7, kind: input, shape index: {}]
  %s8 = inlined_call_operand.vmem [shape: f32[2,4,256], index: 8, kind: output, shape index: {}]
  %s9 = sld [smem:[#allocation0]]
  $region72: #{implicit_generator_forward.1} parent=0
    _
  %s11 = ssub.s32 1, %s9
  %s12 = scalar_select 0, %s11, %s9
  %v13 = vstv %s5
  %14 = vst [vmem:[#allocation2] sm:$0x1] %v13
  loop: start=0, step=1, limit=4
  $region2: #{implicit_generator_forward.1} parent=0 // loop_pre_header
    _
  $region3: #{implicit_generator_forward.1} parent=0 // loop_header
    %s16 = sphi 0, %s20
    %p17 = scmp.ge.s32.totalorder %s16, 4
    %s24 = sphi 0, %s24
    %s26 = sphi 0, %s24
    %s27 = sphi 0, %s26
    %s41 = sphi 0, %s27
    %s47 = sphi 0, %s49
    %s50 = sphi 0, %s47
    %s51 = sphi 0, %s50
    %s67 = sphi 0, %s51
    %s73 = sphi 0, %s75
    %s76 = sphi 0, %s73
    %s77 = sphi 0, %s76
    %s93 = sphi 0, %s77
    %s97 = sphi 0, %s97
    %s99 = sphi 0, %s97
    %s100 = sphi 0, %s99
    %s114 = sphi 0, %s100
    %s118 = sphi 0, %s118
    %s120 = sphi 0, %s118
    %s121 = sphi 0, %s120
    %s135 = sphi 0, %s121
    %s139 = sphi 0, %s139
    %s141 = sphi 0, %s139
    %s142 = sphi 0, %s141
    %s156 = sphi 0, %s142
    %s160 = sphi 0, %s160
    %s162 = sphi 0, %s160
    %s163 = sphi 0, %s162
    %s177 = sphi 0, %s163
    %s181 = sphi 0, %s181
    %s183 = sphi 0, %s181
    %s184 = sphi 0, %s183
    %s198 = sphi 0, %s184
    %s204 = sphi 0, %s206
    %s207 = sphi 0, %s204
    %s208 = sphi 0, %s207
    %s224 = sphi 0, %s208
  $region4: #{implicit_generator_forward.1} parent=0 // loop_header_branch
    %19 = sbr.rel (%p17) target = $region8
  $region5: #{implicit_generator_forward.1} parent=0 // loop_body
    %s21 = ssub.s32 %s16, 1
    %s22 = ssub.s32 %s16, 2
    %s23 = sadd.s32 %s16, 1
    %s25 = sadd.s32 %s24, 1
    %p28 = scmp.eq.s32.totalorder %s16, 1
    %p29 = scmp.ne.s32.totalorder %s24, %s26
    %p30 = scmp.eq.s32.totalorder %s16, 0
    %p31 = por %p29, %p30
    %p32 = scmp.ne.s32.totalorder %s24, %s26
    %p33 = scmp.eq.s32.totalorder %s21, 1
    %p34 = por %p32, %p33
    %p35 = scmp.ne.s32.totalorder %s26, %s27
    %p36 = scmp.eq.s32.totalorder %s21, 0
    %p37 = por %p35, %p36
    %p38 = scmp.ne.s32.totalorder %s26, %s27
    %p39 = scmp.eq.s32.totalorder %s22, 1
    %p40 = por %p38, %p39
    %p42 = scmp.ne.s32.totalorder %s27, %s41
    %p43 = scmp.eq.s32.totalorder %s22, 0
    %p44 = por %p42, %p43
    %s45 = ssub.s32 %s16, %s23
    %p46 = scmp.eq.s32.totalorder %s45, 0
    %s48 = sadd.s32 %s47, 1
    %s49 = scalar_select %p46, %s47, %s48
    %p52 = pneg %p46
    %p53 = scmp.eq.s32.totalorder %s16, 1
    %p54 = por %p52, %p53
    %p55 = scmp.ne.s32.totalorder %s47, %s50
    %p56 = scmp.eq.s32.totalorder %s16, 0
    %p57 = por %p55, %p56
    %p58 = scmp.ne.s32.totalorder %s47, %s50
    %p59 = scmp.eq.s32.totalorder %s21, 1
    %p60 = por %p58, %p59
    %p61 = scmp.ne.s32.totalorder %s50, %s51
    %p62 = scmp.eq.s32.totalorder %s21, 0
    %p63 = por %p61, %p62
    %p64 = scmp.ne.s32.totalorder %s50, %s51
    %p65 = scmp.eq.s32.totalorder %s22, 1
    %p66 = por %p64, %p65
    %p68 = scmp.ne.s32.totalorder %s51, %s67
    %p69 = scmp.eq.s32.totalorder %s22, 0
    %p70 = por %p68, %p69
    %s71 = ssub.s32 %s16, %s23
    %p72 = scmp.eq.s32.totalorder %s71, 0
    %s74 = sadd.s32 %s73, 1
    %s75 = scalar_select %p72, %s73, %s74
    %p78 = pneg %p72
    %p79 = scmp.eq.s32.totalorder %s16, 1
    %p80 = por %p78, %p79
    %p81 = scmp.ne.s32.totalorder %s73, %s76
    %p82 = scmp.eq.s32.totalorder %s16, 0
    %p83 = por %p81, %p82
    %p84 = scmp.ne.s32.totalorder %s73, %s76
    %p85 = scmp.eq.s32.totalorder %s21, 1
    %p86 = por %p84, %p85
    %p87 = scmp.ne.s32.totalorder %s76, %s77
    %p88 = scmp.eq.s32.totalorder %s21, 0
    %p89 = por %p87, %p88
    %p90 = scmp.ne.s32.totalorder %s76, %s77
    %p91 = scmp.eq.s32.totalorder %s22, 1
    %p92 = por %p90, %p91
    %p94 = scmp.ne.s32.totalorder %s77, %s93
    %p95 = scmp.eq.s32.totalorder %s22, 0
    %p96 = por %p94, %p95
    %s98 = sadd.s32 %s97, 1
    %p101 = scmp.eq.s32.totalorder %s16, 1
    %p102 = scmp.ne.s32.totalorder %s97, %s99
    %p103 = scmp.eq.s32.totalorder %s16, 0
    %p104 = por %p102, %p103
    %p105 = scmp.ne.s32.totalorder %s97, %s99
    %p106 = scmp.eq.s32.totalorder %s21, 1
    %p107 = por %p105, %p106
    %p108 = scmp.ne.s32.totalorder %s99, %s100
    %p109 = scmp.eq.s32.totalorder %s21, 0
    %p110 = por %p108, %p109
    %p111 = scmp.ne.s32.totalorder %s99, %s100
    %p112 = scmp.eq.s32.totalorder %s22, 1
    %p113 = por %p111, %p112
    %p115 = scmp.ne.s32.totalorder %s100, %s114
    %p116 = scmp.eq.s32.totalorder %s22, 0
    %p117 = por %p115, %p116
    %s119 = sadd.s32 %s118, 1
    %p122 = scmp.eq.s32.totalorder %s16, 1
    %p123 = scmp.ne.s32.totalorder %s118, %s120
    %p124 = scmp.eq.s32.totalorder %s16, 0
    %p125 = por %p123, %p124
    %p126 = scmp.ne.s32.totalorder %s118, %s120
    %p127 = scmp.eq.s32.totalorder %s21, 1
    %p128 = por %p126, %p127
    %p129 = scmp.ne.s32.totalorder %s120, %s121
    %p130 = scmp.eq.s32.totalorder %s21, 0
    %p131 = por %p129, %p130
    %p132 = scmp.ne.s32.totalorder %s120, %s121
    %p133 = scmp.eq.s32.totalorder %s22, 1
    %p134 = por %p132, %p133
    %p136 = scmp.ne.s32.totalorder %s121, %s135
    %p137 = scmp.eq.s32.totalorder %s22, 0
    %p138 = por %p136, %p137
    %s140 = sadd.s32 %s139, 1
    %p143 = scmp.eq.s32.totalorder %s16, 1
    %p144 = scmp.ne.s32.totalorder %s139, %s141
    %p145 = scmp.eq.s32.totalorder %s16, 0
    %p146 = por %p144, %p145
    %p147 = scmp.ne.s32.totalorder %s139, %s141
    %p148 = scmp.eq.s32.totalorder %s21, 1
    %p149 = por %p147, %p148
    %p150 = scmp.ne.s32.totalorder %s141, %s142
    %p151 = scmp.eq.s32.totalorder %s21, 0
    %p152 = por %p150, %p151
    %p153 = scmp.ne.s32.totalorder %s141, %s142
    %p154 = scmp.eq.s32.totalorder %s22, 1
    %p155 = por %p153, %p154
    %p157 = scmp.ne.s32.totalorder %s142, %s156
    %p158 = scmp.eq.s32.totalorder %s22, 0
    %p159 = por %p157, %p158
    %s161 = sadd.s32 %s160, 1
    %p164 = scmp.eq.s32.totalorder %s16, 1
    %p165 = scmp.ne.s32.totalorder %s160, %s162
    %p166 = scmp.eq.s32.totalorder %s16, 0
    %p167 = por %p165, %p166
    %p168 = scmp.ne.s32.totalorder %s160, %s162
    %p169 = scmp.eq.s32.totalorder %s21, 1
    %p170 = por %p168, %p169
    %p171 = scmp.ne.s32.totalorder %s162, %s163
    %p172 = scmp.eq.s32.totalorder %s21, 0
    %p173 = por %p171, %p172
    %p174 = scmp.ne.s32.totalorder %s162, %s163
    %p175 = scmp.eq.s32.totalorder %s22, 1
    %p176 = por %p174, %p175
    %p178 = scmp.ne.s32.totalorder %s163, %s177
    %p179 = scmp.eq.s32.totalorder %s22, 0
    %p180 = por %p178, %p179
    %s182 = sadd.s32 %s181, 1
    %p185 = scmp.eq.s32.totalorder %s16, 1
    %p186 = scmp.ne.s32.totalorder %s181, %s183
    %p187 = scmp.eq.s32.totalorder %s16, 0
    %p188 = por %p186, %p187
    %p189 = scmp.ne.s32.totalorder %s181, %s183
    %p190 = scmp.eq.s32.totalorder %s21, 1
    %p191 = por %p189, %p190
    %p192 = scmp.ne.s32.totalorder %s183, %s184
    %p193 = scmp.eq.s32.totalorder %s21, 0
    %p194 = por %p192, %p193
    %p195 = scmp.ne.s32.totalorder %s183, %s184
    %p196 = scmp.eq.s32.totalorder %s22, 1
    %p197 = por %p195, %p196
    %p199 = scmp.ne.s32.totalorder %s184, %s198
    %p200 = scmp.eq.s32.totalorder %s22, 0
    %p201 = por %p199, %p200
    %s202 = ssub.s32 %s16, %s23
    %p203 = scmp.eq.s32.totalorder %s202, 0
    %s205 = sadd.s32 %s204, 1
    %s206 = scalar_select %p203, %s204, %s205
    %p209 = pneg %p203
    %p210 = scmp.eq.s32.totalorder %s16, 1
    %p211 = por %p209, %p210
    %p212 = scmp.ne.s32.totalorder %s204, %s207
    %p213 = scmp.eq.s32.totalorder %s16, 0
    %p214 = por %p212, %p213
    %p215 = scmp.ne.s32.totalorder %s204, %s207
    %p216 = scmp.eq.s32.totalorder %s21, 1
    %p217 = por %p215, %p216
    %p218 = scmp.ne.s32.totalorder %s207, %s208
    %p219 = scmp.eq.s32.totalorder %s21, 0
    %p220 = por %p218, %p219
    %p221 = scmp.ne.s32.totalorder %s207, %s208
    %p222 = scmp.eq.s32.totalorder %s22, 1
    %p223 = por %p221, %p222
    %p225 = scmp.ne.s32.totalorder %s208, %s224
    %p226 = scmp.eq.s32.totalorder %s22, 0
    %p227 = por %p225, %p226
    %p228 = scmp.le.s32.totalorder 1, %s16
    %p229 = scmp.lt.s32.totalorder %s16, 3
    %p230 = pnand %p228, %p229
    %p231 = pneg %p230
    // Predicated region
    $region9: #{implicit_generator_forward.1} parent=5 // pred_check
      _
    $region10: #{implicit_generator_forward.1} parent=5 // pred_check_branch
      %233 = sbr.rel (%p230) target = $region12
    $region11: #{implicit_generator_forward.1} parent=5 // pred_region
      %s234 = ssub.s32 %s16, 1
      // Predicated region
      $region13: #{implicit_generator_forward.1} parent=11 // pred_check
        %p235 = pneg %p37
      $region14: #{implicit_generator_forward.1} parent=11 // pred_check_branch
        %237 = sbr.rel (%p235) target = $region16
      $region15: #{implicit_generator_forward.1} parent=11 // pred_region
        _
      $region16: #{implicit_generator_forward.1} parent=11 // pred_fallthru
        _
      // Predicated region
      $region17: #{implicit_generator_forward.1} parent=11 // pred_check
        %p238 = pneg %p110
      $region18: #{implicit_generator_forward.1} parent=11 // pred_check_branch
        %240 = sbr.rel (%p238) target = $region20
      $region19: #{implicit_generator_forward.1} parent=11 // pred_region
        _
      $region20: #{implicit_generator_forward.1} parent=11 // pred_fallthru
        _
      // Predicated region
      $region21: #{implicit_generator_forward.1} parent=11 // pred_check
        %p241 = pneg %p131
      $region22: #{implicit_generator_forward.1} parent=11 // pred_check_branch
        %243 = sbr.rel (%p241) target = $region24
      $region23: #{implicit_generator_forward.1} parent=11 // pred_region
        _
      $region24: #{implicit_generator_forward.1} parent=11 // pred_fallthru
        _
      // Predicated region
      $region25: #{implicit_generator_forward.1} parent=11 // pred_check
        %p244 = pneg %p152
      $region26: #{implicit_generator_forward.1} parent=11 // pred_check_branch
        %246 = sbr.rel (%p244) target = $region28
      $region27: #{implicit_generator_forward.1} parent=11 // pred_region
        _
      $region28: #{implicit_generator_forward.1} parent=11 // pred_fallthru
        _
      // Predicated region
      $region29: #{implicit_generator_forward.1} parent=11 // pred_check
        %p247 = pneg %p173
      $region30: #{implicit_generator_forward.1} parent=11 // pred_check_branch
        %249 = sbr.rel (%p247) target = $region32
      $region31: #{implicit_generator_forward.1} parent=11 // pred_region
        _
      $region32: #{implicit_generator_forward.1} parent=11 // pred_fallthru
        _
      // Predicated region
      $region33: #{implicit_generator_forward.1} parent=11 // pred_check
        %p250 = pneg %p194
      $region34: #{implicit_generator_forward.1} parent=11 // pred_check_branch
        %252 = sbr.rel (%p250) target = $region36
      $region35: #{implicit_generator_forward.1} parent=11 // pred_region
        _
      $region36: #{implicit_generator_forward.1} parent=11 // pred_fallthru
        _
    $region12: #{implicit_generator_forward.1} parent=5 // pred_fallthru
      _
    %p253 = scmp.lt.s32.totalorder %s16, 2
    // Predicated region
    $region37: #{implicit_generator_forward.1} parent=5 // pred_check
      %p254 = pneg %p253
    $region38: #{implicit_generator_forward.1} parent=5 // pred_check_branch
      %256 = sbr.rel (%p254) target = $region40
    $region39: #{implicit_generator_forward.1} parent=5 // pred_region
      // Predicated region
      $region41: #{implicit_generator_forward.1} parent=39 // pred_check
        %p257 = pneg %p57
      $region42: #{implicit_generator_forward.1} parent=39 // pred_check_branch
        %259 = sbr.rel (%p257) target = $region44
      $region43: #{implicit_generator_forward.1} parent=39 // pred_region
        %p260 = scmp.lt.s32.totalorder %s16, 1
        %s261 = scalar_select %p260, %s16, 1
        %s262 = smul.addr %s261, 36
        %s263 = smul.addr %s262, 8
        %s264 = scalar_lea.vmem %s1, %s263
      $region44: #{implicit_generator_forward.1} parent=39 // pred_fallthru
        _
      // Predicated region
      $region45: #{implicit_generator_forward.1} parent=39 // pred_check
        %p265 = pneg %p83
      $region46: #{implicit_generator_forward.1} parent=39 // pred_check_branch
        %267 = sbr.rel (%p265) target = $region48
      $region47: #{implicit_generator_forward.1} parent=39 // pred_region
        %p268 = scmp.lt.s32.totalorder %s16, 1
        %s269 = scalar_select %p268, %s16, 1
        %s270 = smul.addr %s269, 36
        %s271 = smul.addr %s270, 8
        %s272 = scalar_lea.vmem %s2, %s271
      $region48: #{implicit_generator_forward.1} parent=39 // pred_fallthru
        _
    $region40: #{implicit_generator_forward.1} parent=5 // pred_fallthru
      _
    %p273 = scmp.le.s32.totalorder 1, %s16
    %p274 = scmp.lt.s32.totalorder %s16, 3
    %p275 = pnand %p273, %p274
    %p276 = pneg %p275
    // Predicated region
    $region49: #{implicit_generator_forward.1} parent=5 // pred_check
      _
    $region50: #{implicit_generator_forward.1} parent=5 // pred_check_branch
      %278 = sbr.rel (%p275) target = $region52
    $region51: #{implicit_generator_forward.1} parent=5 // pred_region
      %s279 = ssub.s32 %s16, 1
      %p280 = pneg %p37
      %p281 = pneg %p34
      %p282 = scmp.lt.s32.totalorder %s21, 1
      %s283 = scalar_select %p282, %s21, 1
      %s284 = smul.addr %s283, 36
      %s285 = smul.addr %s284, 8
      %s286 = scalar_lea.vmem %s1, %s285
      %p287 = pneg %p63
      %p288 = pneg %p60
      %p289 = scmp.lt.s32.totalorder %s21, 1
      %s290 = scalar_select %p289, %s21, 1
      %s291 = smul.addr %s290, 36
      %s292 = smul.addr %s291, 8
      %s293 = scalar_lea.vmem %s2, %s292
      %p294 = pneg %p89
      %p295 = pneg %p86
      %p296 = pneg %p110
      %p297 = pneg %p107
      %p298 = pneg %p131
      %p299 = pneg %p128
      %p300 = pneg %p152
      %p301 = pneg %p149
      %p302 = pneg %p173
      %p303 = pneg %p170
      %p304 = pneg %p194
      %p305 = pneg %p191
      %p306 = pneg %p220
      %p307 = pneg %p217
      %p308 = scmp.lt.s32.totalorder %s21, 1
      %s309 = scalar_select %p308, %s21, 1
      %s310 = smul.addr %s309, 2
      %s311 = smul.addr %s310, 4
      %s312 = scalar_lea.vmem %s8, %s311
      %p313 = scmp.lt.s32.totalorder %s21, 1
      %s314 = scalar_select %p313, %s21, 1
      %s315 = smul.addr %s314, 36
      %s316 = smul.addr %s315, 8
      %s317 = scalar_lea.vmem %s1, %s316
      %p318 = scmp.lt.s32.totalorder %s21, 1
      %s319 = scalar_select %p318, %s21, 1
      %s320 = smul.addr %s319, 36
      %s321 = smul.addr %s320, 8
      %s322 = scalar_lea.vmem %s2, %s321
      %p323 = scmp.lt.s32.totalorder %s21, 1
      %s324 = scalar_select %p323, %s21, 1
      %s325 = smul.addr %s324, 2
      %s326 = smul.addr %s325, 4
      %s327 = scalar_lea.vmem %s8, %s326
      %v329 = vld [vmem:[%s317] sm:$0xff]
      %v330 = vld [vmem:[%s317 + $0x8] sm:$0xff]
      %v331 = vld [vmem:[%s317 + $0x10] sm:$0xff]
      %v332 = vld [vmem:[%s317 + $0x18] sm:$0xff]
      %v333 = vld [vmem:[%s0] sm:$0xff]
      %v334 = vld [vmem:[%s0 + $0x8] sm:$0xff]
      %v335 = vld [vmem:[%s0 + $0x10] sm:$0xff]
      %v336 = vld [vmem:[%s0 + $0x18] sm:$0xff]
      %v337 = vld [vmem:[%s0 + $0x20] sm:$0xff]
      %v338 = vld [vmem:[%s0 + $0x28] sm:$0xff]
      %v339 = vld [vmem:[%s0 + $0x30] sm:$0xff]
      %v340 = vld [vmem:[%s0 + $0x38] sm:$0xff]
      %v341 = vld [vmem:[%s0 + $0x40] sm:$0xff]
      %v342 = vld [vmem:[%s0 + $0x48] sm:$0xff]
      %v343 = vld [vmem:[%s0 + $0x50] sm:$0xff]
      %v344 = vld [vmem:[%s0 + $0x58] sm:$0xff]
      %v345 = vld [vmem:[%s0 + $0x60] sm:$0xff]
      %v346 = vld [vmem:[%s0 + $0x68] sm:$0xff]
      %v347 = vld [vmem:[%s0 + $0x70] sm:$0xff]
      %v348 = vld [vmem:[%s0 + $0x78] sm:$0xff]
      %v349 = vld [vmem:[%s0 + $0x80] sm:$0xff]
      %v350 = vld [vmem:[%s0 + $0x88] sm:$0xff]
      %v351 = vld [vmem:[%s0 + $0x90] sm:$0xff]
      %v352 = vld [vmem:[%s0 + $0x98] sm:$0xff]
      %v353 = vld [vmem:[%s0 + $0xa0] sm:$0xff]
      %v354 = vld [vmem:[%s0 + $0xa8] sm:$0xff]
      %v355 = vld [vmem:[%s0 + $0xb0] sm:$0xff]
      %v356 = vld [vmem:[%s0 + $0xb8] sm:$0xff]
      %v357 = vld [vmem:[%s0 + $0xc0] sm:$0xff]
      %v358 = vld [vmem:[%s0 + $0xc8] sm:$0xff]
      %v359 = vld [vmem:[%s0 + $0xd0] sm:$0xff]
      %v360 = vld [vmem:[%s0 + $0xd8] sm:$0xff]
      %v361 = vld [vmem:[%s0 + $0xe0] sm:$0xff]
      %v362 = vld [vmem:[%s0 + $0xe8] sm:$0xff]
      %v363 = vld [vmem:[%s0 + $0xf0] sm:$0xff]
      %v364 = vld [vmem:[%s0 + $0xf8] sm:$0xff]
      %v365 = vld [vmem:[%s0 + $0x100] sm:$0xff]
      %v366 = vld [vmem:[%s0 + $0x108] sm:$0xff]
      %v367 = vld [vmem:[%s0 + $0x110] sm:$0xff]
      %v368 = vld [vmem:[%s0 + $0x118] sm:$0xff]
      %v369 = vld [vmem:[%s0 + $0x120] sm:$0xff]
      %v370 = vld [vmem:[%s0 + $0x128] sm:$0xff]
      %v371 = vld [vmem:[%s0 + $0x130] sm:$0xff]
      %v372 = vld [vmem:[%s0 + $0x138] sm:$0xff]
      %v373 = vld [vmem:[%s0 + $0x140] sm:$0xff]
      %v374 = vld [vmem:[%s0 + $0x148] sm:$0xff]
      %v375 = vld [vmem:[%s0 + $0x150] sm:$0xff]
      %v376 = vld [vmem:[%s0 + $0x158] sm:$0xff]
      %v377 = vld [vmem:[%s0 + $0x160] sm:$0xff]
      %v378 = vld [vmem:[%s0 + $0x168] sm:$0xff]
      %v379 = vld [vmem:[%s0 + $0x170] sm:$0xff]
      %v380 = vld [vmem:[%s0 + $0x178] sm:$0xff]
      %382 = vset.pattern.permute.xlu0 0
      %383 = vperm.xlu0 %382, %v329
      %v384 = vpop.permute.xlu0 %383
      %387 = vset.pattern.permute.xlu0 0
      %388 = vperm.xlu0 %387, %v330
      %v389 = vpop.permute.xlu0 %388
      %392 = vset.pattern.permute.xlu0 0
      %393 = vperm.xlu0 %392, %v331
      %v394 = vpop.permute.xlu0 %393
      %397 = vset.pattern.permute.xlu0 0
      %398 = vperm.xlu0 %397, %v332
      %v399 = vpop.permute.xlu0 %398
      %v401 = vmul.f32 %v384, %v333
      %v402 = vmul.f32 %v384, %v334
      %v403 = vmul.f32 %v384, %v335
      %v404 = vmul.f32 %v384, %v336
      %v405 = vmul.f32 %v384, %v337
      %v406 = vmul.f32 %v384, %v338
      %v407 = vmul.f32 %v384, %v339
      %v408 = vmul.f32 %v384, %v340
      %v409 = vmul.f32 %v384, %v341
      %v410 = vmul.f32 %v384, %v342
      %v411 = vmul.f32 %v384, %v343
      %v412 = vmul.f32 %v384, %v344
      %v413 = vmul.f32 %v389, %v345
      %v414 = vmul.f32 %v389, %v346
      %v415 = vmul.f32 %v389, %v347
      %v416 = vmul.f32 %v389, %v348
      %v417 = vmul.f32 %v389, %v349
      %v418 = vmul.f32 %v389, %v350
      %v419 = vmul.f32 %v389, %v351
      %v420 = vmul.f32 %v389, %v352
      %v421 = vmul.f32 %v389, %v353
      %v422 = vmul.f32 %v389, %v354
      %v423 = vmul.f32 %v389, %v355
      %v424 = vmul.f32 %v389, %v356
      %v425 = vmul.f32 %v394, %v357
      %v426 = vmul.f32 %v394, %v358
      %v427 = vmul.f32 %v394, %v359
      %v428 = vmul.f32 %v394, %v360
      %v429 = vmul.f32 %v394, %v361
      %v430 = vmul.f32 %v394, %v362
      %v431 = vmul.f32 %v394, %v363
      %v432 = vmul.f32 %v394, %v364
      %v433 = vmul.f32 %v394, %v365
      %v434 = vmul.f32 %v394, %v366
      %v435 = vmul.f32 %v394, %v367
      %v436 = vmul.f32 %v394, %v368
      %v437 = vmul.f32 %v399, %v369
      %v438 = vmul.f32 %v399, %v370
      %v439 = vmul.f32 %v399, %v371
      %v440 = vmul.f32 %v399, %v372
      %v441 = vmul.f32 %v399, %v373
      %v442 = vmul.f32 %v399, %v374
      %v443 = vmul.f32 %v399, %v375
      %v444 = vmul.f32 %v399, %v376
      %v445 = vmul.f32 %v399, %v377
      %v446 = vmul.f32 %v399, %v378
      %v447 = vmul.f32 %v399, %v379
      %v448 = vmul.f32 %v399, %v380
      %v449 = vld [vmem:[%s322] sm:$0xff]
      %v450 = vld [vmem:[%s322 + $0x8] sm:$0xff]
      %v451 = vld [vmem:[%s322 + $0x10] sm:$0xff]
      %v452 = vld [vmem:[%s322 + $0x18] sm:$0xff]
      %454 = vset.pattern.permute.xlu0 0
      %455 = vperm.xlu0 %454, %v449
      %v456 = vpop.permute.xlu0 %455
      %459 = vset.pattern.permute.xlu0 0
      %460 = vperm.xlu0 %459, %v450
      %v461 = vpop.permute.xlu0 %460
      %464 = vset.pattern.permute.xlu0 0
      %465 = vperm.xlu0 %464, %v451
      %v466 = vpop.permute.xlu0 %465
      %469 = vset.pattern.permute.xlu0 0
      %470 = vperm.xlu0 %469, %v452
      %v471 = vpop.permute.xlu0 %470
      %v473 = vadd.f32 %v401, %v456
      %v474 = vadd.f32 %v402, %v456
      %v475 = vadd.f32 %v403, %v456
      %v476 = vadd.f32 %v404, %v456
      %v477 = vadd.f32 %v405, %v456
      %v478 = vadd.f32 %v406, %v456
      %v479 = vadd.f32 %v407, %v456
      %v480 = vadd.f32 %v408, %v456
      %v481 = vadd.f32 %v409, %v456
      %v482 = vadd.f32 %v410, %v456
      %v483 = vadd.f32 %v411, %v456
      %v484 = vadd.f32 %v412, %v456
      %v485 = vadd.f32 %v413, %v461
      %v486 = vadd.f32 %v414, %v461
      %v487 = vadd.f32 %v415, %v461
      %v488 = vadd.f32 %v416, %v461
      %v489 = vadd.f32 %v417, %v461
      %v490 = vadd.f32 %v418, %v461
      %v491 = vadd.f32 %v419, %v461
      %v492 = vadd.f32 %v420, %v461
      %v493 = vadd.f32 %v421, %v461
      %v494 = vadd.f32 %v422, %v461
      %v495 = vadd.f32 %v423, %v461
      %v496 = vadd.f32 %v424, %v461
      %v497 = vadd.f32 %v425, %v466
      %v498 = vadd.f32 %v426, %v466
      %v499 = vadd.f32 %v427, %v466
      %v500 = vadd.f32 %v428, %v466
      %v501 = vadd.f32 %v429, %v466
      %v502 = vadd.f32 %v430, %v466
      %v503 = vadd.f32 %v431, %v466
      %v504 = vadd.f32 %v432, %v466
      %v505 = vadd.f32 %v433, %v466
      %v506 = vadd.f32 %v434, %v466
      %v507 = vadd.f32 %v435, %v466
      %v508 = vadd.f32 %v436, %v466
      %v509 = vadd.f32 %v437, %v471
      %v510 = vadd.f32 %v438, %v471
      %v511 = vadd.f32 %v439, %v471
      %v512 = vadd.f32 %v440, %v471
      %v513 = vadd.f32 %v441, %v471
      %v514 = vadd.f32 %v442, %v471
      %v515 = vadd.f32 %v443, %v471
      %v516 = vadd.f32 %v444, %v471
      %v517 = vadd.f32 %v445, %v471
      %v518 = vadd.f32 %v446, %v471
      %v519 = vadd.f32 %v447, %v471
      %v520 = vadd.f32 %v448, %v471
      %v521 = vmul.f32 %v473, 0.15915494
      %v522 = vmul.f32 %v474, 0.15915494
      %v523 = vmul.f32 %v475, 0.15915494
      %v524 = vmul.f32 %v476, 0.15915494
      %v525 = vmul.f32 %v477, 0.15915494
      %v526 = vmul.f32 %v478, 0.15915494
      %v527 = vmul.f32 %v479, 0.15915494
      %v528 = vmul.f32 %v480, 0.15915494
      %v529 = vmul.f32 %v481, 0.15915494
      %v530 = vmul.f32 %v482, 0.15915494
      %v531 = vmul.f32 %v483, 0.15915494
      %v532 = vmul.f32 %v484, 0.15915494
      %v533 = vmul.f32 %v485, 0.15915494
      %v534 = vmul.f32 %v486, 0.15915494
      %v535 = vmul.f32 %v487, 0.15915494
      %v536 = vmul.f32 %v488, 0.15915494
      %v537 = vmul.f32 %v489, 0.15915494
      %v538 = vmul.f32 %v490, 0.15915494
      %v539 = vmul.f32 %v491, 0.15915494
      %v540 = vmul.f32 %v492, 0.15915494
      %v541 = vmul.f32 %v493, 0.15915494
      %v542 = vmul.f32 %v494, 0.15915494
      %v543 = vmul.f32 %v495, 0.15915494
      %v544 = vmul.f32 %v496, 0.15915494
      %v545 = vmul.f32 %v497, 0.15915494
      %v546 = vmul.f32 %v498, 0.15915494
      %v547 = vmul.f32 %v499, 0.15915494
      %v548 = vmul.f32 %v500, 0.15915494
      %v549 = vmul.f32 %v501, 0.15915494
      %v550 = vmul.f32 %v502, 0.15915494
      %v551 = vmul.f32 %v503, 0.15915494
      %v552 = vmul.f32 %v504, 0.15915494
      %v553 = vmul.f32 %v505, 0.15915494
      %v554 = vmul.f32 %v506, 0.15915494
      %v555 = vmul.f32 %v507, 0.15915494
      %v556 = vmul.f32 %v508, 0.15915494
      %v557 = vmul.f32 %v509, 0.15915494
      %v558 = vmul.f32 %v510, 0.15915494
      %v559 = vmul.f32 %v511, 0.15915494
      %v560 = vmul.f32 %v512, 0.15915494
      %v561 = vmul.f32 %v513, 0.15915494
      %v562 = vmul.f32 %v514, 0.15915494
      %v563 = vmul.f32 %v515, 0.15915494
      %v564 = vmul.f32 %v516, 0.15915494
      %v565 = vmul.f32 %v517, 0.15915494
      %v566 = vmul.f32 %v518, 0.15915494
      %v567 = vmul.f32 %v519, 0.15915494
      %v568 = vmul.f32 %v520, 0.15915494
      %v569 = vadd.f32 %v521, 0.5
      %v570 = vadd.f32 %v522, 0.5
      %v571 = vadd.f32 %v523, 0.5
      %v572 = vadd.f32 %v524, 0.5
      %v573 = vadd.f32 %v525, 0.5
      %v574 = vadd.f32 %v526, 0.5
      %v575 = vadd.f32 %v527, 0.5
      %v576 = vadd.f32 %v528, 0.5
      %v577 = vadd.f32 %v529, 0.5
      %v578 = vadd.f32 %v530, 0.5
      %v579 = vadd.f32 %v531, 0.5
      %v580 = vadd.f32 %v532, 0.5
      %v581 = vadd.f32 %v533, 0.5
      %v582 = vadd.f32 %v534, 0.5
      %v583 = vadd.f32 %v535, 0.5
      %v584 = vadd.f32 %v536, 0.5
      %v585 = vadd.f32 %v537, 0.5
      %v586 = vadd.f32 %v538, 0.5
      %v587 = vadd.f32 %v539, 0.5
      %v588 = vadd.f32 %v540, 0.5
      %v589 = vadd.f32 %v541, 0.5
      %v590 = vadd.f32 %v542, 0.5
      %v591 = vadd.f32 %v543, 0.5
      %v592 = vadd.f32 %v544, 0.5
      %v593 = vadd.f32 %v545, 0.5
      %v594 = vadd.f32 %v546, 0.5
      %v595 = vadd.f32 %v547, 0.5
      %v596 = vadd.f32 %v548, 0.5
      %v597 = vadd.f32 %v549, 0.5
      %v598 = vadd.f32 %v550, 0.5
      %v599 = vadd.f32 %v551, 0.5
      %v600 = vadd.f32 %v552, 0.5
      %v601 = vadd.f32 %v553, 0.5
      %v602 = vadd.f32 %v554, 0.5
      %v603 = vadd.f32 %v555, 0.5
      %v604 = vadd.f32 %v556, 0.5
      %v605 = vadd.f32 %v557, 0.5
      %v606 = vadd.f32 %v558, 0.5
      %v607 = vadd.f32 %v559, 0.5
      %v608 = vadd.f32 %v560, 0.5
      %v609 = vadd.f32 %v561, 0.5
      %v610 = vadd.f32 %v562, 0.5
      %v611 = vadd.f32 %v563, 0.5
      %v612 = vadd.f32 %v564, 0.5
      %v613 = vadd.f32 %v565, 0.5
      %v614 = vadd.f32 %v566, 0.5
      %v615 = vadd.f32 %v567, 0.5
      %v616 = vadd.f32 %v568, 0.5
      %v617 = vfloor.f32 %v569
      %v618 = vfloor.f32 %v570
      %v619 = vfloor.f32 %v571
      %v620 = vfloor.f32 %v572
      %v621 = vfloor.f32 %v573
      %v622 = vfloor.f32 %v574
      %v623 = vfloor.f32 %v575
      %v624 = vfloor.f32 %v576
      %v625 = vfloor.f32 %v577
      %v626 = vfloor.f32 %v578
      %v627 = vfloor.f32 %v579
      %v628 = vfloor.f32 %v580
      %v629 = vfloor.f32 %v581
      %v630 = vfloor.f32 %v582
      %v631 = vfloor.f32 %v583
      %v632 = vfloor.f32 %v584
      %v633 = vfloor.f32 %v585
      %v634 = vfloor.f32 %v586
      %v635 = vfloor.f32 %v587
      %v636 = vfloor.f32 %v588
      %v637 = vfloor.f32 %v589
      %v638 = vfloor.f32 %v590
      %v639 = vfloor.f32 %v591
      %v640 = vfloor.f32 %v592
      %v641 = vfloor.f32 %v593
      %v642 = vfloor.f32 %v594
      %v643 = vfloor.f32 %v595
      %v644 = vfloor.f32 %v596
      %v645 = vfloor.f32 %v597
      %v646 = vfloor.f32 %v598
      %v647 = vfloor.f32 %v599
      %v648 = vfloor.f32 %v600
      %v649 = vfloor.f32 %v601
      %v650 = vfloor.f32 %v602
      %v651 = vfloor.f32 %v603
      %v652 = vfloor.f32 %v604
      %v653 = vfloor.f32 %v605
      %v654 = vfloor.f32 %v606
      %v655 = vfloor.f32 %v607
      %v656 = vfloor.f32 %v608
      %v657 = vfloor.f32 %v609
      %v658 = vfloor.f32 %v610
      %v659 = vfloor.f32 %v611
      %v660 = vfloor.f32 %v612
      %v661 = vfloor.f32 %v613
      %v662 = vfloor.f32 %v614
      %v663 = vfloor.f32 %v615
      %v664 = vfloor.f32 %v616
      %v665 = vmul.f32 %v617, 6.2831855
      %v666 = vmul.f32 %v618, 6.2831855
      %v667 = vmul.f32 %v619, 6.2831855
      %v668 = vmul.f32 %v620, 6.2831855
      %v669 = vmul.f32 %v621, 6.2831855
      %v670 = vmul.f32 %v622, 6.2831855
      %v671 = vmul.f32 %v623, 6.2831855
      %v672 = vmul.f32 %v624, 6.2831855
      %v673 = vmul.f32 %v625, 6.2831855
      %v674 = vmul.f32 %v626, 6.2831855
      %v675 = vmul.f32 %v627, 6.2831855
      %v676 = vmul.f32 %v628, 6.2831855
      %v677 = vmul.f32 %v629, 6.2831855
      %v678 = vmul.f32 %v630, 6.2831855
      %v679 = vmul.f32 %v631, 6.2831855
      %v680 = vmul.f32 %v632, 6.2831855
      %v681 = vmul.f32 %v633, 6.2831855
      %v682 = vmul.f32 %v634, 6.2831855
      %v683 = vmul.f32 %v635, 6.2831855
      %v684 = vmul.f32 %v636, 6.2831855
      %v685 = vmul.f32 %v637, 6.2831855
      %v686 = vmul.f32 %v638, 6.2831855
      %v687 = vmul.f32 %v639, 6.2831855
      %v688 = vmul.f32 %v640, 6.2831855
      %v689 = vmul.f32 %v641, 6.2831855
      %v690 = vmul.f32 %v642, 6.2831855
      %v691 = vmul.f32 %v643, 6.2831855
      %v692 = vmul.f32 %v644, 6.2831855
      %v693 = vmul.f32 %v645, 6.2831855
      %v694 = vmul.f32 %v646, 6.2831855
      %v695 = vmul.f32 %v647, 6.2831855
      %v696 = vmul.f32 %v648, 6.2831855
      %v697 = vmul.f32 %v649, 6.2831855
      %v698 = vmul.f32 %v650, 6.2831855
      %v699 = vmul.f32 %v651, 6.2831855
      %v700 = vmul.f32 %v652, 6.2831855
      %v701 = vmul.f32 %v653, 6.2831855
      %v702 = vmul.f32 %v654, 6.2831855
      %v703 = vmul.f32 %v655, 6.2831855
      %v704 = vmul.f32 %v656, 6.2831855
      %v705 = vmul.f32 %v657, 6.2831855
      %v706 = vmul.f32 %v658, 6.2831855
      %v707 = vmul.f32 %v659, 6.2831855
      %v708 = vmul.f32 %v660, 6.2831855
      %v709 = vmul.f32 %v661, 6.2831855
      %v710 = vmul.f32 %v662, 6.2831855
      %v711 = vmul.f32 %v663, 6.2831855
      %v712 = vmul.f32 %v664, 6.2831855
      %v713 = vsub.f32 %v473, %v665
      %v714 = vsub.f32 %v474, %v666
      %v715 = vsub.f32 %v475, %v667
      %v716 = vsub.f32 %v476, %v668
      %v717 = vsub.f32 %v477, %v669
      %v718 = vsub.f32 %v478, %v670
      %v719 = vsub.f32 %v479, %v671
      %v720 = vsub.f32 %v480, %v672
      %v721 = vsub.f32 %v481, %v673
      %v722 = vsub.f32 %v482, %v674
      %v723 = vsub.f32 %v483, %v675
      %v724 = vsub.f32 %v484, %v676
      %v725 = vsub.f32 %v485, %v677
      %v726 = vsub.f32 %v486, %v678
      %v727 = vsub.f32 %v487, %v679
      %v728 = vsub.f32 %v488, %v680
      %v729 = vsub.f32 %v489, %v681
      %v730 = vsub.f32 %v490, %v682
      %v731 = vsub.f32 %v491, %v683
      %v732 = vsub.f32 %v492, %v684
      %v733 = vsub.f32 %v493, %v685
      %v734 = vsub.f32 %v494, %v686
      %v735 = vsub.f32 %v495, %v687
      %v736 = vsub.f32 %v496, %v688
      %v737 = vsub.f32 %v497, %v689
      %v738 = vsub.f32 %v498, %v690
      %v739 = vsub.f32 %v499, %v691
      %v740 = vsub.f32 %v500, %v692
      %v741 = vsub.f32 %v501, %v693
      %v742 = vsub.f32 %v502, %v694
      %v743 = vsub.f32 %v503, %v695
      %v744 = vsub.f32 %v504, %v696
      %v745 = vsub.f32 %v505, %v697
      %v746 = vsub.f32 %v506, %v698
      %v747 = vsub.f32 %v507, %v699
      %v748 = vsub.f32 %v508, %v700
      %v749 = vsub.f32 %v509, %v701
      %v750 = vsub.f32 %v510, %v702
      %v751 = vsub.f32 %v511, %v703
      %v752 = vsub.f32 %v512, %v704
      %v753 = vsub.f32 %v513, %v705
      %v754 = vsub.f32 %v514, %v706
      %v755 = vsub.f32 %v515, %v707
      %v756 = vsub.f32 %v516, %v708
      %v757 = vsub.f32 %v517, %v709
      %v758 = vsub.f32 %v518, %v710
      %v759 = vsub.f32 %v519, %v711
      %v760 = vsub.f32 %v520, %v712
      %v761 = vmul.f32 %v713, %v713
      %v762 = vmul.f32 %v714, %v714
      %v763 = vmul.f32 %v715, %v715
      %v764 = vmul.f32 %v716, %v716
      %v765 = vmul.f32 %v717, %v717
      %v766 = vmul.f32 %v718, %v718
      %v767 = vmul.f32 %v719, %v719
      %v768 = vmul.f32 %v720, %v720
      %v769 = vmul.f32 %v721, %v721
      %v770 = vmul.f32 %v722, %v722
      %v771 = vmul.f32 %v723, %v723
      %v772 = vmul.f32 %v724, %v724
      %v773 = vmul.f32 %v725, %v725
      %v774 = vmul.f32 %v726, %v726
      %v775 = vmul.f32 %v727, %v727
      %v776 = vmul.f32 %v728, %v728
      %v777 = vmul.f32 %v729, %v729
      %v778 = vmul.f32 %v730, %v730
      %v779 = vmul.f32 %v731, %v731
      %v780 = vmul.f32 %v732, %v732
      %v781 = vmul.f32 %v733, %v733
      %v782 = vmul.f32 %v734, %v734
      %v783 = vmul.f32 %v735, %v735
      %v784 = vmul.f32 %v736, %v736
      %v785 = vmul.f32 %v737, %v737
      %v786 = vmul.f32 %v738, %v738
      %v787 = vmul.f32 %v739, %v739
      %v788 = vmul.f32 %v740, %v740
      %v789 = vmul.f32 %v741, %v741
      %v790 = vmul.f32 %v742, %v742
      %v791 = vmul.f32 %v743, %v743
      %v792 = vmul.f32 %v744, %v744
      %v793 = vmul.f32 %v745, %v745
      %v794 = vmul.f32 %v746, %v746
      %v795 = vmul.f32 %v747, %v747
      %v796 = vmul.f32 %v748, %v748
      %v797 = vmul.f32 %v749, %v749
      %v798 = vmul.f32 %v750, %v750
      %v799 = vmul.f32 %v751, %v751
      %v800 = vmul.f32 %v752, %v752
      %v801 = vmul.f32 %v753, %v753
      %v802 = vmul.f32 %v754, %v754
      %v803 = vmul.f32 %v755, %v755
      %v804 = vmul.f32 %v756, %v756
      %v805 = vmul.f32 %v757, %v757
      %v806 = vmul.f32 %v758, %v758
      %v807 = vmul.f32 %v759, %v759
      %v808 = vmul.f32 %v760, %v760
      %v809 = vmul.f32 %v761, 1.6059044e-10
      %v810 = vmul.f32 %v762, 1.6059044e-10
      %v811 = vmul.f32 %v763, 1.6059044e-10
      %v812 = vmul.f32 %v764, 1.6059044e-10
      %v813 = vmul.f32 %v765, 1.6059044e-10
      %v814 = vmul.f32 %v766, 1.6059044e-10
      %v815 = vmul.f32 %v767, 1.6059044e-10
      %v816 = vmul.f32 %v768, 1.6059044e-10
      %v817 = vmul.f32 %v769, 1.6059044e-10
      %v818 = vmul.f32 %v770, 1.6059044e-10
      %v819 = vmul.f32 %v771, 1.6059044e-10
      %v820 = vmul.f32 %v772, 1.6059044e-10
      %v821 = vmul.f32 %v773, 1.6059044e-10
      %v822 = vmul.f32 %v774, 1.6059044e-10
      %v823 = vmul.f32 %v775, 1.6059044e-10
      %v824 = vmul.f32 %v776, 1.6059044e-10
      %v825 = vmul.f32 %v777, 1.6059044e-10
      %v826 = vmul.f32 %v778, 1.6059044e-10
      %v827 = vmul.f32 %v779, 1.6059044e-10
      %v828 = vmul.f32 %v780, 1.6059044e-10
      %v829 = vmul.f32 %v781, 1.6059044e-10
      %v830 = vmul.f32 %v782, 1.6059044e-10
      %v831 = vmul.f32 %v783, 1.6059044e-10
      %v832 = vmul.f32 %v784, 1.6059044e-10
      %v833 = vmul.f32 %v785, 1.6059044e-10
      %v834 = vmul.f32 %v786, 1.6059044e-10
      %v835 = vmul.f32 %v787, 1.6059044e-10
      %v836 = vmul.f32 %v788, 1.6059044e-10
      %v837 = vmul.f32 %v789, 1.6059044e-10
      %v838 = vmul.f32 %v790, 1.6059044e-10
      %v839 = vmul.f32 %v791, 1.6059044e-10
      %v840 = vmul.f32 %v792, 1.6059044e-10
      %v841 = vmul.f32 %v793, 1.6059044e-10
      %v842 = vmul.f32 %v794, 1.6059044e-10
      %v843 = vmul.f32 %v795, 1.6059044e-10
      %v844 = vmul.f32 %v796, 1.6059044e-10
      %v845 = vmul.f32 %v797, 1.6059044e-10
      %v846 = vmul.f32 %v798, 1.6059044e-10
      %v847 = vmul.f32 %v799, 1.6059044e-10
      %v848 = vmul.f32 %v800, 1.6059044e-10
      %v849 = vmul.f32 %v801, 1.6059044e-10
      %v850 = vmul.f32 %v802, 1.6059044e-10
      %v851 = vmul.f32 %v803, 1.6059044e-10
      %v852 = vmul.f32 %v804, 1.6059044e-10
      %v853 = vmul.f32 %v805, 1.6059044e-10
      %v854 = vmul.f32 %v806, 1.6059044e-10
      %v855 = vmul.f32 %v807, 1.6059044e-10
      %v856 = vmul.f32 %v808, 1.6059044e-10
      %v857 = vadd.f32 %v809, -2.5052108e-08
      %v858 = vadd.f32 %v810, -2.5052108e-08
      %v859 = vadd.f32 %v811, -2.5052108e-08
      %v860 = vadd.f32 %v812, -2.5052108e-08
      %v861 = vadd.f32 %v813, -2.5052108e-08
      %v862 = vadd.f32 %v814, -2.5052108e-08
      %v863 = vadd.f32 %v815, -2.5052108e-08
      %v864 = vadd.f32 %v816, -2.5052108e-08
      %v865 = vadd.f32 %v817, -2.5052108e-08
      %v866 = vadd.f32 %v818, -2.5052108e-08
      %v867 = vadd.f32 %v819, -2.5052108e-08
      %v868 = vadd.f32 %v820, -2.5052108e-08
      %v869 = vadd.f32 %v821, -2.5052108e-08
      %v870 = vadd.f32 %v822, -2.5052108e-08
      %v871 = vadd.f32 %v823, -2.5052108e-08
      %v872 = vadd.f32 %v824, -2.5052108e-08
      %v873 = vadd.f32 %v825, -2.5052108e-08
      %v874 = vadd.f32 %v826, -2.5052108e-08
      %v875 = vadd.f32 %v827, -2.5052108e-08
      %v876 = vadd.f32 %v828, -2.5052108e-08
      %v877 = vadd.f32 %v829, -2.5052108e-08
      %v878 = vadd.f32 %v830, -2.5052108e-08
      %v879 = vadd.f32 %v831, -2.5052108e-08
      %v880 = vadd.f32 %v832, -2.5052108e-08
      %v881 = vadd.f32 %v833, -2.5052108e-08
      %v882 = vadd.f32 %v834, -2.5052108e-08
      %v883 = vadd.f32 %v835, -2.5052108e-08
      %v884 = vadd.f32 %v836, -2.5052108e-08
      %v885 = vadd.f32 %v837, -2.5052108e-08
      %v886 = vadd.f32 %v838, -2.5052108e-08
      %v887 = vadd.f32 %v839, -2.5052108e-08
      %v888 = vadd.f32 %v840, -2.5052108e-08
      %v889 = vadd.f32 %v841, -2.5052108e-08
      %v890 = vadd.f32 %v842, -2.5052108e-08
      %v891 = vadd.f32 %v843, -2.5052108e-08
      %v892 = vadd.f32 %v844, -2.5052108e-08
      %v893 = vadd.f32 %v845, -2.5052108e-08
      %v894 = vadd.f32 %v846, -2.5052108e-08
      %v895 = vadd.f32 %v847, -2.5052108e-08
      %v896 = vadd.f32 %v848, -2.5052108e-08
      %v897 = vadd.f32 %v849, -2.5052108e-08
      %v898 = vadd.f32 %v850, -2.5052108e-08
      %v899 = vadd.f32 %v851, -2.5052108e-08
      %v900 = vadd.f32 %v852, -2.5052108e-08
      %v901 = vadd.f32 %v853, -2.5052108e-08
      %v902 = vadd.f32 %v854, -2.5052108e-08
      %v903 = vadd.f32 %v855, -2.5052108e-08
      %v904 = vadd.f32 %v856, -2.5052108e-08
      %v905 = vmul.f32 %v857, %v761
      %v906 = vmul.f32 %v858, %v762
      %v907 = vmul.f32 %v859, %v763
      %v908 = vmul.f32 %v860, %v764
      %v909 = vmul.f32 %v861, %v765
      %v910 = vmul.f32 %v862, %v766
      %v911 = vmul.f32 %v863, %v767
      %v912 = vmul.f32 %v864, %v768
      %v913 = vmul.f32 %v865, %v769
      %v914 = vmul.f32 %v866, %v770
      %v915 = vmul.f32 %v867, %v771
      %v916 = vmul.f32 %v868, %v772
      %v917 = vmul.f32 %v869, %v773
      %v918 = vmul.f32 %v870, %v774
      %v919 = vmul.f32 %v871, %v775
      %v920 = vmul.f32 %v872, %v776
      %v921 = vmul.f32 %v873, %v777
      %v922 = vmul.f32 %v874, %v778
      %v923 = vmul.f32 %v875, %v779
      %v924 = vmul.f32 %v876, %v780
      %v925 = vmul.f32 %v877, %v781
      %v926 = vmul.f32 %v878, %v782
      %v927 = vmul.f32 %v879, %v783
      %v928 = vmul.f32 %v880, %v784
      %v929 = vmul.f32 %v881, %v785
      %v930 = vmul.f32 %v882, %v786
      %v931 = vmul.f32 %v883, %v787
      %v932 = vmul.f32 %v884, %v788
      %v933 = vmul.f32 %v885, %v789
      %v934 = vmul.f32 %v886, %v790
      %v935 = vmul.f32 %v887, %v791
      %v936 = vmul.f32 %v888, %v792
      %v937 = vmul.f32 %v889, %v793
      %v938 = vmul.f32 %v890, %v794
      %v939 = vmul.f32 %v891, %v795
      %v940 = vmul.f32 %v892, %v796
      %v941 = vmul.f32 %v893, %v797
      %v942 = vmul.f32 %v894, %v798
      %v943 = vmul.f32 %v895, %v799
      %v944 = vmul.f32 %v896, %v800
      %v945 = vmul.f32 %v897, %v801
      %v946 = vmul.f32 %v898, %v802
      %v947 = vmul.f32 %v899, %v803
      %v948 = vmul.f32 %v900, %v804
      %v949 = vmul.f32 %v901, %v805
      %v950 = vmul.f32 %v902, %v806
      %v951 = vmul.f32 %v903, %v807
      %v952 = vmul.f32 %v904, %v808
      %v953 = vadd.f32 %v905, 2.7557319e-06
      %v954 = vadd.f32 %v906, 2.7557319e-06
      %v955 = vadd.f32 %v907, 2.7557319e-06
      %v956 = vadd.f32 %v908, 2.7557319e-06
      %v957 = vadd.f32 %v909, 2.7557319e-06
      %v958 = vadd.f32 %v910, 2.7557319e-06
      %v959 = vadd.f32 %v911, 2.7557319e-06
      %v960 = vadd.f32 %v912, 2.7557319e-06
      %v961 = vadd.f32 %v913, 2.7557319e-06
      %v962 = vadd.f32 %v914, 2.7557319e-06
      %v963 = vadd.f32 %v915, 2.7557319e-06
      %v964 = vadd.f32 %v916, 2.7557319e-06
      %v965 = vadd.f32 %v917, 2.7557319e-06
      %v966 = vadd.f32 %v918, 2.7557319e-06
      %v967 = vadd.f32 %v919, 2.7557319e-06
      %v968 = vadd.f32 %v920, 2.7557319e-06
      %v969 = vadd.f32 %v921, 2.7557319e-06
      %v970 = vadd.f32 %v922, 2.7557319e-06
      %v971 = vadd.f32 %v923, 2.7557319e-06
      %v972 = vadd.f32 %v924, 2.7557319e-06
      %v973 = vadd.f32 %v925, 2.7557319e-06
      %v974 = vadd.f32 %v926, 2.7557319e-06
      %v975 = vadd.f32 %v927, 2.7557319e-06
      %v976 = vadd.f32 %v928, 2.7557319e-06
      %v977 = vadd.f32 %v929, 2.7557319e-06
      %v978 = vadd.f32 %v930, 2.7557319e-06
      %v979 = vadd.f32 %v931, 2.7557319e-06
      %v980 = vadd.f32 %v932, 2.7557319e-06
      %v981 = vadd.f32 %v933, 2.7557319e-06
      %v982 = vadd.f32 %v934, 2.7557319e-06
      %v983 = vadd.f32 %v935, 2.7557319e-06
      %v984 = vadd.f32 %v936, 2.7557319e-06
      %v985 = vadd.f32 %v937, 2.7557319e-06
      %v986 = vadd.f32 %v938, 2.7557319e-06
      %v987 = vadd.f32 %v939, 2.7557319e-06
      %v988 = vadd.f32 %v940, 2.7557319e-06
      %v989 = vadd.f32 %v941, 2.7557319e-06
      %v990 = vadd.f32 %v942, 2.7557319e-06
      %v991 = vadd.f32 %v943, 2.7557319e-06
      %v992 = vadd.f32 %v944, 2.7557319e-06
      %v993 = vadd.f32 %v945, 2.7557319e-06
      %v994 = vadd.f32 %v946, 2.7557319e-06
      %v995 = vadd.f32 %v947, 2.7557319e-06
      %v996 = vadd.f32 %v948, 2.7557319e-06
      %v997 = vadd.f32 %v949, 2.7557319e-06
      %v998 = vadd.f32 %v950, 2.7557319e-06
      %v999 = vadd.f32 %v951, 2.7557319e-06
      %v1000 = vadd.f32 %v952, 2.7557319e-06
      %v1001 = vmul.f32 %v953, %v761
      %v1002 = vmul.f32 %v954, %v762
      %v1003 = vmul.f32 %v955, %v763
      %v1004 = vmul.f32 %v956, %v764
      %v1005 = vmul.f32 %v957, %v765
      %v1006 = vmul.f32 %v958, %v766
      %v1007 = vmul.f32 %v959, %v767
      %v1008 = vmul.f32 %v960, %v768
      %v1009 = vmul.f32 %v961, %v769
      %v1010 = vmul.f32 %v962, %v770
      %v1011 = vmul.f32 %v963, %v771
      %v1012 = vmul.f32 %v964, %v772
      %v1013 = vmul.f32 %v965, %v773
      %v1014 = vmul.f32 %v966, %v774
      %v1015 = vmul.f32 %v967, %v775
      %v1016 = vmul.f32 %v968, %v776
      %v1017 = vmul.f32 %v969, %v777
      %v1018 = vmul.f32 %v970, %v778
      %v1019 = vmul.f32 %v971, %v779
      %v1020 = vmul.f32 %v972, %v780
      %v1021 = vmul.f32 %v973, %v781
      %v1022 = vmul.f32 %v974, %v782
      %v1023 = vmul.f32 %v975, %v783
      %v1024 = vmul.f32 %v976, %v784
      %v1025 = vmul.f32 %v977, %v785
      %v1026 = vmul.f32 %v978, %v786
      %v1027 = vmul.f32 %v979, %v787
      %v1028 = vmul.f32 %v980, %v788
      %v1029 = vmul.f32 %v981, %v789
      %v1030 = vmul.f32 %v982, %v790
      %v1031 = vmul.f32 %v983, %v791
      %v1032 = vmul.f32 %v984, %v792
      %v1033 = vmul.f32 %v985, %v793
      %v1034 = vmul.f32 %v986, %v794
      %v1035 = vmul.f32 %v987, %v795
      %v1036 = vmul.f32 %v988, %v796
      %v1037 = vmul.f32 %v989, %v797
      %v1038 = vmul.f32 %v990, %v798
      %v1039 = vmul.f32 %v991, %v799
      %v1040 = vmul.f32 %v992, %v800
      %v1041 = vmul.f32 %v993, %v801
      %v1042 = vmul.f32 %v994, %v802
      %v1043 = vmul.f32 %v995, %v803
      %v1044 = vmul.f32 %v996, %v804
      %v1045 = vmul.f32 %v997, %v805
      %v1046 = vmul.f32 %v998, %v806
      %v1047 = vmul.f32 %v999, %v807
      %v1048 = vmul.f32 %v1000, %v808
      %v1049 = vadd.f32 %v1001, -0.0001984127
      %v1050 = vadd.f32 %v1002, -0.0001984127
      %v1051 = vadd.f32 %v1003, -0.0001984127
      %v1052 = vadd.f32 %v1004, -0.0001984127
      %v1053 = vadd.f32 %v1005, -0.0001984127
      %v1054 = vadd.f32 %v1006, -0.0001984127
      %v1055 = vadd.f32 %v1007, -0.0001984127
      %v1056 = vadd.f32 %v1008, -0.0001984127
      %v1057 = vadd.f32 %v1009, -0.0001984127
      %v1058 = vadd.f32 %v1010, -0.0001984127
      %v1059 = vadd.f32 %v1011, -0.0001984127
      %v1060 = vadd.f32 %v1012, -0.0001984127
      %v1061 = vadd.f32 %v1013, -0.0001984127
      %v1062 = vadd.f32 %v1014, -0.0001984127
      %v1063 = vadd.f32 %v1015, -0.0001984127
      %v1064 = vadd.f32 %v1016, -0.0001984127
      %v1065 = vadd.f32 %v1017, -0.0001984127
      %v1066 = vadd.f32 %v1018, -0.0001984127
      %v1067 = vadd.f32 %v1019, -0.0001984127
      %v1068 = vadd.f32 %v1020, -0.0001984127
      %v1069 = vadd.f32 %v1021, -0.0001984127
      %v1070 = vadd.f32 %v1022, -0.0001984127
      %v1071 = vadd.f32 %v1023, -0.0001984127
      %v1072 = vadd.f32 %v1024, -0.0001984127
      %v1073 = vadd.f32 %v1025, -0.0001984127
      %v1074 = vadd.f32 %v1026, -0.0001984127
      %v1075 = vadd.f32 %v1027, -0.0001984127
      %v1076 = vadd.f32 %v1028, -0.0001984127
      %v1077 = vadd.f32 %v1029, -0.0001984127
      %v1078 = vadd.f32 %v1030, -0.0001984127
      %v1079 = vadd.f32 %v1031, -0.0001984127
      %v1080 = vadd.f32 %v1032, -0.0001984127
      %v1081 = vadd.f32 %v1033, -0.0001984127
      %v1082 = vadd.f32 %v1034, -0.0001984127
      %v1083 = vadd.f32 %v1035, -0.0001984127
      %v1084 = vadd.f32 %v1036, -0.0001984127
      %v1085 = vadd.f32 %v1037, -0.0001984127
      %v1086 = vadd.f32 %v1038, -0.0001984127
      %v1087 = vadd.f32 %v1039, -0.0001984127
      %v1088 = vadd.f32 %v1040, -0.0001984127
      %v1089 = vadd.f32 %v1041, -0.0001984127
      %v1090 = vadd.f32 %v1042, -0.0001984127
      %v1091 = vadd.f32 %v1043, -0.0001984127
      %v1092 = vadd.f32 %v1044, -0.0001984127
      %v1093 = vadd.f32 %v1045, -0.0001984127
      %v1094 = vadd.f32 %v1046, -0.0001984127
      %v1095 = vadd.f32 %v1047, -0.0001984127
      %v1096 = vadd.f32 %v1048, -0.0001984127
      %v1097 = vmul.f32 %v1049, %v761
      %v1098 = vmul.f32 %v1050, %v762
      %v1099 = vmul.f32 %v1051, %v763
      %v1100 = vmul.f32 %v1052, %v764
      %v1101 = vmul.f32 %v1053, %v765
      %v1102 = vmul.f32 %v1054, %v766
      %v1103 = vmul.f32 %v1055, %v767
      %v1104 = vmul.f32 %v1056, %v768
      %v1105 = vmul.f32 %v1057, %v769
      %v1106 = vmul.f32 %v1058, %v770
      %v1107 = vmul.f32 %v1059, %v771
      %v1108 = vmul.f32 %v1060, %v772
      %v1109 = vmul.f32 %v1061, %v773
      %v1110 = vmul.f32 %v1062, %v774
      %v1111 = vmul.f32 %v1063, %v775
      %v1112 = vmul.f32 %v1064, %v776
      %v1113 = vmul.f32 %v1065, %v777
      %v1114 = vmul.f32 %v1066, %v778
      %v1115 = vmul.f32 %v1067, %v779
      %v1116 = vmul.f32 %v1068, %v780
      %v1117 = vmul.f32 %v1069, %v781
      %v1118 = vmul.f32 %v1070, %v782
      %v1119 = vmul.f32 %v1071, %v783
      %v1120 = vmul.f32 %v1072, %v784
      %v1121 = vmul.f32 %v1073, %v785
      %v1122 = vmul.f32 %v1074, %v786
      %v1123 = vmul.f32 %v1075, %v787
      %v1124 = vmul.f32 %v1076, %v788
      %v1125 = vmul.f32 %v1077, %v789
      %v1126 = vmul.f32 %v1078, %v790
      %v1127 = vmul.f32 %v1079, %v791
      %v1128 = vmul.f32 %v1080, %v792
      %v1129 = vmul.f32 %v1081, %v793
      %v1130 = vmul.f32 %v1082, %v794
      %v1131 = vmul.f32 %v1083, %v795
      %v1132 = vmul.f32 %v1084, %v796
      %v1133 = vmul.f32 %v1085, %v797
      %v1134 = vmul.f32 %v1086, %v798
      %v1135 = vmul.f32 %v1087, %v799
      %v1136 = vmul.f32 %v1088, %v800
      %v1137 = vmul.f32 %v1089, %v801
      %v1138 = vmul.f32 %v1090, %v802
      %v1139 = vmul.f32 %v1091, %v803
      %v1140 = vmul.f32 %v1092, %v804
      %v1141 = vmul.f32 %v1093, %v805
      %v1142 = vmul.f32 %v1094, %v806
      %v1143 = vmul.f32 %v1095, %v807
      %v1144 = vmul.f32 %v1096, %v808
      %v1145 = vadd.f32 %v1097, 0.008333334
      %v1146 = vadd.f32 %v1098, 0.008333334
      %v1147 = vadd.f32 %v1099, 0.008333334
      %v1148 = vadd.f32 %v1100, 0.008333334
      %v1149 = vadd.f32 %v1101, 0.008333334
      %v1150 = vadd.f32 %v1102, 0.008333334
      %v1151 = vadd.f32 %v1103, 0.008333334
      %v1152 = vadd.f32 %v1104, 0.008333334
      %v1153 = vadd.f32 %v1105, 0.008333334
      %v1154 = vadd.f32 %v1106, 0.008333334
      %v1155 = vadd.f32 %v1107, 0.008333334
      %v1156 = vadd.f32 %v1108, 0.008333334
      %v1157 = vadd.f32 %v1109, 0.008333334
      %v1158 = vadd.f32 %v1110, 0.008333334
      %v1159 = vadd.f32 %v1111, 0.008333334
      %v1160 = vadd.f32 %v1112, 0.008333334
      %v1161 = vadd.f32 %v1113, 0.008333334
      %v1162 = vadd.f32 %v1114, 0.008333334
      %v1163 = vadd.f32 %v1115, 0.008333334
      %v1164 = vadd.f32 %v1116, 0.008333334
      %v1165 = vadd.f32 %v1117, 0.008333334
      %v1166 = vadd.f32 %v1118, 0.008333334
      %v1167 = vadd.f32 %v1119, 0.008333334
      %v1168 = vadd.f32 %v1120, 0.008333334
      %v1169 = vadd.f32 %v1121, 0.008333334
      %v1170 = vadd.f32 %v1122, 0.008333334
      %v1171 = vadd.f32 %v1123, 0.008333334
      %v1172 = vadd.f32 %v1124, 0.008333334
      %v1173 = vadd.f32 %v1125, 0.008333334
      %v1174 = vadd.f32 %v1126, 0.008333334
      %v1175 = vadd.f32 %v1127, 0.008333334
      %v1176 = vadd.f32 %v1128, 0.008333334
      %v1177 = vadd.f32 %v1129, 0.008333334
      %v1178 = vadd.f32 %v1130, 0.008333334
      %v1179 = vadd.f32 %v1131, 0.008333334
      %v1180 = vadd.f32 %v1132, 0.008333334
      %v1181 = vadd.f32 %v1133, 0.008333334
      %v1182 = vadd.f32 %v1134, 0.008333334
      %v1183 = vadd.f32 %v1135, 0.008333334
      %v1184 = vadd.f32 %v1136, 0.008333334
      %v1185 = vadd.f32 %v1137, 0.008333334
      %v1186 = vadd.f32 %v1138, 0.008333334
      %v1187 = vadd.f32 %v1139, 0.008333334
      %v1188 = vadd.f32 %v1140, 0.008333334
      %v1189 = vadd.f32 %v1141, 0.008333334
      %v1190 = vadd.f32 %v1142, 0.008333334
      %v1191 = vadd.f32 %v1143, 0.008333334
      %v1192 = vadd.f32 %v1144, 0.008333334
      %v1193 = vmul.f32 %v1145, %v761
      %v1194 = vmul.f32 %v1146, %v762
      %v1195 = vmul.f32 %v1147, %v763
      %v1196 = vmul.f32 %v1148, %v764
      %v1197 = vmul.f32 %v1149, %v765
      %v1198 = vmul.f32 %v1150, %v766
      %v1199 = vmul.f32 %v1151, %v767
      %v1200 = vmul.f32 %v1152, %v768
      %v1201 = vmul.f32 %v1153, %v769
      %v1202 = vmul.f32 %v1154, %v770
      %v1203 = vmul.f32 %v1155, %v771
      %v1204 = vmul.f32 %v1156, %v772
      %v1205 = vmul.f32 %v1157, %v773
      %v1206 = vmul.f32 %v1158, %v774
      %v1207 = vmul.f32 %v1159, %v775
      %v1208 = vmul.f32 %v1160, %v776
      %v1209 = vmul.f32 %v1161, %v777
      %v1210 = vmul.f32 %v1162, %v778
      %v1211 = vmul.f32 %v1163, %v779
      %v1212 = vmul.f32 %v1164, %v780
      %v1213 = vmul.f32 %v1165, %v781
      %v1214 = vmul.f32 %v1166, %v782
      %v1215 = vmul.f32 %v1167, %v783
      %v1216 = vmul.f32 %v1168, %v784
      %v1217 = vmul.f32 %v1169, %v785
      %v1218 = vmul.f32 %v1170, %v786
      %v1219 = vmul.f32 %v1171, %v787
      %v1220 = vmul.f32 %v1172, %v788
      %v1221 = vmul.f32 %v1173, %v789
      %v1222 = vmul.f32 %v1174, %v790
      %v1223 = vmul.f32 %v1175, %v791
      %v1224 = vmul.f32 %v1176, %v792
      %v1225 = vmul.f32 %v1177, %v793
      %v1226 = vmul.f32 %v1178, %v794
      %v1227 = vmul.f32 %v1179, %v795
      %v1228 = vmul.f32 %v1180, %v796
      %v1229 = vmul.f32 %v1181, %v797
      %v1230 = vmul.f32 %v1182, %v798
      %v1231 = vmul.f32 %v1183, %v799
      %v1232 = vmul.f32 %v1184, %v800
      %v1233 = vmul.f32 %v1185, %v801
      %v1234 = vmul.f32 %v1186, %v802
      %v1235 = vmul.f32 %v1187, %v803
      %v1236 = vmul.f32 %v1188, %v804
      %v1237 = vmul.f32 %v1189, %v805
      %v1238 = vmul.f32 %v1190, %v806
      %v1239 = vmul.f32 %v1191, %v807
      %v1240 = vmul.f32 %v1192, %v808
      %v1241 = vadd.f32 %v1193, -0.16666667
      %v1242 = vadd.f32 %v1194, -0.16666667
      %v1243 = vadd.f32 %v1195, -0.16666667
      %v1244 = vadd.f32 %v1196, -0.16666667
      %v1245 = vadd.f32 %v1197, -0.16666667
      %v1246 = vadd.f32 %v1198, -0.16666667
      %v1247 = vadd.f32 %v1199, -0.16666667
      %v1248 = vadd.f32 %v1200, -0.16666667
      %v1249 = vadd.f32 %v1201, -0.16666667
      %v1250 = vadd.f32 %v1202, -0.16666667
      %v1251 = vadd.f32 %v1203, -0.16666667
      %v1252 = vadd.f32 %v1204, -0.16666667
      %v1253 = vadd.f32 %v1205, -0.16666667
      %v1254 = vadd.f32 %v1206, -0.16666667
      %v1255 = vadd.f32 %v1207, -0.16666667
      %v1256 = vadd.f32 %v1208, -0.16666667
      %v1257 = vadd.f32 %v1209, -0.16666667
      %v1258 = vadd.f32 %v1210, -0.16666667
      %v1259 = vadd.f32 %v1211, -0.16666667
      %v1260 = vadd.f32 %v1212, -0.16666667
      %v1261 = vadd.f32 %v1213, -0.16666667
      %v1262 = vadd.f32 %v1214, -0.16666667
      %v1263 = vadd.f32 %v1215, -0.16666667
      %v1264 = vadd.f32 %v1216, -0.16666667
      %v1265 = vadd.f32 %v1217, -0.16666667
      %v1266 = vadd.f32 %v1218, -0.16666667
      %v1267 = vadd.f32 %v1219, -0.16666667
      %v1268 = vadd.f32 %v1220, -0.16666667
      %v1269 = vadd.f32 %v1221, -0.16666667
      %v1270 = vadd.f32 %v1222, -0.16666667
      %v1271 = vadd.f32 %v1223, -0.16666667
      %v1272 = vadd.f32 %v1224, -0.16666667
      %v1273 = vadd.f32 %v1225, -0.16666667
      %v1274 = vadd.f32 %v1226, -0.16666667
      %v1275 = vadd.f32 %v1227, -0.16666667
      %v1276 = vadd.f32 %v1228, -0.16666667
      %v1277 = vadd.f32 %v1229, -0.16666667
      %v1278 = vadd.f32 %v1230, -0.16666667
      %v1279 = vadd.f32 %v1231, -0.16666667
      %v1280 = vadd.f32 %v1232, -0.16666667
      %v1281 = vadd.f32 %v1233, -0.16666667
      %v1282 = vadd.f32 %v1234, -0.16666667
      %v1283 = vadd.f32 %v1235, -0.16666667
      %v1284 = vadd.f32 %v1236, -0.16666667
      %v1285 = vadd.f32 %v1237, -0.16666667
      %v1286 = vadd.f32 %v1238, -0.16666667
      %v1287 = vadd.f32 %v1239, -0.16666667
      %v1288 = vadd.f32 %v1240, -0.16666667
      %v1289 = vmul.f32 %v1241, %v761
      %v1290 = vmul.f32 %v1242, %v762
      %v1291 = vmul.f32 %v1243, %v763
      %v1292 = vmul.f32 %v1244, %v764
      %v1293 = vmul.f32 %v1245, %v765
      %v1294 = vmul.f32 %v1246, %v766
      %v1295 = vmul.f32 %v1247, %v767
      %v1296 = vmul.f32 %v1248, %v768
      %v1297 = vmul.f32 %v1249, %v769
      %v1298 = vmul.f32 %v1250, %v770
      %v1299 = vmul.f32 %v1251, %v771
      %v1300 = vmul.f32 %v1252, %v772
      %v1301 = vmul.f32 %v1253, %v773
      %v1302 = vmul.f32 %v1254, %v774
      %v1303 = vmul.f32 %v1255, %v775
      %v1304 = vmul.f32 %v1256, %v776
      %v1305 = vmul.f32 %v1257, %v777
      %v1306 = vmul.f32 %v1258, %v778
      %v1307 = vmul.f32 %v1259, %v779
      %v1308 = vmul.f32 %v1260, %v780
      %v1309 = vmul.f32 %v1261, %v781
      %v1310 = vmul.f32 %v1262, %v782
      %v1311 = vmul.f32 %v1263, %v783
      %v1312 = vmul.f32 %v1264, %v784
      %v1313 = vmul.f32 %v1265, %v785
      %v1314 = vmul.f32 %v1266, %v786
      %v1315 = vmul.f32 %v1267, %v787
      %v1316 = vmul.f32 %v1268, %v788
      %v1317 = vmul.f32 %v1269, %v789
      %v1318 = vmul.f32 %v1270, %v790
      %v1319 = vmul.f32 %v1271, %v791
      %v1320 = vmul.f32 %v1272, %v792
      %v1321 = vmul.f32 %v1273, %v793
      %v1322 = vmul.f32 %v1274, %v794
      %v1323 = vmul.f32 %v1275, %v795
      %v1324 = vmul.f32 %v1276, %v796
      %v1325 = vmul.f32 %v1277, %v797
      %v1326 = vmul.f32 %v1278, %v798
      %v1327 = vmul.f32 %v1279, %v799
      %v1328 = vmul.f32 %v1280, %v800
      %v1329 = vmul.f32 %v1281, %v801
      %v1330 = vmul.f32 %v1282, %v802
      %v1331 = vmul.f32 %v1283, %v803
      %v1332 = vmul.f32 %v1284, %v804
      %v1333 = vmul.f32 %v1285, %v805
      %v1334 = vmul.f32 %v1286, %v806
      %v1335 = vmul.f32 %v1287, %v807
      %v1336 = vmul.f32 %v1288, %v808
      %v1337 = vadd.f32 %v1289, 1.0
      %v1338 = vadd.f32 %v1290, 1.0
      %v1339 = vadd.f32 %v1291, 1.0
      %v1340 = vadd.f32 %v1292, 1.0
      %v1341 = vadd.f32 %v1293, 1.0
      %v1342 = vadd.f32 %v1294, 1.0
      %v1343 = vadd.f32 %v1295, 1.0
      %v1344 = vadd.f32 %v1296, 1.0
      %v1345 = vadd.f32 %v1297, 1.0
      %v1346 = vadd.f32 %v1298, 1.0
      %v1347 = vadd.f32 %v1299, 1.0
      %v1348 = vadd.f32 %v1300, 1.0
      %v1349 = vadd.f32 %v1301, 1.0
      %v1350 = vadd.f32 %v1302, 1.0
      %v1351 = vadd.f32 %v1303, 1.0
      %v1352 = vadd.f32 %v1304, 1.0
      %v1353 = vadd.f32 %v1305, 1.0
      %v1354 = vadd.f32 %v1306, 1.0
      %v1355 = vadd.f32 %v1307, 1.0
      %v1356 = vadd.f32 %v1308, 1.0
      %v1357 = vadd.f32 %v1309, 1.0
      %v1358 = vadd.f32 %v1310, 1.0
      %v1359 = vadd.f32 %v1311, 1.0
      %v1360 = vadd.f32 %v1312, 1.0
      %v1361 = vadd.f32 %v1313, 1.0
      %v1362 = vadd.f32 %v1314, 1.0
      %v1363 = vadd.f32 %v1315, 1.0
      %v1364 = vadd.f32 %v1316, 1.0
      %v1365 = vadd.f32 %v1317, 1.0
      %v1366 = vadd.f32 %v1318, 1.0
      %v1367 = vadd.f32 %v1319, 1.0
      %v1368 = vadd.f32 %v1320, 1.0
      %v1369 = vadd.f32 %v1321, 1.0
      %v1370 = vadd.f32 %v1322, 1.0
      %v1371 = vadd.f32 %v1323, 1.0
      %v1372 = vadd.f32 %v1324, 1.0
      %v1373 = vadd.f32 %v1325, 1.0
      %v1374 = vadd.f32 %v1326, 1.0
      %v1375 = vadd.f32 %v1327, 1.0
      %v1376 = vadd.f32 %v1328, 1.0
      %v1377 = vadd.f32 %v1329, 1.0
      %v1378 = vadd.f32 %v1330, 1.0
      %v1379 = vadd.f32 %v1331, 1.0
      %v1380 = vadd.f32 %v1332, 1.0
      %v1381 = vadd.f32 %v1333, 1.0
      %v1382 = vadd.f32 %v1334, 1.0
      %v1383 = vadd.f32 %v1335, 1.0
      %v1384 = vadd.f32 %v1336, 1.0
      %v1385 = vmul.f32 %v713, %v1337
      %v1386 = vmul.f32 %v714, %v1338
      %v1387 = vmul.f32 %v715, %v1339
      %v1388 = vmul.f32 %v716, %v1340
      %v1389 = vmul.f32 %v717, %v1341
      %v1390 = vmul.f32 %v718, %v1342
      %v1391 = vmul.f32 %v719, %v1343
      %v1392 = vmul.f32 %v720, %v1344
      %v1393 = vmul.f32 %v721, %v1345
      %v1394 = vmul.f32 %v722, %v1346
      %v1395 = vmul.f32 %v723, %v1347
      %v1396 = vmul.f32 %v724, %v1348
      %v1397 = vmul.f32 %v725, %v1349
      %v1398 = vmul.f32 %v726, %v1350
      %v1399 = vmul.f32 %v727, %v1351
      %v1400 = vmul.f32 %v728, %v1352
      %v1401 = vmul.f32 %v729, %v1353
      %v1402 = vmul.f32 %v730, %v1354
      %v1403 = vmul.f32 %v731, %v1355
      %v1404 = vmul.f32 %v732, %v1356
      %v1405 = vmul.f32 %v733, %v1357
      %v1406 = vmul.f32 %v734, %v1358
      %v1407 = vmul.f32 %v735, %v1359
      %v1408 = vmul.f32 %v736, %v1360
      %v1409 = vmul.f32 %v737, %v1361
      %v1410 = vmul.f32 %v738, %v1362
      %v1411 = vmul.f32 %v739, %v1363
      %v1412 = vmul.f32 %v740, %v1364
      %v1413 = vmul.f32 %v741, %v1365
      %v1414 = vmul.f32 %v742, %v1366
      %v1415 = vmul.f32 %v743, %v1367
      %v1416 = vmul.f32 %v744, %v1368
      %v1417 = vmul.f32 %v745, %v1369
      %v1418 = vmul.f32 %v746, %v1370
      %v1419 = vmul.f32 %v747, %v1371
      %v1420 = vmul.f32 %v748, %v1372
      %v1421 = vmul.f32 %v749, %v1373
      %v1422 = vmul.f32 %v750, %v1374
      %v1423 = vmul.f32 %v751, %v1375
      %v1424 = vmul.f32 %v752, %v1376
      %v1425 = vmul.f32 %v753, %v1377
      %v1426 = vmul.f32 %v754, %v1378
      %v1427 = vmul.f32 %v755, %v1379
      %v1428 = vmul.f32 %v756, %v1380
      %v1429 = vmul.f32 %v757, %v1381
      %v1430 = vmul.f32 %v758, %v1382
      %v1431 = vmul.f32 %v759, %v1383
      %v1432 = vmul.f32 %v760, %v1384
      loop: start=0, step=1, limit=7
      $region53: #{implicit_generator_forward.1} parent=51 // loop_pre_header
        _
      $region54: #{implicit_generator_forward.1} parent=51 // loop_header
        %s1434 = sphi 0, %s1438
        %p1435 = scmp.ge.s32.totalorder %s1434, 7
        %v1439 = vphi %v1385, %v2775
        %v1440 = vphi %v1386, %v2776
        %v1441 = vphi %v1387, %v2777
        %v1442 = vphi %v1388, %v2778
        %v1443 = vphi %v1389, %v2779
        %v1444 = vphi %v1390, %v2780
        %v1445 = vphi %v1391, %v2781
        %v1446 = vphi %v1392, %v2782
        %v1447 = vphi %v1393, %v2783
        %v1448 = vphi %v1394, %v2784
        %v1449 = vphi %v1395, %v2785
        %v1450 = vphi %v1396, %v2786
        %v1451 = vphi %v1397, %v2787
        %v1452 = vphi %v1398, %v2788
        %v1453 = vphi %v1399, %v2789
        %v1454 = vphi %v1400, %v2790
        %v1455 = vphi %v1401, %v2791
        %v1456 = vphi %v1402, %v2792
        %v1457 = vphi %v1403, %v2793
        %v1458 = vphi %v1404, %v2794
        %v1459 = vphi %v1405, %v2795
        %v1460 = vphi %v1406, %v2796
        %v1461 = vphi %v1407, %v2797
        %v1462 = vphi %v1408, %v2798
        %v1463 = vphi %v1409, %v2799
        %v1464 = vphi %v1410, %v2800
        %v1465 = vphi %v1411, %v2801
        %v1466 = vphi %v1412, %v2802
        %v1467 = vphi %v1413, %v2803
        %v1468 = vphi %v1414, %v2804
        %v1469 = vphi %v1415, %v2805
        %v1470 = vphi %v1416, %v2806
        %v1471 = vphi %v1417, %v2807
        %v1472 = vphi %v1418, %v2808
        %v1473 = vphi %v1419, %v2809
        %v1474 = vphi %v1420, %v2810
        %v1475 = vphi %v1421, %v2811
        %v1476 = vphi %v1422, %v2812
        %v1477 = vphi %v1423, %v2813
        %v1478 = vphi %v1424, %v2814
        %v1479 = vphi %v1425, %v2815
        %v1480 = vphi %v1426, %v2816
        %v1481 = vphi %v1427, %v2817
        %v1482 = vphi %v1428, %v2818
        %v1483 = vphi %v1429, %v2819
        %v1484 = vphi %v1430, %v2820
        %v1485 = vphi %v1431, %v2821
        %v1486 = vphi %v1432, %v2822
      $region55: #{implicit_generator_forward.1} parent=51 // loop_header_branch
        %1437 = sbr.rel (%p1435) target = $region59
      $region56: #{implicit_generator_forward.1} parent=51 // loop_body
        %s1487 = smul.u32 %s1434, 4
        %s1488 = smul.addr %s1487, 4
        %s1489 = scalar_lea.vmem %s3, %s1488
        %v1490 = vld [vmem:[%s1489] sm:$0xf]
        %v1491 = vld [vmem:[%s1489 + $0x4] sm:$0xf]
        %v1492 = vld [vmem:[%s1489 + $0x8] sm:$0xf]
        %v1493 = vld [vmem:[%s1489 + $0xc] sm:$0xf]
        %v1494 = vpack.c.bf16 %v1451, %v1439
        %v1495 = vpack.c.bf16 %v1452, %v1440
        %v1496 = vpack.c.bf16 %v1453, %v1441
        %v1497 = vpack.c.bf16 %v1454, %v1442
        %v1498 = vpack.c.bf16 %v1455, %v1443
        %v1499 = vpack.c.bf16 %v1456, %v1444
        %v1500 = vpack.c.bf16 %v1457, %v1445
        %v1501 = vpack.c.bf16 %v1458, %v1446
        %v1502 = vpack.c.bf16 %v1459, %v1447
        %v1503 = vpack.c.bf16 %v1460, %v1448
        %v1504 = vpack.c.bf16 %v1461, %v1449
        %v1505 = vpack.c.bf16 %v1462, %v1450
        %v1506 = vpack.c.bf16 %v1475, %v1463
        %v1507 = vpack.c.bf16 %v1476, %v1464
        %v1508 = vpack.c.bf16 %v1477, %v1465
        %v1509 = vpack.c.bf16 %v1478, %v1466
        %v1510 = vpack.c.bf16 %v1479, %v1467
        %v1511 = vpack.c.bf16 %v1480, %v1468
        %v1512 = vpack.c.bf16 %v1481, %v1469
        %v1513 = vpack.c.bf16 %v1482, %v1470
        %v1514 = vpack.c.bf16 %v1483, %v1471
        %v1515 = vpack.c.bf16 %v1484, %v1472
        %v1516 = vpack.c.bf16 %v1485, %v1473
        %v1517 = vpack.c.bf16 %v1486, %v1474
        %v1522 = vunpack.c.l.b16 %v1490
        %v1523 = vunpack.c.l.b16 %v1491
        %v1524 = vunpack.c.l.b16 %v1492
        %v1525 = vunpack.c.l.b16 %v1493
        %v1526 = vpack.c.b16 %v1523, %v1522
        %v1527 = vpack.c.b16 %v1525, %v1524
        %vm1528 = vcmask 261120
        %v1530 = vsel %vm1528, %v1526, 0
        %v1533 = vsel %vm1528, %v1527, 0
        %1535 = vmatpush.bf16.msra.mxu0 0
        %1536 = vmatpush.bf16.msra.mxu0 0
        %1537 = vmatpush.bf16.msra.mxu0 0
        %1538 = vmatpush.bf16.msra.mxu0 0
        %1539 = vmatpush.bf16.msra.mxu0 0
        %1540 = vmatpush.bf16.msra.mxu0 0
        %1541 = vmatpush.bf16.msra.mxu0 %v1506
        %1542 = vmatpush.bf16.msra.mxu0 %v1494
        %1543 = vmatmul.bf16.gmra.mxu0 %v1530
        %v1544 = vpop.f32.mrf.mxu0
        %v1545 = vadd.f32 0.0, %v1544
        %v1546 = vpop.f32.mrf.mxu0
        %v1547 = vadd.f32 0.0, %v1546
        %1548 = vmatmul.bf16.gmra.mxu0 %v1533
        %v1549 = vpop.f32.mrf.mxu0
        %v1550 = vadd.f32 0.0, %v1549
        %v1551 = vpop.f32.mrf.mxu0
        %v1552 = vadd.f32 0.0, %v1551
        %1553 = vdwg.mxu0
        %1554 = vmatpush.bf16.msra.mxu0 0
        %1555 = vmatpush.bf16.msra.mxu0 0
        %1556 = vmatpush.bf16.msra.mxu0 0
        %1557 = vmatpush.bf16.msra.mxu0 0
        %1558 = vmatpush.bf16.msra.mxu0 0
        %1559 = vmatpush.bf16.msra.mxu0 0
        %1560 = vmatpush.bf16.msra.mxu0 %v1507
        %1561 = vmatpush.bf16.msra.mxu0 %v1495
        %1562 = vmatmul.bf16.gmra.mxu0 %v1530
        %v1563 = vpop.f32.mrf.mxu0
        %v1564 = vadd.f32 0.0, %v1563
        %v1565 = vpop.f32.mrf.mxu0
        %v1566 = vadd.f32 0.0, %v1565
        %1567 = vmatmul.bf16.gmra.mxu0 %v1533
        %v1568 = vpop.f32.mrf.mxu0
        %v1569 = vadd.f32 0.0, %v1568
        %v1570 = vpop.f32.mrf.mxu0
        %v1571 = vadd.f32 0.0, %v1570
        %1572 = vdwg.mxu0
        %1573 = vmatpush.bf16.msra.mxu0 0
        %1574 = vmatpush.bf16.msra.mxu0 0
        %1575 = vmatpush.bf16.msra.mxu0 0
        %1576 = vmatpush.bf16.msra.mxu0 0
        %1577 = vmatpush.bf16.msra.mxu0 0
        %1578 = vmatpush.bf16.msra.mxu0 0
        %1579 = vmatpush.bf16.msra.mxu0 %v1508
        %1580 = vmatpush.bf16.msra.mxu0 %v1496
        %1581 = vmatmul.bf16.gmra.mxu0 %v1530
        %v1582 = vpop.f32.mrf.mxu0
        %v1583 = vadd.f32 0.0, %v1582
        %v1584 = vpop.f32.mrf.mxu0
        %v1585 = vadd.f32 0.0, %v1584
        %1586 = vmatmul.bf16.gmra.mxu0 %v1533
        %v1587 = vpop.f32.mrf.mxu0
        %v1588 = vadd.f32 0.0, %v1587
        %v1589 = vpop.f32.mrf.mxu0
        %v1590 = vadd.f32 0.0, %v1589
        %1591 = vdwg.mxu0
        %1592 = vmatpush.bf16.msra.mxu0 0
        %1593 = vmatpush.bf16.msra.mxu0 0
        %1594 = vmatpush.bf16.msra.mxu0 0
        %1595 = vmatpush.bf16.msra.mxu0 0
        %1596 = vmatpush.bf16.msra.mxu0 0
        %1597 = vmatpush.bf16.msra.mxu0 0
        %1598 = vmatpush.bf16.msra.mxu0 %v1509
        %1599 = vmatpush.bf16.msra.mxu0 %v1497
        %1600 = vmatmul.bf16.gmra.mxu0 %v1530
        %v1601 = vpop.f32.mrf.mxu0
        %v1602 = vadd.f32 0.0, %v1601
        %v1603 = vpop.f32.mrf.mxu0
        %v1604 = vadd.f32 0.0, %v1603
        %1605 = vmatmul.bf16.gmra.mxu0 %v1533
        %v1606 = vpop.f32.mrf.mxu0
        %v1607 = vadd.f32 0.0, %v1606
        %v1608 = vpop.f32.mrf.mxu0
        %v1609 = vadd.f32 0.0, %v1608
        %1610 = vdwg.mxu0
        %1611 = vmatpush.bf16.msra.mxu0 0
        %1612 = vmatpush.bf16.msra.mxu0 0
        %1613 = vmatpush.bf16.msra.mxu0 0
        %1614 = vmatpush.bf16.msra.mxu0 0
        %1615 = vmatpush.bf16.msra.mxu0 0
        %1616 = vmatpush.bf16.msra.mxu0 0
        %1617 = vmatpush.bf16.msra.mxu0 %v1510
        %1618 = vmatpush.bf16.msra.mxu0 %v1498
        %1619 = vmatmul.bf16.gmra.mxu0 %v1530
        %v1620 = vpop.f32.mrf.mxu0
        %v1621 = vadd.f32 0.0, %v1620
        %v1622 = vpop.f32.mrf.mxu0
        %v1623 = vadd.f32 0.0, %v1622
        %1624 = vmatmul.bf16.gmra.mxu0 %v1533
        %v1625 = vpop.f32.mrf.mxu0
        %v1626 = vadd.f32 0.0, %v1625
        %v1627 = vpop.f32.mrf.mxu0
        %v1628 = vadd.f32 0.0, %v1627
        %1629 = vdwg.mxu0
        %1630 = vmatpush.bf16.msra.mxu0 0
        %1631 = vmatpush.bf16.msra.mxu0 0
        %1632 = vmatpush.bf16.msra.mxu0 0
        %1633 = vmatpush.bf16.msra.mxu0 0
        %1634 = vmatpush.bf16.msra.mxu0 0
        %1635 = vmatpush.bf16.msra.mxu0 0
        %1636 = vmatpush.bf16.msra.mxu0 %v1511
        %1637 = vmatpush.bf16.msra.mxu0 %v1499
        %1638 = vmatmul.bf16.gmra.mxu0 %v1530
        %v1639 = vpop.f32.mrf.mxu0
        %v1640 = vadd.f32 0.0, %v1639
        %v1641 = vpop.f32.mrf.mxu0
        %v1642 = vadd.f32 0.0, %v1641
        %1643 = vmatmul.bf16.gmra.mxu0 %v1533
        %v1644 = vpop.f32.mrf.mxu0
        %v1645 = vadd.f32 0.0, %v1644
        %v1646 = vpop.f32.mrf.mxu0
        %v1647 = vadd.f32 0.0, %v1646
        %1648 = vdwg.mxu0
        %1649 = vmatpush.bf16.msra.mxu0 0
        %1650 = vmatpush.bf16.msra.mxu0 0
        %1651 = vmatpush.bf16.msra.mxu0 0
        %1652 = vmatpush.bf16.msra.mxu0 0
        %1653 = vmatpush.bf16.msra.mxu0 0
        %1654 = vmatpush.bf16.msra.mxu0 0
        %1655 = vmatpush.bf16.msra.mxu0 %v1512
        %1656 = vmatpush.bf16.msra.mxu0 %v1500
        %1657 = vmatmul.bf16.gmra.mxu0 %v1530
        %v1658 = vpop.f32.mrf.mxu0
        %v1659 = vadd.f32 0.0, %v1658
        %v1660 = vpop.f32.mrf.mxu0
        %v1661 = vadd.f32 0.0, %v1660
        %1662 = vmatmul.bf16.gmra.mxu0 %v1533
        %v1663 = vpop.f32.mrf.mxu0
        %v1664 = vadd.f32 0.0, %v1663
        %v1665 = vpop.f32.mrf.mxu0
        %v1666 = vadd.f32 0.0, %v1665
        %1667 = vdwg.mxu0
        %1668 = vmatpush.bf16.msra.mxu0 0
        %1669 = vmatpush.bf16.msra.mxu0 0
        %1670 = vmatpush.bf16.msra.mxu0 0
        %1671 = vmatpush.bf16.msra.mxu0 0
        %1672 = vmatpush.bf16.msra.mxu0 0
        %1673 = vmatpush.bf16.msra.mxu0 0
        %1674 = vmatpush.bf16.msra.mxu0 %v1513
        %1675 = vmatpush.bf16.msra.mxu0 %v1501
        %1676 = vmatmul.bf16.gmra.mxu0 %v1530
        %v1677 = vpop.f32.mrf.mxu0
        %v1678 = vadd.f32 0.0, %v1677
        %v1679 = vpop.f32.mrf.mxu0
        %v1680 = vadd.f32 0.0, %v1679
        %1681 = vmatmul.bf16.gmra.mxu0 %v1533
        %v1682 = vpop.f32.mrf.mxu0
        %v1683 = vadd.f32 0.0, %v1682
        %v1684 = vpop.f32.mrf.mxu0
        %v1685 = vadd.f32 0.0, %v1684
        %1686 = vdwg.mxu0
        %1687 = vmatpush.bf16.msra.mxu0 0
        %1688 = vmatpush.bf16.msra.mxu0 0
        %1689 = vmatpush.bf16.msra.mxu0 0
        %1690 = vmatpush.bf16.msra.mxu0 0
        %1691 = vmatpush.bf16.msra.mxu0 0
        %1692 = vmatpush.bf16.msra.mxu0 0
        %1693 = vmatpush.bf16.msra.mxu0 %v1514
        %1694 = vmatpush.bf16.msra.mxu0 %v1502
        %1695 = vmatmul.bf16.gmra.mxu0 %v1530
        %v1696 = vpop.f32.mrf.mxu0
        %v1697 = vadd.f32 0.0, %v1696
        %v1698 = vpop.f32.mrf.mxu0
        %v1699 = vadd.f32 0.0, %v1698
        %1700 = vmatmul.bf16.gmra.mxu0 %v1533
        %v1701 = vpop.f32.mrf.mxu0
        %v1702 = vadd.f32 0.0, %v1701
        %v1703 = vpop.f32.mrf.mxu0
        %v1704 = vadd.f32 0.0, %v1703
        %1705 = vdwg.mxu0
        %1706 = vmatpush.bf16.msra.mxu0 0
        %1707 = vmatpush.bf16.msra.mxu0 0
        %1708 = vmatpush.bf16.msra.mxu0 0
        %1709 = vmatpush.bf16.msra.mxu0 0
        %1710 = vmatpush.bf16.msra.mxu0 0
        %1711 = vmatpush.bf16.msra.mxu0 0
        %1712 = vmatpush.bf16.msra.mxu0 %v1515
        %1713 = vmatpush.bf16.msra.mxu0 %v1503
        %1714 = vmatmul.bf16.gmra.mxu0 %v1530
        %v1715 = vpop.f32.mrf.mxu0
        %v1716 = vadd.f32 0.0, %v1715
        %v1717 = vpop.f32.mrf.mxu0
        %v1718 = vadd.f32 0.0, %v1717
        %1719 = vmatmul.bf16.gmra.mxu0 %v1533
        %v1720 = vpop.f32.mrf.mxu0
        %v1721 = vadd.f32 0.0, %v1720
        %v1722 = vpop.f32.mrf.mxu0
        %v1723 = vadd.f32 0.0, %v1722
        %1724 = vdwg.mxu0
        %1725 = vmatpush.bf16.msra.mxu0 0
        %1726 = vmatpush.bf16.msra.mxu0 0
        %1727 = vmatpush.bf16.msra.mxu0 0
        %1728 = vmatpush.bf16.msra.mxu0 0
        %1729 = vmatpush.bf16.msra.mxu0 0
        %1730 = vmatpush.bf16.msra.mxu0 0
        %1731 = vmatpush.bf16.msra.mxu0 %v1516
        %1732 = vmatpush.bf16.msra.mxu0 %v1504
        %1733 = vmatmul.bf16.gmra.mxu0 %v1530
        %v1734 = vpop.f32.mrf.mxu0
        %v1735 = vadd.f32 0.0, %v1734
        %v1736 = vpop.f32.mrf.mxu0
        %v1737 = vadd.f32 0.0, %v1736
        %1738 = vmatmul.bf16.gmra.mxu0 %v1533
        %v1739 = vpop.f32.mrf.mxu0
        %v1740 = vadd.f32 0.0, %v1739
        %v1741 = vpop.f32.mrf.mxu0
        %v1742 = vadd.f32 0.0, %v1741
        %1743 = vdwg.mxu0
        %1744 = vmatpush.bf16.msra.mxu0 0
        %1745 = vmatpush.bf16.msra.mxu0 0
        %1746 = vmatpush.bf16.msra.mxu0 0
        %1747 = vmatpush.bf16.msra.mxu0 0
        %1748 = vmatpush.bf16.msra.mxu0 0
        %1749 = vmatpush.bf16.msra.mxu0 0
        %1750 = vmatpush.bf16.msra.mxu0 %v1517
        %1751 = vmatpush.bf16.msra.mxu0 %v1505
        %1752 = vmatmul.bf16.gmra.mxu0 %v1530
        %v1753 = vpop.f32.mrf.mxu0
        %v1754 = vadd.f32 0.0, %v1753
        %v1755 = vpop.f32.mrf.mxu0
        %v1756 = vadd.f32 0.0, %v1755
        %1757 = vmatmul.bf16.gmra.mxu0 %v1533
        %v1758 = vpop.f32.mrf.mxu0
        %v1759 = vadd.f32 0.0, %v1758
        %v1760 = vpop.f32.mrf.mxu0
        %v1761 = vadd.f32 0.0, %v1760
        %1762 = vdwg.mxu0
        %s1763 = sadd.s32 %s1434, 1
        %s1764 = smul.u32 %s1763, 32
        %s1765 = scalar_lea.vmem %s317, %s1764
        %v1766 = vld [vmem:[%s1765] sm:$0xff]
        %v1767 = vld [vmem:[%s1765 + $0x8] sm:$0xff]
        %v1768 = vld [vmem:[%s1765 + $0x10] sm:$0xff]
        %v1769 = vld [vmem:[%s1765 + $0x18] sm:$0xff]
        %1771 = vset.pattern.permute.xlu0 0
        %1772 = vperm.xlu0 %1771, %v1766
        %v1773 = vpop.permute.xlu0 %1772
        %1776 = vset.pattern.permute.xlu0 0
        %1777 = vperm.xlu0 %1776, %v1767
        %v1778 = vpop.permute.xlu0 %1777
        %1781 = vset.pattern.permute.xlu0 0
        %1782 = vperm.xlu0 %1781, %v1768
        %v1783 = vpop.permute.xlu0 %1782
        %1786 = vset.pattern.permute.xlu0 0
        %1787 = vperm.xlu0 %1786, %v1769
        %v1788 = vpop.permute.xlu0 %1787
        %v1790 = vmul.f32 %v1773, %v1545
        %v1791 = vmul.f32 %v1773, %v1564
        %v1792 = vmul.f32 %v1773, %v1583
        %v1793 = vmul.f32 %v1773, %v1602
        %v1794 = vmul.f32 %v1773, %v1621
        %v1795 = vmul.f32 %v1773, %v1640
        %v1796 = vmul.f32 %v1773, %v1659
        %v1797 = vmul.f32 %v1773, %v1678
        %v1798 = vmul.f32 %v1773, %v1697
        %v1799 = vmul.f32 %v1773, %v1716
        %v1800 = vmul.f32 %v1773, %v1735
        %v1801 = vmul.f32 %v1773, %v1754
        %v1802 = vmul.f32 %v1778, %v1547
        %v1803 = vmul.f32 %v1778, %v1566
        %v1804 = vmul.f32 %v1778, %v1585
        %v1805 = vmul.f32 %v1778, %v1604
        %v1806 = vmul.f32 %v1778, %v1623
        %v1807 = vmul.f32 %v1778, %v1642
        %v1808 = vmul.f32 %v1778, %v1661
        %v1809 = vmul.f32 %v1778, %v1680
        %v1810 = vmul.f32 %v1778, %v1699
        %v1811 = vmul.f32 %v1778, %v1718
        %v1812 = vmul.f32 %v1778, %v1737
        %v1813 = vmul.f32 %v1778, %v1756
        %v1814 = vmul.f32 %v1783, %v1550
        %v1815 = vmul.f32 %v1783, %v1569
        %v1816 = vmul.f32 %v1783, %v1588
        %v1817 = vmul.f32 %v1783, %v1607
        %v1818 = vmul.f32 %v1783, %v1626
        %v1819 = vmul.f32 %v1783, %v1645
        %v1820 = vmul.f32 %v1783, %v1664
        %v1821 = vmul.f32 %v1783, %v1683
        %v1822 = vmul.f32 %v1783, %v1702
        %v1823 = vmul.f32 %v1783, %v1721
        %v1824 = vmul.f32 %v1783, %v1740
        %v1825 = vmul.f32 %v1783, %v1759
        %v1826 = vmul.f32 %v1788, %v1552
        %v1827 = vmul.f32 %v1788, %v1571
        %v1828 = vmul.f32 %v1788, %v1590
        %v1829 = vmul.f32 %v1788, %v1609
        %v1830 = vmul.f32 %v1788, %v1628
        %v1831 = vmul.f32 %v1788, %v1647
        %v1832 = vmul.f32 %v1788, %v1666
        %v1833 = vmul.f32 %v1788, %v1685
        %v1834 = vmul.f32 %v1788, %v1704
        %v1835 = vmul.f32 %v1788, %v1723
        %v1836 = vmul.f32 %v1788, %v1742
        %v1837 = vmul.f32 %v1788, %v1761
        %s1838 = scalar_lea.vmem %s322, %s1764
        %v1839 = vld [vmem:[%s1838] sm:$0xff]
        %v1840 = vld [vmem:[%s1838 + $0x8] sm:$0xff]
        %v1841 = vld [vmem:[%s1838 + $0x10] sm:$0xff]
        %v1842 = vld [vmem:[%s1838 + $0x18] sm:$0xff]
        %1844 = vset.pattern.permute.xlu0 0
        %1845 = vperm.xlu0 %1844, %v1839
        %v1846 = vpop.permute.xlu0 %1845
        %1849 = vset.pattern.permute.xlu0 0
        %1850 = vperm.xlu0 %1849, %v1840
        %v1851 = vpop.permute.xlu0 %1850
        %1854 = vset.pattern.permute.xlu0 0
        %1855 = vperm.xlu0 %1854, %v1841
        %v1856 = vpop.permute.xlu0 %1855
        %1859 = vset.pattern.permute.xlu0 0
        %1860 = vperm.xlu0 %1859, %v1842
        %v1861 = vpop.permute.xlu0 %1860
        %v1863 = vadd.f32 %v1790, %v1846
        %v1864 = vadd.f32 %v1791, %v1846
        %v1865 = vadd.f32 %v1792, %v1846
        %v1866 = vadd.f32 %v1793, %v1846
        %v1867 = vadd.f32 %v1794, %v1846
        %v1868 = vadd.f32 %v1795, %v1846
        %v1869 = vadd.f32 %v1796, %v1846
        %v1870 = vadd.f32 %v1797, %v1846
        %v1871 = vadd.f32 %v1798, %v1846
        %v1872 = vadd.f32 %v1799, %v1846
        %v1873 = vadd.f32 %v1800, %v1846
        %v1874 = vadd.f32 %v1801, %v1846
        %v1875 = vadd.f32 %v1802, %v1851
        %v1876 = vadd.f32 %v1803, %v1851
        %v1877 = vadd.f32 %v1804, %v1851
        %v1878 = vadd.f32 %v1805, %v1851
        %v1879 = vadd.f32 %v1806, %v1851
        %v1880 = vadd.f32 %v1807, %v1851
        %v1881 = vadd.f32 %v1808, %v1851
        %v1882 = vadd.f32 %v1809, %v1851
        %v1883 = vadd.f32 %v1810, %v1851
        %v1884 = vadd.f32 %v1811, %v1851
        %v1885 = vadd.f32 %v1812, %v1851
        %v1886 = vadd.f32 %v1813, %v1851
        %v1887 = vadd.f32 %v1814, %v1856
        %v1888 = vadd.f32 %v1815, %v1856
        %v1889 = vadd.f32 %v1816, %v1856
        %v1890 = vadd.f32 %v1817, %v1856
        %v1891 = vadd.f32 %v1818, %v1856
        %v1892 = vadd.f32 %v1819, %v1856
        %v1893 = vadd.f32 %v1820, %v1856
        %v1894 = vadd.f32 %v1821, %v1856
        %v1895 = vadd.f32 %v1822, %v1856
        %v1896 = vadd.f32 %v1823, %v1856
        %v1897 = vadd.f32 %v1824, %v1856
        %v1898 = vadd.f32 %v1825, %v1856
        %v1899 = vadd.f32 %v1826, %v1861
        %v1900 = vadd.f32 %v1827, %v1861
        %v1901 = vadd.f32 %v1828, %v1861
        %v1902 = vadd.f32 %v1829, %v1861
        %v1903 = vadd.f32 %v1830, %v1861
        %v1904 = vadd.f32 %v1831, %v1861
        %v1905 = vadd.f32 %v1832, %v1861
        %v1906 = vadd.f32 %v1833, %v1861
        %v1907 = vadd.f32 %v1834, %v1861
        %v1908 = vadd.f32 %v1835, %v1861
        %v1909 = vadd.f32 %v1836, %v1861
        %v1910 = vadd.f32 %v1837, %v1861
        %v1911 = vmul.f32 %v1863, 0.15915494
        %v1912 = vmul.f32 %v1864, 0.15915494
        %v1913 = vmul.f32 %v1865, 0.15915494
        %v1914 = vmul.f32 %v1866, 0.15915494
        %v1915 = vmul.f32 %v1867, 0.15915494
        %v1916 = vmul.f32 %v1868, 0.15915494
        %v1917 = vmul.f32 %v1869, 0.15915494
        %v1918 = vmul.f32 %v1870, 0.15915494
        %v1919 = vmul.f32 %v1871, 0.15915494
        %v1920 = vmul.f32 %v1872, 0.15915494
        %v1921 = vmul.f32 %v1873, 0.15915494
        %v1922 = vmul.f32 %v1874, 0.15915494
        %v1923 = vmul.f32 %v1875, 0.15915494
        %v1924 = vmul.f32 %v1876, 0.15915494
        %v1925 = vmul.f32 %v1877, 0.15915494
        %v1926 = vmul.f32 %v1878, 0.15915494
        %v1927 = vmul.f32 %v1879, 0.15915494
        %v1928 = vmul.f32 %v1880, 0.15915494
        %v1929 = vmul.f32 %v1881, 0.15915494
        %v1930 = vmul.f32 %v1882, 0.15915494
        %v1931 = vmul.f32 %v1883, 0.15915494
        %v1932 = vmul.f32 %v1884, 0.15915494
        %v1933 = vmul.f32 %v1885, 0.15915494
        %v1934 = vmul.f32 %v1886, 0.15915494
        %v1935 = vmul.f32 %v1887, 0.15915494
        %v1936 = vmul.f32 %v1888, 0.15915494
        %v1937 = vmul.f32 %v1889, 0.15915494
        %v1938 = vmul.f32 %v1890, 0.15915494
        %v1939 = vmul.f32 %v1891, 0.15915494
        %v1940 = vmul.f32 %v1892, 0.15915494
        %v1941 = vmul.f32 %v1893, 0.15915494
        %v1942 = vmul.f32 %v1894, 0.15915494
        %v1943 = vmul.f32 %v1895, 0.15915494
        %v1944 = vmul.f32 %v1896, 0.15915494
        %v1945 = vmul.f32 %v1897, 0.15915494
        %v1946 = vmul.f32 %v1898, 0.15915494
        %v1947 = vmul.f32 %v1899, 0.15915494
        %v1948 = vmul.f32 %v1900, 0.15915494
        %v1949 = vmul.f32 %v1901, 0.15915494
        %v1950 = vmul.f32 %v1902, 0.15915494
        %v1951 = vmul.f32 %v1903, 0.15915494
        %v1952 = vmul.f32 %v1904, 0.15915494
        %v1953 = vmul.f32 %v1905, 0.15915494
        %v1954 = vmul.f32 %v1906, 0.15915494
        %v1955 = vmul.f32 %v1907, 0.15915494
        %v1956 = vmul.f32 %v1908, 0.15915494
        %v1957 = vmul.f32 %v1909, 0.15915494
        %v1958 = vmul.f32 %v1910, 0.15915494
        %v1959 = vadd.f32 %v1911, 0.5
        %v1960 = vadd.f32 %v1912, 0.5
        %v1961 = vadd.f32 %v1913, 0.5
        %v1962 = vadd.f32 %v1914, 0.5
        %v1963 = vadd.f32 %v1915, 0.5
        %v1964 = vadd.f32 %v1916, 0.5
        %v1965 = vadd.f32 %v1917, 0.5
        %v1966 = vadd.f32 %v1918, 0.5
        %v1967 = vadd.f32 %v1919, 0.5
        %v1968 = vadd.f32 %v1920, 0.5
        %v1969 = vadd.f32 %v1921, 0.5
        %v1970 = vadd.f32 %v1922, 0.5
        %v1971 = vadd.f32 %v1923, 0.5
        %v1972 = vadd.f32 %v1924, 0.5
        %v1973 = vadd.f32 %v1925, 0.5
        %v1974 = vadd.f32 %v1926, 0.5
        %v1975 = vadd.f32 %v1927, 0.5
        %v1976 = vadd.f32 %v1928, 0.5
        %v1977 = vadd.f32 %v1929, 0.5
        %v1978 = vadd.f32 %v1930, 0.5
        %v1979 = vadd.f32 %v1931, 0.5
        %v1980 = vadd.f32 %v1932, 0.5
        %v1981 = vadd.f32 %v1933, 0.5
        %v1982 = vadd.f32 %v1934, 0.5
        %v1983 = vadd.f32 %v1935, 0.5
        %v1984 = vadd.f32 %v1936, 0.5
        %v1985 = vadd.f32 %v1937, 0.5
        %v1986 = vadd.f32 %v1938, 0.5
        %v1987 = vadd.f32 %v1939, 0.5
        %v1988 = vadd.f32 %v1940, 0.5
        %v1989 = vadd.f32 %v1941, 0.5
        %v1990 = vadd.f32 %v1942, 0.5
        %v1991 = vadd.f32 %v1943, 0.5
        %v1992 = vadd.f32 %v1944, 0.5
        %v1993 = vadd.f32 %v1945, 0.5
        %v1994 = vadd.f32 %v1946, 0.5
        %v1995 = vadd.f32 %v1947, 0.5
        %v1996 = vadd.f32 %v1948, 0.5
        %v1997 = vadd.f32 %v1949, 0.5
        %v1998 = vadd.f32 %v1950, 0.5
        %v1999 = vadd.f32 %v1951, 0.5
        %v2000 = vadd.f32 %v1952, 0.5
        %v2001 = vadd.f32 %v1953, 0.5
        %v2002 = vadd.f32 %v1954, 0.5
        %v2003 = vadd.f32 %v1955, 0.5
        %v2004 = vadd.f32 %v1956, 0.5
        %v2005 = vadd.f32 %v1957, 0.5
        %v2006 = vadd.f32 %v1958, 0.5
        %v2007 = vfloor.f32 %v1959
        %v2008 = vfloor.f32 %v1960
        %v2009 = vfloor.f32 %v1961
        %v2010 = vfloor.f32 %v1962
        %v2011 = vfloor.f32 %v1963
        %v2012 = vfloor.f32 %v1964
        %v2013 = vfloor.f32 %v1965
        %v2014 = vfloor.f32 %v1966
        %v2015 = vfloor.f32 %v1967
        %v2016 = vfloor.f32 %v1968
        %v2017 = vfloor.f32 %v1969
        %v2018 = vfloor.f32 %v1970
        %v2019 = vfloor.f32 %v1971
        %v2020 = vfloor.f32 %v1972
        %v2021 = vfloor.f32 %v1973
        %v2022 = vfloor.f32 %v1974
        %v2023 = vfloor.f32 %v1975
        %v2024 = vfloor.f32 %v1976
        %v2025 = vfloor.f32 %v1977
        %v2026 = vfloor.f32 %v1978
        %v2027 = vfloor.f32 %v1979
        %v2028 = vfloor.f32 %v1980
        %v2029 = vfloor.f32 %v1981
        %v2030 = vfloor.f32 %v1982
        %v2031 = vfloor.f32 %v1983
        %v2032 = vfloor.f32 %v1984
        %v2033 = vfloor.f32 %v1985
        %v2034 = vfloor.f32 %v1986
        %v2035 = vfloor.f32 %v1987
        %v2036 = vfloor.f32 %v1988
        %v2037 = vfloor.f32 %v1989
        %v2038 = vfloor.f32 %v1990
        %v2039 = vfloor.f32 %v1991
        %v2040 = vfloor.f32 %v1992
        %v2041 = vfloor.f32 %v1993
        %v2042 = vfloor.f32 %v1994
        %v2043 = vfloor.f32 %v1995
        %v2044 = vfloor.f32 %v1996
        %v2045 = vfloor.f32 %v1997
        %v2046 = vfloor.f32 %v1998
        %v2047 = vfloor.f32 %v1999
        %v2048 = vfloor.f32 %v2000
        %v2049 = vfloor.f32 %v2001
        %v2050 = vfloor.f32 %v2002
        %v2051 = vfloor.f32 %v2003
        %v2052 = vfloor.f32 %v2004
        %v2053 = vfloor.f32 %v2005
        %v2054 = vfloor.f32 %v2006
        %v2055 = vmul.f32 %v2007, 6.2831855
        %v2056 = vmul.f32 %v2008, 6.2831855
        %v2057 = vmul.f32 %v2009, 6.2831855
        %v2058 = vmul.f32 %v2010, 6.2831855
        %v2059 = vmul.f32 %v2011, 6.2831855
        %v2060 = vmul.f32 %v2012, 6.2831855
        %v2061 = vmul.f32 %v2013, 6.2831855
        %v2062 = vmul.f32 %v2014, 6.2831855
        %v2063 = vmul.f32 %v2015, 6.2831855
        %v2064 = vmul.f32 %v2016, 6.2831855
        %v2065 = vmul.f32 %v2017, 6.2831855
        %v2066 = vmul.f32 %v2018, 6.2831855
        %v2067 = vmul.f32 %v2019, 6.2831855
        %v2068 = vmul.f32 %v2020, 6.2831855
        %v2069 = vmul.f32 %v2021, 6.2831855
        %v2070 = vmul.f32 %v2022, 6.2831855
        %v2071 = vmul.f32 %v2023, 6.2831855
        %v2072 = vmul.f32 %v2024, 6.2831855
        %v2073 = vmul.f32 %v2025, 6.2831855
        %v2074 = vmul.f32 %v2026, 6.2831855
        %v2075 = vmul.f32 %v2027, 6.2831855
        %v2076 = vmul.f32 %v2028, 6.2831855
        %v2077 = vmul.f32 %v2029, 6.2831855
        %v2078 = vmul.f32 %v2030, 6.2831855
        %v2079 = vmul.f32 %v2031, 6.2831855
        %v2080 = vmul.f32 %v2032, 6.2831855
        %v2081 = vmul.f32 %v2033, 6.2831855
        %v2082 = vmul.f32 %v2034, 6.2831855
        %v2083 = vmul.f32 %v2035, 6.2831855
        %v2084 = vmul.f32 %v2036, 6.2831855
        %v2085 = vmul.f32 %v2037, 6.2831855
        %v2086 = vmul.f32 %v2038, 6.2831855
        %v2087 = vmul.f32 %v2039, 6.2831855
        %v2088 = vmul.f32 %v2040, 6.2831855
        %v2089 = vmul.f32 %v2041, 6.2831855
        %v2090 = vmul.f32 %v2042, 6.2831855
        %v2091 = vmul.f32 %v2043, 6.2831855
        %v2092 = vmul.f32 %v2044, 6.2831855
        %v2093 = vmul.f32 %v2045, 6.2831855
        %v2094 = vmul.f32 %v2046, 6.2831855
        %v2095 = vmul.f32 %v2047, 6.2831855
        %v2096 = vmul.f32 %v2048, 6.2831855
        %v2097 = vmul.f32 %v2049, 6.2831855
        %v2098 = vmul.f32 %v2050, 6.2831855
        %v2099 = vmul.f32 %v2051, 6.2831855
        %v2100 = vmul.f32 %v2052, 6.2831855
        %v2101 = vmul.f32 %v2053, 6.2831855
        %v2102 = vmul.f32 %v2054, 6.2831855
        %v2103 = vsub.f32 %v1863, %v2055
        %v2104 = vsub.f32 %v1864, %v2056
        %v2105 = vsub.f32 %v1865, %v2057
        %v2106 = vsub.f32 %v1866, %v2058
        %v2107 = vsub.f32 %v1867, %v2059
        %v2108 = vsub.f32 %v1868, %v2060
        %v2109 = vsub.f32 %v1869, %v2061
        %v2110 = vsub.f32 %v1870, %v2062
        %v2111 = vsub.f32 %v1871, %v2063
        %v2112 = vsub.f32 %v1872, %v2064
        %v2113 = vsub.f32 %v1873, %v2065
        %v2114 = vsub.f32 %v1874, %v2066
        %v2115 = vsub.f32 %v1875, %v2067
        %v2116 = vsub.f32 %v1876, %v2068
        %v2117 = vsub.f32 %v1877, %v2069
        %v2118 = vsub.f32 %v1878, %v2070
        %v2119 = vsub.f32 %v1879, %v2071
        %v2120 = vsub.f32 %v1880, %v2072
        %v2121 = vsub.f32 %v1881, %v2073
        %v2122 = vsub.f32 %v1882, %v2074
        %v2123 = vsub.f32 %v1883, %v2075
        %v2124 = vsub.f32 %v1884, %v2076
        %v2125 = vsub.f32 %v1885, %v2077
        %v2126 = vsub.f32 %v1886, %v2078
        %v2127 = vsub.f32 %v1887, %v2079
        %v2128 = vsub.f32 %v1888, %v2080
        %v2129 = vsub.f32 %v1889, %v2081
        %v2130 = vsub.f32 %v1890, %v2082
        %v2131 = vsub.f32 %v1891, %v2083
        %v2132 = vsub.f32 %v1892, %v2084
        %v2133 = vsub.f32 %v1893, %v2085
        %v2134 = vsub.f32 %v1894, %v2086
        %v2135 = vsub.f32 %v1895, %v2087
        %v2136 = vsub.f32 %v1896, %v2088
        %v2137 = vsub.f32 %v1897, %v2089
        %v2138 = vsub.f32 %v1898, %v2090
        %v2139 = vsub.f32 %v1899, %v2091
        %v2140 = vsub.f32 %v1900, %v2092
        %v2141 = vsub.f32 %v1901, %v2093
        %v2142 = vsub.f32 %v1902, %v2094
        %v2143 = vsub.f32 %v1903, %v2095
        %v2144 = vsub.f32 %v1904, %v2096
        %v2145 = vsub.f32 %v1905, %v2097
        %v2146 = vsub.f32 %v1906, %v2098
        %v2147 = vsub.f32 %v1907, %v2099
        %v2148 = vsub.f32 %v1908, %v2100
        %v2149 = vsub.f32 %v1909, %v2101
        %v2150 = vsub.f32 %v1910, %v2102
        %v2151 = vmul.f32 %v2103, %v2103
        %v2152 = vmul.f32 %v2104, %v2104
        %v2153 = vmul.f32 %v2105, %v2105
        %v2154 = vmul.f32 %v2106, %v2106
        %v2155 = vmul.f32 %v2107, %v2107
        %v2156 = vmul.f32 %v2108, %v2108
        %v2157 = vmul.f32 %v2109, %v2109
        %v2158 = vmul.f32 %v2110, %v2110
        %v2159 = vmul.f32 %v2111, %v2111
        %v2160 = vmul.f32 %v2112, %v2112
        %v2161 = vmul.f32 %v2113, %v2113
        %v2162 = vmul.f32 %v2114, %v2114
        %v2163 = vmul.f32 %v2115, %v2115
        %v2164 = vmul.f32 %v2116, %v2116
        %v2165 = vmul.f32 %v2117, %v2117
        %v2166 = vmul.f32 %v2118, %v2118
        %v2167 = vmul.f32 %v2119, %v2119
        %v2168 = vmul.f32 %v2120, %v2120
        %v2169 = vmul.f32 %v2121, %v2121
        %v2170 = vmul.f32 %v2122, %v2122
        %v2171 = vmul.f32 %v2123, %v2123
        %v2172 = vmul.f32 %v2124, %v2124
        %v2173 = vmul.f32 %v2125, %v2125
        %v2174 = vmul.f32 %v2126, %v2126
        %v2175 = vmul.f32 %v2127, %v2127
        %v2176 = vmul.f32 %v2128, %v2128
        %v2177 = vmul.f32 %v2129, %v2129
        %v2178 = vmul.f32 %v2130, %v2130
        %v2179 = vmul.f32 %v2131, %v2131
        %v2180 = vmul.f32 %v2132, %v2132
        %v2181 = vmul.f32 %v2133, %v2133
        %v2182 = vmul.f32 %v2134, %v2134
        %v2183 = vmul.f32 %v2135, %v2135
        %v2184 = vmul.f32 %v2136, %v2136
        %v2185 = vmul.f32 %v2137, %v2137
        %v2186 = vmul.f32 %v2138, %v2138
        %v2187 = vmul.f32 %v2139, %v2139
        %v2188 = vmul.f32 %v2140, %v2140
        %v2189 = vmul.f32 %v2141, %v2141
        %v2190 = vmul.f32 %v2142, %v2142
        %v2191 = vmul.f32 %v2143, %v2143
        %v2192 = vmul.f32 %v2144, %v2144
        %v2193 = vmul.f32 %v2145, %v2145
        %v2194 = vmul.f32 %v2146, %v2146
        %v2195 = vmul.f32 %v2147, %v2147
        %v2196 = vmul.f32 %v2148, %v2148
        %v2197 = vmul.f32 %v2149, %v2149
        %v2198 = vmul.f32 %v2150, %v2150
        %v2199 = vmul.f32 %v2151, 1.6059044e-10
        %v2200 = vmul.f32 %v2152, 1.6059044e-10
        %v2201 = vmul.f32 %v2153, 1.6059044e-10
        %v2202 = vmul.f32 %v2154, 1.6059044e-10
        %v2203 = vmul.f32 %v2155, 1.6059044e-10
        %v2204 = vmul.f32 %v2156, 1.6059044e-10
        %v2205 = vmul.f32 %v2157, 1.6059044e-10
        %v2206 = vmul.f32 %v2158, 1.6059044e-10
        %v2207 = vmul.f32 %v2159, 1.6059044e-10
        %v2208 = vmul.f32 %v2160, 1.6059044e-10
        %v2209 = vmul.f32 %v2161, 1.6059044e-10
        %v2210 = vmul.f32 %v2162, 1.6059044e-10
        %v2211 = vmul.f32 %v2163, 1.6059044e-10
        %v2212 = vmul.f32 %v2164, 1.6059044e-10
        %v2213 = vmul.f32 %v2165, 1.6059044e-10
        %v2214 = vmul.f32 %v2166, 1.6059044e-10
        %v2215 = vmul.f32 %v2167, 1.6059044e-10
        %v2216 = vmul.f32 %v2168, 1.6059044e-10
        %v2217 = vmul.f32 %v2169, 1.6059044e-10
        %v2218 = vmul.f32 %v2170, 1.6059044e-10
        %v2219 = vmul.f32 %v2171, 1.6059044e-10
        %v2220 = vmul.f32 %v2172, 1.6059044e-10
        %v2221 = vmul.f32 %v2173, 1.6059044e-10
        %v2222 = vmul.f32 %v2174, 1.6059044e-10
        %v2223 = vmul.f32 %v2175, 1.6059044e-10
        %v2224 = vmul.f32 %v2176, 1.6059044e-10
        %v2225 = vmul.f32 %v2177, 1.6059044e-10
        %v2226 = vmul.f32 %v2178, 1.6059044e-10
        %v2227 = vmul.f32 %v2179, 1.6059044e-10
        %v2228 = vmul.f32 %v2180, 1.6059044e-10
        %v2229 = vmul.f32 %v2181, 1.6059044e-10
        %v2230 = vmul.f32 %v2182, 1.6059044e-10
        %v2231 = vmul.f32 %v2183, 1.6059044e-10
        %v2232 = vmul.f32 %v2184, 1.6059044e-10
        %v2233 = vmul.f32 %v2185, 1.6059044e-10
        %v2234 = vmul.f32 %v2186, 1.6059044e-10
        %v2235 = vmul.f32 %v2187, 1.6059044e-10
        %v2236 = vmul.f32 %v2188, 1.6059044e-10
        %v2237 = vmul.f32 %v2189, 1.6059044e-10
        %v2238 = vmul.f32 %v2190, 1.6059044e-10
        %v2239 = vmul.f32 %v2191, 1.6059044e-10
        %v2240 = vmul.f32 %v2192, 1.6059044e-10
        %v2241 = vmul.f32 %v2193, 1.6059044e-10
        %v2242 = vmul.f32 %v2194, 1.6059044e-10
        %v2243 = vmul.f32 %v2195, 1.6059044e-10
        %v2244 = vmul.f32 %v2196, 1.6059044e-10
        %v2245 = vmul.f32 %v2197, 1.6059044e-10
        %v2246 = vmul.f32 %v2198, 1.6059044e-10
        %v2247 = vadd.f32 %v2199, -2.5052108e-08
        %v2248 = vadd.f32 %v2200, -2.5052108e-08
        %v2249 = vadd.f32 %v2201, -2.5052108e-08
        %v2250 = vadd.f32 %v2202, -2.5052108e-08
        %v2251 = vadd.f32 %v2203, -2.5052108e-08
        %v2252 = vadd.f32 %v2204, -2.5052108e-08
        %v2253 = vadd.f32 %v2205, -2.5052108e-08
        %v2254 = vadd.f32 %v2206, -2.5052108e-08
        %v2255 = vadd.f32 %v2207, -2.5052108e-08
        %v2256 = vadd.f32 %v2208, -2.5052108e-08
        %v2257 = vadd.f32 %v2209, -2.5052108e-08
        %v2258 = vadd.f32 %v2210, -2.5052108e-08
        %v2259 = vadd.f32 %v2211, -2.5052108e-08
        %v2260 = vadd.f32 %v2212, -2.5052108e-08
        %v2261 = vadd.f32 %v2213, -2.5052108e-08
        %v2262 = vadd.f32 %v2214, -2.5052108e-08
        %v2263 = vadd.f32 %v2215, -2.5052108e-08
        %v2264 = vadd.f32 %v2216, -2.5052108e-08
        %v2265 = vadd.f32 %v2217, -2.5052108e-08
        %v2266 = vadd.f32 %v2218, -2.5052108e-08
        %v2267 = vadd.f32 %v2219, -2.5052108e-08
        %v2268 = vadd.f32 %v2220, -2.5052108e-08
        %v2269 = vadd.f32 %v2221, -2.5052108e-08
        %v2270 = vadd.f32 %v2222, -2.5052108e-08
        %v2271 = vadd.f32 %v2223, -2.5052108e-08
        %v2272 = vadd.f32 %v2224, -2.5052108e-08
        %v2273 = vadd.f32 %v2225, -2.5052108e-08
        %v2274 = vadd.f32 %v2226, -2.5052108e-08
        %v2275 = vadd.f32 %v2227, -2.5052108e-08
        %v2276 = vadd.f32 %v2228, -2.5052108e-08
        %v2277 = vadd.f32 %v2229, -2.5052108e-08
        %v2278 = vadd.f32 %v2230, -2.5052108e-08
        %v2279 = vadd.f32 %v2231, -2.5052108e-08
        %v2280 = vadd.f32 %v2232, -2.5052108e-08
        %v2281 = vadd.f32 %v2233, -2.5052108e-08
        %v2282 = vadd.f32 %v2234, -2.5052108e-08
        %v2283 = vadd.f32 %v2235, -2.5052108e-08
        %v2284 = vadd.f32 %v2236, -2.5052108e-08
        %v2285 = vadd.f32 %v2237, -2.5052108e-08
        %v2286 = vadd.f32 %v2238, -2.5052108e-08
        %v2287 = vadd.f32 %v2239, -2.5052108e-08
        %v2288 = vadd.f32 %v2240, -2.5052108e-08
        %v2289 = vadd.f32 %v2241, -2.5052108e-08
        %v2290 = vadd.f32 %v2242, -2.5052108e-08
        %v2291 = vadd.f32 %v2243, -2.5052108e-08
        %v2292 = vadd.f32 %v2244, -2.5052108e-08
        %v2293 = vadd.f32 %v2245, -2.5052108e-08
        %v2294 = vadd.f32 %v2246, -2.5052108e-08
        %v2295 = vmul.f32 %v2247, %v2151
        %v2296 = vmul.f32 %v2248, %v2152
        %v2297 = vmul.f32 %v2249, %v2153
        %v2298 = vmul.f32 %v2250, %v2154
        %v2299 = vmul.f32 %v2251, %v2155
        %v2300 = vmul.f32 %v2252, %v2156
        %v2301 = vmul.f32 %v2253, %v2157
        %v2302 = vmul.f32 %v2254, %v2158
        %v2303 = vmul.f32 %v2255, %v2159
        %v2304 = vmul.f32 %v2256, %v2160
        %v2305 = vmul.f32 %v2257, %v2161
        %v2306 = vmul.f32 %v2258, %v2162
        %v2307 = vmul.f32 %v2259, %v2163
        %v2308 = vmul.f32 %v2260, %v2164
        %v2309 = vmul.f32 %v2261, %v2165
        %v2310 = vmul.f32 %v2262, %v2166
        %v2311 = vmul.f32 %v2263, %v2167
        %v2312 = vmul.f32 %v2264, %v2168
        %v2313 = vmul.f32 %v2265, %v2169
        %v2314 = vmul.f32 %v2266, %v2170
        %v2315 = vmul.f32 %v2267, %v2171
        %v2316 = vmul.f32 %v2268, %v2172
        %v2317 = vmul.f32 %v2269, %v2173
        %v2318 = vmul.f32 %v2270, %v2174
        %v2319 = vmul.f32 %v2271, %v2175
        %v2320 = vmul.f32 %v2272, %v2176
        %v2321 = vmul.f32 %v2273, %v2177
        %v2322 = vmul.f32 %v2274, %v2178
        %v2323 = vmul.f32 %v2275, %v2179
        %v2324 = vmul.f32 %v2276, %v2180
        %v2325 = vmul.f32 %v2277, %v2181
        %v2326 = vmul.f32 %v2278, %v2182
        %v2327 = vmul.f32 %v2279, %v2183
        %v2328 = vmul.f32 %v2280, %v2184
        %v2329 = vmul.f32 %v2281, %v2185
        %v2330 = vmul.f32 %v2282, %v2186
        %v2331 = vmul.f32 %v2283, %v2187
        %v2332 = vmul.f32 %v2284, %v2188
        %v2333 = vmul.f32 %v2285, %v2189
        %v2334 = vmul.f32 %v2286, %v2190
        %v2335 = vmul.f32 %v2287, %v2191
        %v2336 = vmul.f32 %v2288, %v2192
        %v2337 = vmul.f32 %v2289, %v2193
        %v2338 = vmul.f32 %v2290, %v2194
        %v2339 = vmul.f32 %v2291, %v2195
        %v2340 = vmul.f32 %v2292, %v2196
        %v2341 = vmul.f32 %v2293, %v2197
        %v2342 = vmul.f32 %v2294, %v2198
        %v2343 = vadd.f32 %v2295, 2.7557319e-06
        %v2344 = vadd.f32 %v2296, 2.7557319e-06
        %v2345 = vadd.f32 %v2297, 2.7557319e-06
        %v2346 = vadd.f32 %v2298, 2.7557319e-06
        %v2347 = vadd.f32 %v2299, 2.7557319e-06
        %v2348 = vadd.f32 %v2300, 2.7557319e-06
        %v2349 = vadd.f32 %v2301, 2.7557319e-06
        %v2350 = vadd.f32 %v2302, 2.7557319e-06
        %v2351 = vadd.f32 %v2303, 2.7557319e-06
        %v2352 = vadd.f32 %v2304, 2.7557319e-06
        %v2353 = vadd.f32 %v2305, 2.7557319e-06
        %v2354 = vadd.f32 %v2306, 2.7557319e-06
        %v2355 = vadd.f32 %v2307, 2.7557319e-06
        %v2356 = vadd.f32 %v2308, 2.7557319e-06
        %v2357 = vadd.f32 %v2309, 2.7557319e-06
        %v2358 = vadd.f32 %v2310, 2.7557319e-06
        %v2359 = vadd.f32 %v2311, 2.7557319e-06
        %v2360 = vadd.f32 %v2312, 2.7557319e-06
        %v2361 = vadd.f32 %v2313, 2.7557319e-06
        %v2362 = vadd.f32 %v2314, 2.7557319e-06
        %v2363 = vadd.f32 %v2315, 2.7557319e-06
        %v2364 = vadd.f32 %v2316, 2.7557319e-06
        %v2365 = vadd.f32 %v2317, 2.7557319e-06
        %v2366 = vadd.f32 %v2318, 2.7557319e-06
        %v2367 = vadd.f32 %v2319, 2.7557319e-06
        %v2368 = vadd.f32 %v2320, 2.7557319e-06
        %v2369 = vadd.f32 %v2321, 2.7557319e-06
        %v2370 = vadd.f32 %v2322, 2.7557319e-06
        %v2371 = vadd.f32 %v2323, 2.7557319e-06
        %v2372 = vadd.f32 %v2324, 2.7557319e-06
        %v2373 = vadd.f32 %v2325, 2.7557319e-06
        %v2374 = vadd.f32 %v2326, 2.7557319e-06
        %v2375 = vadd.f32 %v2327, 2.7557319e-06
        %v2376 = vadd.f32 %v2328, 2.7557319e-06
        %v2377 = vadd.f32 %v2329, 2.7557319e-06
        %v2378 = vadd.f32 %v2330, 2.7557319e-06
        %v2379 = vadd.f32 %v2331, 2.7557319e-06
        %v2380 = vadd.f32 %v2332, 2.7557319e-06
        %v2381 = vadd.f32 %v2333, 2.7557319e-06
        %v2382 = vadd.f32 %v2334, 2.7557319e-06
        %v2383 = vadd.f32 %v2335, 2.7557319e-06
        %v2384 = vadd.f32 %v2336, 2.7557319e-06
        %v2385 = vadd.f32 %v2337, 2.7557319e-06
        %v2386 = vadd.f32 %v2338, 2.7557319e-06
        %v2387 = vadd.f32 %v2339, 2.7557319e-06
        %v2388 = vadd.f32 %v2340, 2.7557319e-06
        %v2389 = vadd.f32 %v2341, 2.7557319e-06
        %v2390 = vadd.f32 %v2342, 2.7557319e-06
        %v2391 = vmul.f32 %v2343, %v2151
        %v2392 = vmul.f32 %v2344, %v2152
        %v2393 = vmul.f32 %v2345, %v2153
        %v2394 = vmul.f32 %v2346, %v2154
        %v2395 = vmul.f32 %v2347, %v2155
        %v2396 = vmul.f32 %v2348, %v2156
        %v2397 = vmul.f32 %v2349, %v2157
        %v2398 = vmul.f32 %v2350, %v2158
        %v2399 = vmul.f32 %v2351, %v2159
        %v2400 = vmul.f32 %v2352, %v2160
        %v2401 = vmul.f32 %v2353, %v2161
        %v2402 = vmul.f32 %v2354, %v2162
        %v2403 = vmul.f32 %v2355, %v2163
        %v2404 = vmul.f32 %v2356, %v2164
        %v2405 = vmul.f32 %v2357, %v2165
        %v2406 = vmul.f32 %v2358, %v2166
        %v2407 = vmul.f32 %v2359, %v2167
        %v2408 = vmul.f32 %v2360, %v2168
        %v2409 = vmul.f32 %v2361, %v2169
        %v2410 = vmul.f32 %v2362, %v2170
        %v2411 = vmul.f32 %v2363, %v2171
        %v2412 = vmul.f32 %v2364, %v2172
        %v2413 = vmul.f32 %v2365, %v2173
        %v2414 = vmul.f32 %v2366, %v2174
        %v2415 = vmul.f32 %v2367, %v2175
        %v2416 = vmul.f32 %v2368, %v2176
        %v2417 = vmul.f32 %v2369, %v2177
        %v2418 = vmul.f32 %v2370, %v2178
        %v2419 = vmul.f32 %v2371, %v2179
        %v2420 = vmul.f32 %v2372, %v2180
        %v2421 = vmul.f32 %v2373, %v2181
        %v2422 = vmul.f32 %v2374, %v2182
        %v2423 = vmul.f32 %v2375, %v2183
        %v2424 = vmul.f32 %v2376, %v2184
        %v2425 = vmul.f32 %v2377, %v2185
        %v2426 = vmul.f32 %v2378, %v2186
        %v2427 = vmul.f32 %v2379, %v2187
        %v2428 = vmul.f32 %v2380, %v2188
        %v2429 = vmul.f32 %v2381, %v2189
        %v2430 = vmul.f32 %v2382, %v2190
        %v2431 = vmul.f32 %v2383, %v2191
        %v2432 = vmul.f32 %v2384, %v2192
        %v2433 = vmul.f32 %v2385, %v2193
        %v2434 = vmul.f32 %v2386, %v2194
        %v2435 = vmul.f32 %v2387, %v2195
        %v2436 = vmul.f32 %v2388, %v2196
        %v2437 = vmul.f32 %v2389, %v2197
        %v2438 = vmul.f32 %v2390, %v2198
        %v2439 = vadd.f32 %v2391, -0.0001984127
        %v2440 = vadd.f32 %v2392, -0.0001984127
        %v2441 = vadd.f32 %v2393, -0.0001984127
        %v2442 = vadd.f32 %v2394, -0.0001984127
        %v2443 = vadd.f32 %v2395, -0.0001984127
        %v2444 = vadd.f32 %v2396, -0.0001984127
        %v2445 = vadd.f32 %v2397, -0.0001984127
        %v2446 = vadd.f32 %v2398, -0.0001984127
        %v2447 = vadd.f32 %v2399, -0.0001984127
        %v2448 = vadd.f32 %v2400, -0.0001984127
        %v2449 = vadd.f32 %v2401, -0.0001984127
        %v2450 = vadd.f32 %v2402, -0.0001984127
        %v2451 = vadd.f32 %v2403, -0.0001984127
        %v2452 = vadd.f32 %v2404, -0.0001984127
        %v2453 = vadd.f32 %v2405, -0.0001984127
        %v2454 = vadd.f32 %v2406, -0.0001984127
        %v2455 = vadd.f32 %v2407, -0.0001984127
        %v2456 = vadd.f32 %v2408, -0.0001984127
        %v2457 = vadd.f32 %v2409, -0.0001984127
        %v2458 = vadd.f32 %v2410, -0.0001984127
        %v2459 = vadd.f32 %v2411, -0.0001984127
        %v2460 = vadd.f32 %v2412, -0.0001984127
        %v2461 = vadd.f32 %v2413, -0.0001984127
        %v2462 = vadd.f32 %v2414, -0.0001984127
        %v2463 = vadd.f32 %v2415, -0.0001984127
        %v2464 = vadd.f32 %v2416, -0.0001984127
        %v2465 = vadd.f32 %v2417, -0.0001984127
        %v2466 = vadd.f32 %v2418, -0.0001984127
        %v2467 = vadd.f32 %v2419, -0.0001984127
        %v2468 = vadd.f32 %v2420, -0.0001984127
        %v2469 = vadd.f32 %v2421, -0.0001984127
        %v2470 = vadd.f32 %v2422, -0.0001984127
        %v2471 = vadd.f32 %v2423, -0.0001984127
        %v2472 = vadd.f32 %v2424, -0.0001984127
        %v2473 = vadd.f32 %v2425, -0.0001984127
        %v2474 = vadd.f32 %v2426, -0.0001984127
        %v2475 = vadd.f32 %v2427, -0.0001984127
        %v2476 = vadd.f32 %v2428, -0.0001984127
        %v2477 = vadd.f32 %v2429, -0.0001984127
        %v2478 = vadd.f32 %v2430, -0.0001984127
        %v2479 = vadd.f32 %v2431, -0.0001984127
        %v2480 = vadd.f32 %v2432, -0.0001984127
        %v2481 = vadd.f32 %v2433, -0.0001984127
        %v2482 = vadd.f32 %v2434, -0.0001984127
        %v2483 = vadd.f32 %v2435, -0.0001984127
        %v2484 = vadd.f32 %v2436, -0.0001984127
        %v2485 = vadd.f32 %v2437, -0.0001984127
        %v2486 = vadd.f32 %v2438, -0.0001984127
        %v2487 = vmul.f32 %v2439, %v2151
        %v2488 = vmul.f32 %v2440, %v2152
        %v2489 = vmul.f32 %v2441, %v2153
        %v2490 = vmul.f32 %v2442, %v2154
        %v2491 = vmul.f32 %v2443, %v2155
        %v2492 = vmul.f32 %v2444, %v2156
        %v2493 = vmul.f32 %v2445, %v2157
        %v2494 = vmul.f32 %v2446, %v2158
        %v2495 = vmul.f32 %v2447, %v2159
        %v2496 = vmul.f32 %v2448, %v2160
        %v2497 = vmul.f32 %v2449, %v2161
        %v2498 = vmul.f32 %v2450, %v2162
        %v2499 = vmul.f32 %v2451, %v2163
        %v2500 = vmul.f32 %v2452, %v2164
        %v2501 = vmul.f32 %v2453, %v2165
        %v2502 = vmul.f32 %v2454, %v2166
        %v2503 = vmul.f32 %v2455, %v2167
        %v2504 = vmul.f32 %v2456, %v2168
        %v2505 = vmul.f32 %v2457, %v2169
        %v2506 = vmul.f32 %v2458, %v2170
        %v2507 = vmul.f32 %v2459, %v2171
        %v2508 = vmul.f32 %v2460, %v2172
        %v2509 = vmul.f32 %v2461, %v2173
        %v2510 = vmul.f32 %v2462, %v2174
        %v2511 = vmul.f32 %v2463, %v2175
        %v2512 = vmul.f32 %v2464, %v2176
        %v2513 = vmul.f32 %v2465, %v2177
        %v2514 = vmul.f32 %v2466, %v2178
        %v2515 = vmul.f32 %v2467, %v2179
        %v2516 = vmul.f32 %v2468, %v2180
        %v2517 = vmul.f32 %v2469, %v2181
        %v2518 = vmul.f32 %v2470, %v2182
        %v2519 = vmul.f32 %v2471, %v2183
        %v2520 = vmul.f32 %v2472, %v2184
        %v2521 = vmul.f32 %v2473, %v2185
        %v2522 = vmul.f32 %v2474, %v2186
        %v2523 = vmul.f32 %v2475, %v2187
        %v2524 = vmul.f32 %v2476, %v2188
        %v2525 = vmul.f32 %v2477, %v2189
        %v2526 = vmul.f32 %v2478, %v2190
        %v2527 = vmul.f32 %v2479, %v2191
        %v2528 = vmul.f32 %v2480, %v2192
        %v2529 = vmul.f32 %v2481, %v2193
        %v2530 = vmul.f32 %v2482, %v2194
        %v2531 = vmul.f32 %v2483, %v2195
        %v2532 = vmul.f32 %v2484, %v2196
        %v2533 = vmul.f32 %v2485, %v2197
        %v2534 = vmul.f32 %v2486, %v2198
        %v2535 = vadd.f32 %v2487, 0.008333334
        %v2536 = vadd.f32 %v2488, 0.008333334
        %v2537 = vadd.f32 %v2489, 0.008333334
        %v2538 = vadd.f32 %v2490, 0.008333334
        %v2539 = vadd.f32 %v2491, 0.008333334
        %v2540 = vadd.f32 %v2492, 0.008333334
        %v2541 = vadd.f32 %v2493, 0.008333334
        %v2542 = vadd.f32 %v2494, 0.008333334
        %v2543 = vadd.f32 %v2495, 0.008333334
        %v2544 = vadd.f32 %v2496, 0.008333334
        %v2545 = vadd.f32 %v2497, 0.008333334
        %v2546 = vadd.f32 %v2498, 0.008333334
        %v2547 = vadd.f32 %v2499, 0.008333334
        %v2548 = vadd.f32 %v2500, 0.008333334
        %v2549 = vadd.f32 %v2501, 0.008333334
        %v2550 = vadd.f32 %v2502, 0.008333334
        %v2551 = vadd.f32 %v2503, 0.008333334
        %v2552 = vadd.f32 %v2504, 0.008333334
        %v2553 = vadd.f32 %v2505, 0.008333334
        %v2554 = vadd.f32 %v2506, 0.008333334
        %v2555 = vadd.f32 %v2507, 0.008333334
        %v2556 = vadd.f32 %v2508, 0.008333334
        %v2557 = vadd.f32 %v2509, 0.008333334
        %v2558 = vadd.f32 %v2510, 0.008333334
        %v2559 = vadd.f32 %v2511, 0.008333334
        %v2560 = vadd.f32 %v2512, 0.008333334
        %v2561 = vadd.f32 %v2513, 0.008333334
        %v2562 = vadd.f32 %v2514, 0.008333334
        %v2563 = vadd.f32 %v2515, 0.008333334
        %v2564 = vadd.f32 %v2516, 0.008333334
        %v2565 = vadd.f32 %v2517, 0.008333334
        %v2566 = vadd.f32 %v2518, 0.008333334
        %v2567 = vadd.f32 %v2519, 0.008333334
        %v2568 = vadd.f32 %v2520, 0.008333334
        %v2569 = vadd.f32 %v2521, 0.008333334
        %v2570 = vadd.f32 %v2522, 0.008333334
        %v2571 = vadd.f32 %v2523, 0.008333334
        %v2572 = vadd.f32 %v2524, 0.008333334
        %v2573 = vadd.f32 %v2525, 0.008333334
        %v2574 = vadd.f32 %v2526, 0.008333334
        %v2575 = vadd.f32 %v2527, 0.008333334
        %v2576 = vadd.f32 %v2528, 0.008333334
        %v2577 = vadd.f32 %v2529, 0.008333334
        %v2578 = vadd.f32 %v2530, 0.008333334
        %v2579 = vadd.f32 %v2531, 0.008333334
        %v2580 = vadd.f32 %v2532, 0.008333334
        %v2581 = vadd.f32 %v2533, 0.008333334
        %v2582 = vadd.f32 %v2534, 0.008333334
        %v2583 = vmul.f32 %v2535, %v2151
        %v2584 = vmul.f32 %v2536, %v2152
        %v2585 = vmul.f32 %v2537, %v2153
        %v2586 = vmul.f32 %v2538, %v2154
        %v2587 = vmul.f32 %v2539, %v2155
        %v2588 = vmul.f32 %v2540, %v2156
        %v2589 = vmul.f32 %v2541, %v2157
        %v2590 = vmul.f32 %v2542, %v2158
        %v2591 = vmul.f32 %v2543, %v2159
        %v2592 = vmul.f32 %v2544, %v2160
        %v2593 = vmul.f32 %v2545, %v2161
        %v2594 = vmul.f32 %v2546, %v2162
        %v2595 = vmul.f32 %v2547, %v2163
        %v2596 = vmul.f32 %v2548, %v2164
        %v2597 = vmul.f32 %v2549, %v2165
        %v2598 = vmul.f32 %v2550, %v2166
        %v2599 = vmul.f32 %v2551, %v2167
        %v2600 = vmul.f32 %v2552, %v2168
        %v2601 = vmul.f32 %v2553, %v2169
        %v2602 = vmul.f32 %v2554, %v2170
        %v2603 = vmul.f32 %v2555, %v2171
        %v2604 = vmul.f32 %v2556, %v2172
        %v2605 = vmul.f32 %v2557, %v2173
        %v2606 = vmul.f32 %v2558, %v2174
        %v2607 = vmul.f32 %v2559, %v2175
        %v2608 = vmul.f32 %v2560, %v2176
        %v2609 = vmul.f32 %v2561, %v2177
        %v2610 = vmul.f32 %v2562, %v2178
        %v2611 = vmul.f32 %v2563, %v2179
        %v2612 = vmul.f32 %v2564, %v2180
        %v2613 = vmul.f32 %v2565, %v2181
        %v2614 = vmul.f32 %v2566, %v2182
        %v2615 = vmul.f32 %v2567, %v2183
        %v2616 = vmul.f32 %v2568, %v2184
        %v2617 = vmul.f32 %v2569, %v2185
        %v2618 = vmul.f32 %v2570, %v2186
        %v2619 = vmul.f32 %v2571, %v2187
        %v2620 = vmul.f32 %v2572, %v2188
        %v2621 = vmul.f32 %v2573, %v2189
        %v2622 = vmul.f32 %v2574, %v2190
        %v2623 = vmul.f32 %v2575, %v2191
        %v2624 = vmul.f32 %v2576, %v2192
        %v2625 = vmul.f32 %v2577, %v2193
        %v2626 = vmul.f32 %v2578, %v2194
        %v2627 = vmul.f32 %v2579, %v2195
        %v2628 = vmul.f32 %v2580, %v2196
        %v2629 = vmul.f32 %v2581, %v2197
        %v2630 = vmul.f32 %v2582, %v2198
        %v2631 = vadd.f32 %v2583, -0.16666667
        %v2632 = vadd.f32 %v2584, -0.16666667
        %v2633 = vadd.f32 %v2585, -0.16666667
        %v2634 = vadd.f32 %v2586, -0.16666667
        %v2635 = vadd.f32 %v2587, -0.16666667
        %v2636 = vadd.f32 %v2588, -0.16666667
        %v2637 = vadd.f32 %v2589, -0.16666667
        %v2638 = vadd.f32 %v2590, -0.16666667
        %v2639 = vadd.f32 %v2591, -0.16666667
        %v2640 = vadd.f32 %v2592, -0.16666667
        %v2641 = vadd.f32 %v2593, -0.16666667
        %v2642 = vadd.f32 %v2594, -0.16666667
        %v2643 = vadd.f32 %v2595, -0.16666667
        %v2644 = vadd.f32 %v2596, -0.16666667
        %v2645 = vadd.f32 %v2597, -0.16666667
        %v2646 = vadd.f32 %v2598, -0.16666667
        %v2647 = vadd.f32 %v2599, -0.16666667
        %v2648 = vadd.f32 %v2600, -0.16666667
        %v2649 = vadd.f32 %v2601, -0.16666667
        %v2650 = vadd.f32 %v2602, -0.16666667
        %v2651 = vadd.f32 %v2603, -0.16666667
        %v2652 = vadd.f32 %v2604, -0.16666667
        %v2653 = vadd.f32 %v2605, -0.16666667
        %v2654 = vadd.f32 %v2606, -0.16666667
        %v2655 = vadd.f32 %v2607, -0.16666667
        %v2656 = vadd.f32 %v2608, -0.16666667
        %v2657 = vadd.f32 %v2609, -0.16666667
        %v2658 = vadd.f32 %v2610, -0.16666667
        %v2659 = vadd.f32 %v2611, -0.16666667
        %v2660 = vadd.f32 %v2612, -0.16666667
        %v2661 = vadd.f32 %v2613, -0.16666667
        %v2662 = vadd.f32 %v2614, -0.16666667
        %v2663 = vadd.f32 %v2615, -0.16666667
        %v2664 = vadd.f32 %v2616, -0.16666667
        %v2665 = vadd.f32 %v2617, -0.16666667
        %v2666 = vadd.f32 %v2618, -0.16666667
        %v2667 = vadd.f32 %v2619, -0.16666667
        %v2668 = vadd.f32 %v2620, -0.16666667
        %v2669 = vadd.f32 %v2621, -0.16666667
        %v2670 = vadd.f32 %v2622, -0.16666667
        %v2671 = vadd.f32 %v2623, -0.16666667
        %v2672 = vadd.f32 %v2624, -0.16666667
        %v2673 = vadd.f32 %v2625, -0.16666667
        %v2674 = vadd.f32 %v2626, -0.16666667
        %v2675 = vadd.f32 %v2627, -0.16666667
        %v2676 = vadd.f32 %v2628, -0.16666667
        %v2677 = vadd.f32 %v2629, -0.16666667
        %v2678 = vadd.f32 %v2630, -0.16666667
        %v2679 = vmul.f32 %v2631, %v2151
        %v2680 = vmul.f32 %v2632, %v2152
        %v2681 = vmul.f32 %v2633, %v2153
        %v2682 = vmul.f32 %v2634, %v2154
        %v2683 = vmul.f32 %v2635, %v2155
        %v2684 = vmul.f32 %v2636, %v2156
        %v2685 = vmul.f32 %v2637, %v2157
        %v2686 = vmul.f32 %v2638, %v2158
        %v2687 = vmul.f32 %v2639, %v2159
        %v2688 = vmul.f32 %v2640, %v2160
        %v2689 = vmul.f32 %v2641, %v2161
        %v2690 = vmul.f32 %v2642, %v2162
        %v2691 = vmul.f32 %v2643, %v2163
        %v2692 = vmul.f32 %v2644, %v2164
        %v2693 = vmul.f32 %v2645, %v2165
        %v2694 = vmul.f32 %v2646, %v2166
        %v2695 = vmul.f32 %v2647, %v2167
        %v2696 = vmul.f32 %v2648, %v2168
        %v2697 = vmul.f32 %v2649, %v2169
        %v2698 = vmul.f32 %v2650, %v2170
        %v2699 = vmul.f32 %v2651, %v2171
        %v2700 = vmul.f32 %v2652, %v2172
        %v2701 = vmul.f32 %v2653, %v2173
        %v2702 = vmul.f32 %v2654, %v2174
        %v2703 = vmul.f32 %v2655, %v2175
        %v2704 = vmul.f32 %v2656, %v2176
        %v2705 = vmul.f32 %v2657, %v2177
        %v2706 = vmul.f32 %v2658, %v2178
        %v2707 = vmul.f32 %v2659, %v2179
        %v2708 = vmul.f32 %v2660, %v2180
        %v2709 = vmul.f32 %v2661, %v2181
        %v2710 = vmul.f32 %v2662, %v2182
        %v2711 = vmul.f32 %v2663, %v2183
        %v2712 = vmul.f32 %v2664, %v2184
        %v2713 = vmul.f32 %v2665, %v2185
        %v2714 = vmul.f32 %v2666, %v2186
        %v2715 = vmul.f32 %v2667, %v2187
        %v2716 = vmul.f32 %v2668, %v2188
        %v2717 = vmul.f32 %v2669, %v2189
        %v2718 = vmul.f32 %v2670, %v2190
        %v2719 = vmul.f32 %v2671, %v2191
        %v2720 = vmul.f32 %v2672, %v2192
        %v2721 = vmul.f32 %v2673, %v2193
        %v2722 = vmul.f32 %v2674, %v2194
        %v2723 = vmul.f32 %v2675, %v2195
        %v2724 = vmul.f32 %v2676, %v2196
        %v2725 = vmul.f32 %v2677, %v2197
        %v2726 = vmul.f32 %v2678, %v2198
        %v2727 = vadd.f32 %v2679, 1.0
        %v2728 = vadd.f32 %v2680, 1.0
        %v2729 = vadd.f32 %v2681, 1.0
        %v2730 = vadd.f32 %v2682, 1.0
        %v2731 = vadd.f32 %v2683, 1.0
        %v2732 = vadd.f32 %v2684, 1.0
        %v2733 = vadd.f32 %v2685, 1.0
        %v2734 = vadd.f32 %v2686, 1.0
        %v2735 = vadd.f32 %v2687, 1.0
        %v2736 = vadd.f32 %v2688, 1.0
        %v2737 = vadd.f32 %v2689, 1.0
        %v2738 = vadd.f32 %v2690, 1.0
        %v2739 = vadd.f32 %v2691, 1.0
        %v2740 = vadd.f32 %v2692, 1.0
        %v2741 = vadd.f32 %v2693, 1.0
        %v2742 = vadd.f32 %v2694, 1.0
        %v2743 = vadd.f32 %v2695, 1.0
        %v2744 = vadd.f32 %v2696, 1.0
        %v2745 = vadd.f32 %v2697, 1.0
        %v2746 = vadd.f32 %v2698, 1.0
        %v2747 = vadd.f32 %v2699, 1.0
        %v2748 = vadd.f32 %v2700, 1.0
        %v2749 = vadd.f32 %v2701, 1.0
        %v2750 = vadd.f32 %v2702, 1.0
        %v2751 = vadd.f32 %v2703, 1.0
        %v2752 = vadd.f32 %v2704, 1.0
        %v2753 = vadd.f32 %v2705, 1.0
        %v2754 = vadd.f32 %v2706, 1.0
        %v2755 = vadd.f32 %v2707, 1.0
        %v2756 = vadd.f32 %v2708, 1.0
        %v2757 = vadd.f32 %v2709, 1.0
        %v2758 = vadd.f32 %v2710, 1.0
        %v2759 = vadd.f32 %v2711, 1.0
        %v2760 = vadd.f32 %v2712, 1.0
        %v2761 = vadd.f32 %v2713, 1.0
        %v2762 = vadd.f32 %v2714, 1.0
        %v2763 = vadd.f32 %v2715, 1.0
        %v2764 = vadd.f32 %v2716, 1.0
        %v2765 = vadd.f32 %v2717, 1.0
        %v2766 = vadd.f32 %v2718, 1.0
        %v2767 = vadd.f32 %v2719, 1.0
        %v2768 = vadd.f32 %v2720, 1.0
        %v2769 = vadd.f32 %v2721, 1.0
        %v2770 = vadd.f32 %v2722, 1.0
        %v2771 = vadd.f32 %v2723, 1.0
        %v2772 = vadd.f32 %v2724, 1.0
        %v2773 = vadd.f32 %v2725, 1.0
        %v2774 = vadd.f32 %v2726, 1.0
        %v2775 = vmul.f32 %v2103, %v2727
        %v2776 = vmul.f32 %v2104, %v2728
        %v2777 = vmul.f32 %v2105, %v2729
        %v2778 = vmul.f32 %v2106, %v2730
        %v2779 = vmul.f32 %v2107, %v2731
        %v2780 = vmul.f32 %v2108, %v2732
        %v2781 = vmul.f32 %v2109, %v2733
        %v2782 = vmul.f32 %v2110, %v2734
        %v2783 = vmul.f32 %v2111, %v2735
        %v2784 = vmul.f32 %v2112, %v2736
        %v2785 = vmul.f32 %v2113, %v2737
        %v2786 = vmul.f32 %v2114, %v2738
        %v2787 = vmul.f32 %v2115, %v2739
        %v2788 = vmul.f32 %v2116, %v2740
        %v2789 = vmul.f32 %v2117, %v2741
        %v2790 = vmul.f32 %v2118, %v2742
        %v2791 = vmul.f32 %v2119, %v2743
        %v2792 = vmul.f32 %v2120, %v2744
        %v2793 = vmul.f32 %v2121, %v2745
        %v2794 = vmul.f32 %v2122, %v2746
        %v2795 = vmul.f32 %v2123, %v2747
        %v2796 = vmul.f32 %v2124, %v2748
        %v2797 = vmul.f32 %v2125, %v2749
        %v2798 = vmul.f32 %v2126, %v2750
        %v2799 = vmul.f32 %v2127, %v2751
        %v2800 = vmul.f32 %v2128, %v2752
        %v2801 = vmul.f32 %v2129, %v2753
        %v2802 = vmul.f32 %v2130, %v2754
        %v2803 = vmul.f32 %v2131, %v2755
        %v2804 = vmul.f32 %v2132, %v2756
        %v2805 = vmul.f32 %v2133, %v2757
        %v2806 = vmul.f32 %v2134, %v2758
        %v2807 = vmul.f32 %v2135, %v2759
        %v2808 = vmul.f32 %v2136, %v2760
        %v2809 = vmul.f32 %v2137, %v2761
        %v2810 = vmul.f32 %v2138, %v2762
        %v2811 = vmul.f32 %v2139, %v2763
        %v2812 = vmul.f32 %v2140, %v2764
        %v2813 = vmul.f32 %v2141, %v2765
        %v2814 = vmul.f32 %v2142, %v2766
        %v2815 = vmul.f32 %v2143, %v2767
        %v2816 = vmul.f32 %v2144, %v2768
        %v2817 = vmul.f32 %v2145, %v2769
        %v2818 = vmul.f32 %v2146, %v2770
        %v2819 = vmul.f32 %v2147, %v2771
        %v2820 = vmul.f32 %v2148, %v2772
        %v2821 = vmul.f32 %v2149, %v2773
        %v2822 = vmul.f32 %v2150, %v2774
      $region57: #{implicit_generator_forward.1} parent=51 // loop_footer
        %s1438 = sadd.s32 1, %s1434
      $region58: #{implicit_generator_forward.1} parent=51 // loop_footer_branch
        %1433 = sbr.rel target = $region54
      $region59: #{implicit_generator_forward.1} parent=51 // loop_exit
        _
      %v2823 = vld [vmem:[%s4] sm:$0xf]
      %v2824 = vld [vmem:[%s4 + $0x4] sm:$0xf]
      %v2825 = vld [vmem:[%s4 + $0x8] sm:$0xf]
      %v2826 = vld [vmem:[%s4 + $0xc] sm:$0xf]
      %v2827 = vld [vmem:[%s4 + $0x10] sm:$0x1]
      %v2828 = vpack.c.bf16 %v1451, %v1439
      %v2829 = vpack.c.bf16 %v1452, %v1440
      %v2830 = vpack.c.bf16 %v1453, %v1441
      %v2831 = vpack.c.bf16 %v1454, %v1442
      %v2832 = vpack.c.bf16 %v1455, %v1443
      %v2833 = vpack.c.bf16 %v1456, %v1444
      %v2834 = vpack.c.bf16 %v1457, %v1445
      %v2835 = vpack.c.bf16 %v1458, %v1446
      %v2836 = vpack.c.bf16 %v1459, %v1447
      %v2837 = vpack.c.bf16 %v1460, %v1448
      %v2838 = vpack.c.bf16 %v1461, %v1449
      %v2839 = vpack.c.bf16 %v1462, %v1450
      %v2840 = vpack.c.bf16 %v1475, %v1463
      %v2841 = vpack.c.bf16 %v1476, %v1464
      %v2842 = vpack.c.bf16 %v1477, %v1465
      %v2843 = vpack.c.bf16 %v1478, %v1466
      %v2844 = vpack.c.bf16 %v1479, %v1467
      %v2845 = vpack.c.bf16 %v1480, %v1468
      %v2846 = vpack.c.bf16 %v1481, %v1469
      %v2847 = vpack.c.bf16 %v1482, %v1470
      %v2848 = vpack.c.bf16 %v1483, %v1471
      %v2849 = vpack.c.bf16 %v1484, %v1472
      %v2850 = vpack.c.bf16 %v1485, %v1473
      %v2851 = vpack.c.bf16 %v1486, %v1474
      %v2857 = vunpack.c.l.b16 %v2823
      %v2858 = vunpack.c.l.b16 %v2824
      %v2859 = vunpack.c.l.b16 %v2825
      %v2860 = vunpack.c.l.b16 %v2826
      %v2861 = vunpack.c.l.b16 %v2827
      %v2862 = vpack.c.b16 %v2858, %v2857
      %v2863 = vpack.c.b16 %v2860, %v2859
      %v2864 = vpack.c.b16 %v2861, %v2861
      %vm2865 = vcmask 261120
      %v2867 = vsel %vm2865, %v2862, 0
      %v2870 = vsel %vm2865, %v2863, 0
      %v2873 = vsel %vm2865, %v2864, 0
      %2875 = vmatpush.bf16.msra.mxu0 0
      %2876 = vmatpush.bf16.msra.mxu0 0
      %2877 = vmatpush.bf16.msra.mxu0 0
      %2878 = vmatpush.bf16.msra.mxu0 0
      %2879 = vmatpush.bf16.msra.mxu0 0
      %2880 = vmatpush.bf16.msra.mxu0 0
      %2881 = vmatpush.bf16.msra.mxu0 %v2840
      %2882 = vmatpush.bf16.msra.mxu0 %v2828
      %2883 = vmatmul.bf16.gmra.mxu0 %v2867
      %v2884 = vpop.f32.mrf.mxu0
      %v2885 = vadd.f32 0.0, %v2884
      %v2886 = vpop.f32.mrf.mxu0
      %v2887 = vadd.f32 0.0, %v2886
      %2888 = vmatmul.bf16.gmra.mxu0 %v2870
      %v2889 = vpop.f32.mrf.mxu0
      %v2890 = vadd.f32 0.0, %v2889
      %v2891 = vpop.f32.mrf.mxu0
      %v2892 = vadd.f32 0.0, %v2891
      %2893 = vmatmul.bf16.gmra.mxu0 %v2873
      %v2894 = vpop.f32.mrf.mxu0
      %v2895 = vadd.f32 0.0, %v2894
      %v2896 = vpop.f32.mrf.mxu0
      %2897 = vdwg.mxu0
      %2898 = vmatpush.bf16.msra.mxu0 0
      %2899 = vmatpush.bf16.msra.mxu0 0
      %2900 = vmatpush.bf16.msra.mxu0 0
      %2901 = vmatpush.bf16.msra.mxu0 0
      %2902 = vmatpush.bf16.msra.mxu0 0
      %2903 = vmatpush.bf16.msra.mxu0 0
      %2904 = vmatpush.bf16.msra.mxu0 %v2841
      %2905 = vmatpush.bf16.msra.mxu0 %v2829
      %2906 = vmatmul.bf16.gmra.mxu0 %v2867
      %v2907 = vpop.f32.mrf.mxu0
      %v2908 = vadd.f32 0.0, %v2907
      %v2909 = vpop.f32.mrf.mxu0
      %v2910 = vadd.f32 0.0, %v2909
      %2911 = vmatmul.bf16.gmra.mxu0 %v2870
      %v2912 = vpop.f32.mrf.mxu0
      %v2913 = vadd.f32 0.0, %v2912
      %v2914 = vpop.f32.mrf.mxu0
      %v2915 = vadd.f32 0.0, %v2914
      %2916 = vmatmul.bf16.gmra.mxu0 %v2873
      %v2917 = vpop.f32.mrf.mxu0
      %v2918 = vadd.f32 0.0, %v2917
      %v2919 = vpop.f32.mrf.mxu0
      %2920 = vdwg.mxu0
      %2921 = vmatpush.bf16.msra.mxu0 0
      %2922 = vmatpush.bf16.msra.mxu0 0
      %2923 = vmatpush.bf16.msra.mxu0 0
      %2924 = vmatpush.bf16.msra.mxu0 0
      %2925 = vmatpush.bf16.msra.mxu0 0
      %2926 = vmatpush.bf16.msra.mxu0 0
      %2927 = vmatpush.bf16.msra.mxu0 %v2842
      %2928 = vmatpush.bf16.msra.mxu0 %v2830
      %2929 = vmatmul.bf16.gmra.mxu0 %v2867
      %v2930 = vpop.f32.mrf.mxu0
      %v2931 = vadd.f32 0.0, %v2930
      %v2932 = vpop.f32.mrf.mxu0
      %v2933 = vadd.f32 0.0, %v2932
      %2934 = vmatmul.bf16.gmra.mxu0 %v2870
      %v2935 = vpop.f32.mrf.mxu0
      %v2936 = vadd.f32 0.0, %v2935
      %v2937 = vpop.f32.mrf.mxu0
      %v2938 = vadd.f32 0.0, %v2937
      %2939 = vmatmul.bf16.gmra.mxu0 %v2873
      %v2940 = vpop.f32.mrf.mxu0
      %v2941 = vadd.f32 0.0, %v2940
      %v2942 = vpop.f32.mrf.mxu0
      %2943 = vdwg.mxu0
      %2944 = vmatpush.bf16.msra.mxu0 0
      %2945 = vmatpush.bf16.msra.mxu0 0
      %2946 = vmatpush.bf16.msra.mxu0 0
      %2947 = vmatpush.bf16.msra.mxu0 0
      %2948 = vmatpush.bf16.msra.mxu0 0
      %2949 = vmatpush.bf16.msra.mxu0 0
      %2950 = vmatpush.bf16.msra.mxu0 %v2843
      %2951 = vmatpush.bf16.msra.mxu0 %v2831
      %2952 = vmatmul.bf16.gmra.mxu0 %v2867
      %v2953 = vpop.f32.mrf.mxu0
      %v2954 = vadd.f32 0.0, %v2953
      %v2955 = vpop.f32.mrf.mxu0
      %v2956 = vadd.f32 0.0, %v2955
      %2957 = vmatmul.bf16.gmra.mxu0 %v2870
      %v2958 = vpop.f32.mrf.mxu0
      %v2959 = vadd.f32 0.0, %v2958
      %v2960 = vpop.f32.mrf.mxu0
      %v2961 = vadd.f32 0.0, %v2960
      %2962 = vmatmul.bf16.gmra.mxu0 %v2873
      %v2963 = vpop.f32.mrf.mxu0
      %v2964 = vadd.f32 0.0, %v2963
      %v2965 = vpop.f32.mrf.mxu0
      %2966 = vdwg.mxu0
      %2967 = vmatpush.bf16.msra.mxu0 0
      %2968 = vmatpush.bf16.msra.mxu0 0
      %2969 = vmatpush.bf16.msra.mxu0 0
      %2970 = vmatpush.bf16.msra.mxu0 0
      %2971 = vmatpush.bf16.msra.mxu0 0
      %2972 = vmatpush.bf16.msra.mxu0 0
      %2973 = vmatpush.bf16.msra.mxu0 %v2844
      %2974 = vmatpush.bf16.msra.mxu0 %v2832
      %2975 = vmatmul.bf16.gmra.mxu0 %v2867
      %v2976 = vpop.f32.mrf.mxu0
      %v2977 = vadd.f32 0.0, %v2976
      %v2978 = vpop.f32.mrf.mxu0
      %v2979 = vadd.f32 0.0, %v2978
      %2980 = vmatmul.bf16.gmra.mxu0 %v2870
      %v2981 = vpop.f32.mrf.mxu0
      %v2982 = vadd.f32 0.0, %v2981
      %v2983 = vpop.f32.mrf.mxu0
      %v2984 = vadd.f32 0.0, %v2983
      %2985 = vmatmul.bf16.gmra.mxu0 %v2873
      %v2986 = vpop.f32.mrf.mxu0
      %v2987 = vadd.f32 0.0, %v2986
      %v2988 = vpop.f32.mrf.mxu0
      %2989 = vdwg.mxu0
      %2990 = vmatpush.bf16.msra.mxu0 0
      %2991 = vmatpush.bf16.msra.mxu0 0
      %2992 = vmatpush.bf16.msra.mxu0 0
      %2993 = vmatpush.bf16.msra.mxu0 0
      %2994 = vmatpush.bf16.msra.mxu0 0
      %2995 = vmatpush.bf16.msra.mxu0 0
      %2996 = vmatpush.bf16.msra.mxu0 %v2845
      %2997 = vmatpush.bf16.msra.mxu0 %v2833
      %2998 = vmatmul.bf16.gmra.mxu0 %v2867
      %v2999 = vpop.f32.mrf.mxu0
      %v3000 = vadd.f32 0.0, %v2999
      %v3001 = vpop.f32.mrf.mxu0
      %v3002 = vadd.f32 0.0, %v3001
      %3003 = vmatmul.bf16.gmra.mxu0 %v2870
      %v3004 = vpop.f32.mrf.mxu0
      %v3005 = vadd.f32 0.0, %v3004
      %v3006 = vpop.f32.mrf.mxu0
      %v3007 = vadd.f32 0.0, %v3006
      %3008 = vmatmul.bf16.gmra.mxu0 %v2873
      %v3009 = vpop.f32.mrf.mxu0
      %v3010 = vadd.f32 0.0, %v3009
      %v3011 = vpop.f32.mrf.mxu0
      %3012 = vdwg.mxu0
      %3013 = vmatpush.bf16.msra.mxu0 0
      %3014 = vmatpush.bf16.msra.mxu0 0
      %3015 = vmatpush.bf16.msra.mxu0 0
      %3016 = vmatpush.bf16.msra.mxu0 0
      %3017 = vmatpush.bf16.msra.mxu0 0
      %3018 = vmatpush.bf16.msra.mxu0 0
      %3019 = vmatpush.bf16.msra.mxu0 %v2846
      %3020 = vmatpush.bf16.msra.mxu0 %v2834
      %3021 = vmatmul.bf16.gmra.mxu0 %v2867
      %v3022 = vpop.f32.mrf.mxu0
      %v3023 = vadd.f32 0.0, %v3022
      %v3024 = vpop.f32.mrf.mxu0
      %v3025 = vadd.f32 0.0, %v3024
      %3026 = vmatmul.bf16.gmra.mxu0 %v2870
      %v3027 = vpop.f32.mrf.mxu0
      %v3028 = vadd.f32 0.0, %v3027
      %v3029 = vpop.f32.mrf.mxu0
      %v3030 = vadd.f32 0.0, %v3029
      %3031 = vmatmul.bf16.gmra.mxu0 %v2873
      %v3032 = vpop.f32.mrf.mxu0
      %v3033 = vadd.f32 0.0, %v3032
      %v3034 = vpop.f32.mrf.mxu0
      %3035 = vdwg.mxu0
      %3036 = vmatpush.bf16.msra.mxu0 0
      %3037 = vmatpush.bf16.msra.mxu0 0
      %3038 = vmatpush.bf16.msra.mxu0 0
      %3039 = vmatpush.bf16.msra.mxu0 0
      %3040 = vmatpush.bf16.msra.mxu0 0
      %3041 = vmatpush.bf16.msra.mxu0 0
      %3042 = vmatpush.bf16.msra.mxu0 %v2847
      %3043 = vmatpush.bf16.msra.mxu0 %v2835
      %3044 = vmatmul.bf16.gmra.mxu0 %v2867
      %v3045 = vpop.f32.mrf.mxu0
      %v3046 = vadd.f32 0.0, %v3045
      %v3047 = vpop.f32.mrf.mxu0
      %v3048 = vadd.f32 0.0, %v3047
      %3049 = vmatmul.bf16.gmra.mxu0 %v2870
      %v3050 = vpop.f32.mrf.mxu0
      %v3051 = vadd.f32 0.0, %v3050
      %v3052 = vpop.f32.mrf.mxu0
      %v3053 = vadd.f32 0.0, %v3052
      %3054 = vmatmul.bf16.gmra.mxu0 %v2873
      %v3055 = vpop.f32.mrf.mxu0
      %v3056 = vadd.f32 0.0, %v3055
      %v3057 = vpop.f32.mrf.mxu0
      %3058 = vdwg.mxu0
      %3059 = vmatpush.bf16.msra.mxu0 0
      %3060 = vmatpush.bf16.msra.mxu0 0
      %3061 = vmatpush.bf16.msra.mxu0 0
      %3062 = vmatpush.bf16.msra.mxu0 0
      %3063 = vmatpush.bf16.msra.mxu0 0
      %3064 = vmatpush.bf16.msra.mxu0 0
      %3065 = vmatpush.bf16.msra.mxu0 %v2848
      %3066 = vmatpush.bf16.msra.mxu0 %v2836
      %3067 = vmatmul.bf16.gmra.mxu0 %v2867
      %v3068 = vpop.f32.mrf.mxu0
      %v3069 = vadd.f32 0.0, %v3068
      %v3070 = vpop.f32.mrf.mxu0
      %v3071 = vadd.f32 0.0, %v3070
      %3072 = vmatmul.bf16.gmra.mxu0 %v2870
      %v3073 = vpop.f32.mrf.mxu0
      %v3074 = vadd.f32 0.0, %v3073
      %v3075 = vpop.f32.mrf.mxu0
      %v3076 = vadd.f32 0.0, %v3075
      %3077 = vmatmul.bf16.gmra.mxu0 %v2873
      %v3078 = vpop.f32.mrf.mxu0
      %v3079 = vadd.f32 0.0, %v3078
      %v3080 = vpop.f32.mrf.mxu0
      %3081 = vdwg.mxu0
      %3082 = vmatpush.bf16.msra.mxu0 0
      %3083 = vmatpush.bf16.msra.mxu0 0
      %3084 = vmatpush.bf16.msra.mxu0 0
      %3085 = vmatpush.bf16.msra.mxu0 0
      %3086 = vmatpush.bf16.msra.mxu0 0
      %3087 = vmatpush.bf16.msra.mxu0 0
      %3088 = vmatpush.bf16.msra.mxu0 %v2849
      %3089 = vmatpush.bf16.msra.mxu0 %v2837
      %3090 = vmatmul.bf16.gmra.mxu0 %v2867
      %v3091 = vpop.f32.mrf.mxu0
      %v3092 = vadd.f32 0.0, %v3091
      %v3093 = vpop.f32.mrf.mxu0
      %v3094 = vadd.f32 0.0, %v3093
      %3095 = vmatmul.bf16.gmra.mxu0 %v2870
      %v3096 = vpop.f32.mrf.mxu0
      %v3097 = vadd.f32 0.0, %v3096
      %v3098 = vpop.f32.mrf.mxu0
      %v3099 = vadd.f32 0.0, %v3098
      %3100 = vmatmul.bf16.gmra.mxu0 %v2873
      %v3101 = vpop.f32.mrf.mxu0
      %v3102 = vadd.f32 0.0, %v3101
      %v3103 = vpop.f32.mrf.mxu0
      %3104 = vdwg.mxu0
      %3105 = vmatpush.bf16.msra.mxu0 0
      %3106 = vmatpush.bf16.msra.mxu0 0
      %3107 = vmatpush.bf16.msra.mxu0 0
      %3108 = vmatpush.bf16.msra.mxu0 0
      %3109 = vmatpush.bf16.msra.mxu0 0
      %3110 = vmatpush.bf16.msra.mxu0 0
      %3111 = vmatpush.bf16.msra.mxu0 %v2850
      %3112 = vmatpush.bf16.msra.mxu0 %v2838
      %3113 = vmatmul.bf16.gmra.mxu0 %v2867
      %v3114 = vpop.f32.mrf.mxu0
      %v3115 = vadd.f32 0.0, %v3114
      %v3116 = vpop.f32.mrf.mxu0
      %v3117 = vadd.f32 0.0, %v3116
      %3118 = vmatmul.bf16.gmra.mxu0 %v2870
      %v3119 = vpop.f32.mrf.mxu0
      %v3120 = vadd.f32 0.0, %v3119
      %v3121 = vpop.f32.mrf.mxu0
      %v3122 = vadd.f32 0.0, %v3121
      %3123 = vmatmul.bf16.gmra.mxu0 %v2873
      %v3124 = vpop.f32.mrf.mxu0
      %v3125 = vadd.f32 0.0, %v3124
      %v3126 = vpop.f32.mrf.mxu0
      %3127 = vdwg.mxu0
      %3128 = vmatpush.bf16.msra.mxu0 0
      %3129 = vmatpush.bf16.msra.mxu0 0
      %3130 = vmatpush.bf16.msra.mxu0 0
      %3131 = vmatpush.bf16.msra.mxu0 0
      %3132 = vmatpush.bf16.msra.mxu0 0
      %3133 = vmatpush.bf16.msra.mxu0 0
      %3134 = vmatpush.bf16.msra.mxu0 %v2851
      %3135 = vmatpush.bf16.msra.mxu0 %v2839
      %3136 = vmatmul.bf16.gmra.mxu0 %v2867
      %v3137 = vpop.f32.mrf.mxu0
      %v3138 = vadd.f32 0.0, %v3137
      %v3139 = vpop.f32.mrf.mxu0
      %v3140 = vadd.f32 0.0, %v3139
      %3141 = vmatmul.bf16.gmra.mxu0 %v2870
      %v3142 = vpop.f32.mrf.mxu0
      %v3143 = vadd.f32 0.0, %v3142
      %v3144 = vpop.f32.mrf.mxu0
      %v3145 = vadd.f32 0.0, %v3144
      %3146 = vmatmul.bf16.gmra.mxu0 %v2873
      %v3147 = vpop.f32.mrf.mxu0
      %v3148 = vadd.f32 0.0, %v3147
      %v3149 = vpop.f32.mrf.mxu0
      %3150 = vdwg.mxu0
      %v3151 = vld [vmem:[#allocation2] sm:$0x1]
      %s3152 = vtos %v3151
      %v3153 = vstv %s3152
      %v3154 = vadd.f32 %v2895, %v3153
      %v3155 = vadd.f32 %v2918, %v3153
      %v3156 = vadd.f32 %v2941, %v3153
      %v3157 = vadd.f32 %v2964, %v3153
      %v3158 = vadd.f32 %v2987, %v3153
      %v3159 = vadd.f32 %v3010, %v3153
      %v3160 = vadd.f32 %v3033, %v3153
      %v3161 = vadd.f32 %v3056, %v3153
      %v3162 = vadd.f32 %v3079, %v3153
      %v3163 = vadd.f32 %v3102, %v3153
      %v3164 = vadd.f32 %v3125, %v3153
      %v3165 = vadd.f32 %v3148, %v3153
      %v3166 = vmax.f32 %v3154, 0.0
      %v3167 = vmax.f32 %v3155, 0.0
      %v3168 = vmax.f32 %v3156, 0.0
      %v3169 = vmax.f32 %v3157, 0.0
      %v3170 = vmax.f32 %v3158, 0.0
      %v3171 = vmax.f32 %v3159, 0.0
      %v3172 = vmax.f32 %v3160, 0.0
      %v3173 = vmax.f32 %v3161, 0.0
      %v3174 = vmax.f32 %v3162, 0.0
      %v3175 = vmax.f32 %v3163, 0.0
      %v3176 = vmax.f32 %v3164, 0.0
      %v3177 = vmax.f32 %v3165, 0.0
      %s3178 = scalar_lea.vmem %s317, 256
      %v3179 = vld [vmem:[%s3178] sm:$0xff]
      %v3180 = vld [vmem:[%s3178 + $0x8] sm:$0xff]
      %v3181 = vld [vmem:[%s3178 + $0x10] sm:$0xff]
      %v3182 = vld [vmem:[%s3178 + $0x18] sm:$0xff]
      %3184 = vset.pattern.permute.xlu0 0
      %3185 = vperm.xlu0 %3184, %v3179
      %v3186 = vpop.permute.xlu0 %3185
      %3189 = vset.pattern.permute.xlu0 0
      %3190 = vperm.xlu0 %3189, %v3180
      %v3191 = vpop.permute.xlu0 %3190
      %3194 = vset.pattern.permute.xlu0 0
      %3195 = vperm.xlu0 %3194, %v3181
      %v3196 = vpop.permute.xlu0 %3195
      %3199 = vset.pattern.permute.xlu0 0
      %3200 = vperm.xlu0 %3199, %v3182
      %v3201 = vpop.permute.xlu0 %3200
      %v3203 = vmul.f32 %v3186, %v2885
      %v3204 = vmul.f32 %v3186, %v2908
      %v3205 = vmul.f32 %v3186, %v2931
      %v3206 = vmul.f32 %v3186, %v2954
      %v3207 = vmul.f32 %v3186, %v2977
      %v3208 = vmul.f32 %v3186, %v3000
      %v3209 = vmul.f32 %v3186, %v3023
      %v3210 = vmul.f32 %v3186, %v3046
      %v3211 = vmul.f32 %v3186, %v3069
      %v3212 = vmul.f32 %v3186, %v3092
      %v3213 = vmul.f32 %v3186, %v3115
      %v3214 = vmul.f32 %v3186, %v3138
      %v3215 = vmul.f32 %v3191, %v2887
      %v3216 = vmul.f32 %v3191, %v2910
      %v3217 = vmul.f32 %v3191, %v2933
      %v3218 = vmul.f32 %v3191, %v2956
      %v3219 = vmul.f32 %v3191, %v2979
      %v3220 = vmul.f32 %v3191, %v3002
      %v3221 = vmul.f32 %v3191, %v3025
      %v3222 = vmul.f32 %v3191, %v3048
      %v3223 = vmul.f32 %v3191, %v3071
      %v3224 = vmul.f32 %v3191, %v3094
      %v3225 = vmul.f32 %v3191, %v3117
      %v3226 = vmul.f32 %v3191, %v3140
      %v3227 = vmul.f32 %v3196, %v2890
      %v3228 = vmul.f32 %v3196, %v2913
      %v3229 = vmul.f32 %v3196, %v2936
      %v3230 = vmul.f32 %v3196, %v2959
      %v3231 = vmul.f32 %v3196, %v2982
      %v3232 = vmul.f32 %v3196, %v3005
      %v3233 = vmul.f32 %v3196, %v3028
      %v3234 = vmul.f32 %v3196, %v3051
      %v3235 = vmul.f32 %v3196, %v3074
      %v3236 = vmul.f32 %v3196, %v3097
      %v3237 = vmul.f32 %v3196, %v3120
      %v3238 = vmul.f32 %v3196, %v3143
      %v3239 = vmul.f32 %v3201, %v2892
      %v3240 = vmul.f32 %v3201, %v2915
      %v3241 = vmul.f32 %v3201, %v2938
      %v3242 = vmul.f32 %v3201, %v2961
      %v3243 = vmul.f32 %v3201, %v2984
      %v3244 = vmul.f32 %v3201, %v3007
      %v3245 = vmul.f32 %v3201, %v3030
      %v3246 = vmul.f32 %v3201, %v3053
      %v3247 = vmul.f32 %v3201, %v3076
      %v3248 = vmul.f32 %v3201, %v3099
      %v3249 = vmul.f32 %v3201, %v3122
      %v3250 = vmul.f32 %v3201, %v3145
      %s3251 = scalar_lea.vmem %s322, 256
      %v3252 = vld [vmem:[%s3251] sm:$0xff]
      %v3253 = vld [vmem:[%s3251 + $0x8] sm:$0xff]
      %v3254 = vld [vmem:[%s3251 + $0x10] sm:$0xff]
      %v3255 = vld [vmem:[%s3251 + $0x18] sm:$0xff]
      %3257 = vset.pattern.permute.xlu0 0
      %3258 = vperm.xlu0 %3257, %v3252
      %v3259 = vpop.permute.xlu0 %3258
      %3262 = vset.pattern.permute.xlu0 0
      %3263 = vperm.xlu0 %3262, %v3253
      %v3264 = vpop.permute.xlu0 %3263
      %3267 = vset.pattern.permute.xlu0 0
      %3268 = vperm.xlu0 %3267, %v3254
      %v3269 = vpop.permute.xlu0 %3268
      %3272 = vset.pattern.permute.xlu0 0
      %3273 = vperm.xlu0 %3272, %v3255
      %v3274 = vpop.permute.xlu0 %3273
      %v3276 = vadd.f32 %v3203, %v3259
      %v3277 = vadd.f32 %v3204, %v3259
      %v3278 = vadd.f32 %v3205, %v3259
      %v3279 = vadd.f32 %v3206, %v3259
      %v3280 = vadd.f32 %v3207, %v3259
      %v3281 = vadd.f32 %v3208, %v3259
      %v3282 = vadd.f32 %v3209, %v3259
      %v3283 = vadd.f32 %v3210, %v3259
      %v3284 = vadd.f32 %v3211, %v3259
      %v3285 = vadd.f32 %v3212, %v3259
      %v3286 = vadd.f32 %v3213, %v3259
      %v3287 = vadd.f32 %v3214, %v3259
      %v3288 = vadd.f32 %v3215, %v3264
      %v3289 = vadd.f32 %v3216, %v3264
      %v3290 = vadd.f32 %v3217, %v3264
      %v3291 = vadd.f32 %v3218, %v3264
      %v3292 = vadd.f32 %v3219, %v3264
      %v3293 = vadd.f32 %v3220, %v3264
      %v3294 = vadd.f32 %v3221, %v3264
      %v3295 = vadd.f32 %v3222, %v3264
      %v3296 = vadd.f32 %v3223, %v3264
      %v3297 = vadd.f32 %v3224, %v3264
      %v3298 = vadd.f32 %v3225, %v3264
      %v3299 = vadd.f32 %v3226, %v3264
      %v3300 = vadd.f32 %v3227, %v3269
      %v3301 = vadd.f32 %v3228, %v3269
      %v3302 = vadd.f32 %v3229, %v3269
      %v3303 = vadd.f32 %v3230, %v3269
      %v3304 = vadd.f32 %v3231, %v3269
      %v3305 = vadd.f32 %v3232, %v3269
      %v3306 = vadd.f32 %v3233, %v3269
      %v3307 = vadd.f32 %v3234, %v3269
      %v3308 = vadd.f32 %v3235, %v3269
      %v3309 = vadd.f32 %v3236, %v3269
      %v3310 = vadd.f32 %v3237, %v3269
      %v3311 = vadd.f32 %v3238, %v3269
      %v3312 = vadd.f32 %v3239, %v3274
      %v3313 = vadd.f32 %v3240, %v3274
      %v3314 = vadd.f32 %v3241, %v3274
      %v3315 = vadd.f32 %v3242, %v3274
      %v3316 = vadd.f32 %v3243, %v3274
      %v3317 = vadd.f32 %v3244, %v3274
      %v3318 = vadd.f32 %v3245, %v3274
      %v3319 = vadd.f32 %v3246, %v3274
      %v3320 = vadd.f32 %v3247, %v3274
      %v3321 = vadd.f32 %v3248, %v3274
      %v3322 = vadd.f32 %v3249, %v3274
      %v3323 = vadd.f32 %v3250, %v3274
      %v3324 = vmul.f32 %v3276, 0.15915494
      %v3325 = vmul.f32 %v3277, 0.15915494
      %v3326 = vmul.f32 %v3278, 0.15915494
      %v3327 = vmul.f32 %v3279, 0.15915494
      %v3328 = vmul.f32 %v3280, 0.15915494
      %v3329 = vmul.f32 %v3281, 0.15915494
      %v3330 = vmul.f32 %v3282, 0.15915494
      %v3331 = vmul.f32 %v3283, 0.15915494
      %v3332 = vmul.f32 %v3284, 0.15915494
      %v3333 = vmul.f32 %v3285, 0.15915494
      %v3334 = vmul.f32 %v3286, 0.15915494
      %v3335 = vmul.f32 %v3287, 0.15915494
      %v3336 = vmul.f32 %v3288, 0.15915494
      %v3337 = vmul.f32 %v3289, 0.15915494
      %v3338 = vmul.f32 %v3290, 0.15915494
      %v3339 = vmul.f32 %v3291, 0.15915494
      %v3340 = vmul.f32 %v3292, 0.15915494
      %v3341 = vmul.f32 %v3293, 0.15915494
      %v3342 = vmul.f32 %v3294, 0.15915494
      %v3343 = vmul.f32 %v3295, 0.15915494
      %v3344 = vmul.f32 %v3296, 0.15915494
      %v3345 = vmul.f32 %v3297, 0.15915494
      %v3346 = vmul.f32 %v3298, 0.15915494
      %v3347 = vmul.f32 %v3299, 0.15915494
      %v3348 = vmul.f32 %v3300, 0.15915494
      %v3349 = vmul.f32 %v3301, 0.15915494
      %v3350 = vmul.f32 %v3302, 0.15915494
      %v3351 = vmul.f32 %v3303, 0.15915494
      %v3352 = vmul.f32 %v3304, 0.15915494
      %v3353 = vmul.f32 %v3305, 0.15915494
      %v3354 = vmul.f32 %v3306, 0.15915494
      %v3355 = vmul.f32 %v3307, 0.15915494
      %v3356 = vmul.f32 %v3308, 0.15915494
      %v3357 = vmul.f32 %v3309, 0.15915494
      %v3358 = vmul.f32 %v3310, 0.15915494
      %v3359 = vmul.f32 %v3311, 0.15915494
      %v3360 = vmul.f32 %v3312, 0.15915494
      %v3361 = vmul.f32 %v3313, 0.15915494
      %v3362 = vmul.f32 %v3314, 0.15915494
      %v3363 = vmul.f32 %v3315, 0.15915494
      %v3364 = vmul.f32 %v3316, 0.15915494
      %v3365 = vmul.f32 %v3317, 0.15915494
      %v3366 = vmul.f32 %v3318, 0.15915494
      %v3367 = vmul.f32 %v3319, 0.15915494
      %v3368 = vmul.f32 %v3320, 0.15915494
      %v3369 = vmul.f32 %v3321, 0.15915494
      %v3370 = vmul.f32 %v3322, 0.15915494
      %v3371 = vmul.f32 %v3323, 0.15915494
      %v3372 = vadd.f32 %v3324, 0.5
      %v3373 = vadd.f32 %v3325, 0.5
      %v3374 = vadd.f32 %v3326, 0.5
      %v3375 = vadd.f32 %v3327, 0.5
      %v3376 = vadd.f32 %v3328, 0.5
      %v3377 = vadd.f32 %v3329, 0.5
      %v3378 = vadd.f32 %v3330, 0.5
      %v3379 = vadd.f32 %v3331, 0.5
      %v3380 = vadd.f32 %v3332, 0.5
      %v3381 = vadd.f32 %v3333, 0.5
      %v3382 = vadd.f32 %v3334, 0.5
      %v3383 = vadd.f32 %v3335, 0.5
      %v3384 = vadd.f32 %v3336, 0.5
      %v3385 = vadd.f32 %v3337, 0.5
      %v3386 = vadd.f32 %v3338, 0.5
      %v3387 = vadd.f32 %v3339, 0.5
      %v3388 = vadd.f32 %v3340, 0.5
      %v3389 = vadd.f32 %v3341, 0.5
      %v3390 = vadd.f32 %v3342, 0.5
      %v3391 = vadd.f32 %v3343, 0.5
      %v3392 = vadd.f32 %v3344, 0.5
      %v3393 = vadd.f32 %v3345, 0.5
      %v3394 = vadd.f32 %v3346, 0.5
      %v3395 = vadd.f32 %v3347, 0.5
      %v3396 = vadd.f32 %v3348, 0.5
      %v3397 = vadd.f32 %v3349, 0.5
      %v3398 = vadd.f32 %v3350, 0.5
      %v3399 = vadd.f32 %v3351, 0.5
      %v3400 = vadd.f32 %v3352, 0.5
      %v3401 = vadd.f32 %v3353, 0.5
      %v3402 = vadd.f32 %v3354, 0.5
      %v3403 = vadd.f32 %v3355, 0.5
      %v3404 = vadd.f32 %v3356, 0.5
      %v3405 = vadd.f32 %v3357, 0.5
      %v3406 = vadd.f32 %v3358, 0.5
      %v3407 = vadd.f32 %v3359, 0.5
      %v3408 = vadd.f32 %v3360, 0.5
      %v3409 = vadd.f32 %v3361, 0.5
      %v3410 = vadd.f32 %v3362, 0.5
      %v3411 = vadd.f32 %v3363, 0.5
      %v3412 = vadd.f32 %v3364, 0.5
      %v3413 = vadd.f32 %v3365, 0.5
      %v3414 = vadd.f32 %v3366, 0.5
      %v3415 = vadd.f32 %v3367, 0.5
      %v3416 = vadd.f32 %v3368, 0.5
      %v3417 = vadd.f32 %v3369, 0.5
      %v3418 = vadd.f32 %v3370, 0.5
      %v3419 = vadd.f32 %v3371, 0.5
      %v3420 = vfloor.f32 %v3372
      %v3421 = vfloor.f32 %v3373
      %v3422 = vfloor.f32 %v3374
      %v3423 = vfloor.f32 %v3375
      %v3424 = vfloor.f32 %v3376
      %v3425 = vfloor.f32 %v3377
      %v3426 = vfloor.f32 %v3378
      %v3427 = vfloor.f32 %v3379
      %v3428 = vfloor.f32 %v3380
      %v3429 = vfloor.f32 %v3381
      %v3430 = vfloor.f32 %v3382
      %v3431 = vfloor.f32 %v3383
      %v3432 = vfloor.f32 %v3384
      %v3433 = vfloor.f32 %v3385
      %v3434 = vfloor.f32 %v3386
      %v3435 = vfloor.f32 %v3387
      %v3436 = vfloor.f32 %v3388
      %v3437 = vfloor.f32 %v3389
      %v3438 = vfloor.f32 %v3390
      %v3439 = vfloor.f32 %v3391
      %v3440 = vfloor.f32 %v3392
      %v3441 = vfloor.f32 %v3393
      %v3442 = vfloor.f32 %v3394
      %v3443 = vfloor.f32 %v3395
      %v3444 = vfloor.f32 %v3396
      %v3445 = vfloor.f32 %v3397
      %v3446 = vfloor.f32 %v3398
      %v3447 = vfloor.f32 %v3399
      %v3448 = vfloor.f32 %v3400
      %v3449 = vfloor.f32 %v3401
      %v3450 = vfloor.f32 %v3402
      %v3451 = vfloor.f32 %v3403
      %v3452 = vfloor.f32 %v3404
      %v3453 = vfloor.f32 %v3405
      %v3454 = vfloor.f32 %v3406
      %v3455 = vfloor.f32 %v3407
      %v3456 = vfloor.f32 %v3408
      %v3457 = vfloor.f32 %v3409
      %v3458 = vfloor.f32 %v3410
      %v3459 = vfloor.f32 %v3411
      %v3460 = vfloor.f32 %v3412
      %v3461 = vfloor.f32 %v3413
      %v3462 = vfloor.f32 %v3414
      %v3463 = vfloor.f32 %v3415
      %v3464 = vfloor.f32 %v3416
      %v3465 = vfloor.f32 %v3417
      %v3466 = vfloor.f32 %v3418
      %v3467 = vfloor.f32 %v3419
      %v3468 = vmul.f32 %v3420, 6.2831855
      %v3469 = vmul.f32 %v3421, 6.2831855
      %v3470 = vmul.f32 %v3422, 6.2831855
      %v3471 = vmul.f32 %v3423, 6.2831855
      %v3472 = vmul.f32 %v3424, 6.2831855
      %v3473 = vmul.f32 %v3425, 6.2831855
      %v3474 = vmul.f32 %v3426, 6.2831855
      %v3475 = vmul.f32 %v3427, 6.2831855
      %v3476 = vmul.f32 %v3428, 6.2831855
      %v3477 = vmul.f32 %v3429, 6.2831855
      %v3478 = vmul.f32 %v3430, 6.2831855
      %v3479 = vmul.f32 %v3431, 6.2831855
      %v3480 = vmul.f32 %v3432, 6.2831855
      %v3481 = vmul.f32 %v3433, 6.2831855
      %v3482 = vmul.f32 %v3434, 6.2831855
      %v3483 = vmul.f32 %v3435, 6.2831855
      %v3484 = vmul.f32 %v3436, 6.2831855
      %v3485 = vmul.f32 %v3437, 6.2831855
      %v3486 = vmul.f32 %v3438, 6.2831855
      %v3487 = vmul.f32 %v3439, 6.2831855
      %v3488 = vmul.f32 %v3440, 6.2831855
      %v3489 = vmul.f32 %v3441, 6.2831855
      %v3490 = vmul.f32 %v3442, 6.2831855
      %v3491 = vmul.f32 %v3443, 6.2831855
      %v3492 = vmul.f32 %v3444, 6.2831855
      %v3493 = vmul.f32 %v3445, 6.2831855
      %v3494 = vmul.f32 %v3446, 6.2831855
      %v3495 = vmul.f32 %v3447, 6.2831855
      %v3496 = vmul.f32 %v3448, 6.2831855
      %v3497 = vmul.f32 %v3449, 6.2831855
      %v3498 = vmul.f32 %v3450, 6.2831855
      %v3499 = vmul.f32 %v3451, 6.2831855
      %v3500 = vmul.f32 %v3452, 6.2831855
      %v3501 = vmul.f32 %v3453, 6.2831855
      %v3502 = vmul.f32 %v3454, 6.2831855
      %v3503 = vmul.f32 %v3455, 6.2831855
      %v3504 = vmul.f32 %v3456, 6.2831855
      %v3505 = vmul.f32 %v3457, 6.2831855
      %v3506 = vmul.f32 %v3458, 6.2831855
      %v3507 = vmul.f32 %v3459, 6.2831855
      %v3508 = vmul.f32 %v3460, 6.2831855
      %v3509 = vmul.f32 %v3461, 6.2831855
      %v3510 = vmul.f32 %v3462, 6.2831855
      %v3511 = vmul.f32 %v3463, 6.2831855
      %v3512 = vmul.f32 %v3464, 6.2831855
      %v3513 = vmul.f32 %v3465, 6.2831855
      %v3514 = vmul.f32 %v3466, 6.2831855
      %v3515 = vmul.f32 %v3467, 6.2831855
      %v3516 = vsub.f32 %v3276, %v3468
      %v3517 = vsub.f32 %v3277, %v3469
      %v3518 = vsub.f32 %v3278, %v3470
      %v3519 = vsub.f32 %v3279, %v3471
      %v3520 = vsub.f32 %v3280, %v3472
      %v3521 = vsub.f32 %v3281, %v3473
      %v3522 = vsub.f32 %v3282, %v3474
      %v3523 = vsub.f32 %v3283, %v3475
      %v3524 = vsub.f32 %v3284, %v3476
      %v3525 = vsub.f32 %v3285, %v3477
      %v3526 = vsub.f32 %v3286, %v3478
      %v3527 = vsub.f32 %v3287, %v3479
      %v3528 = vsub.f32 %v3288, %v3480
      %v3529 = vsub.f32 %v3289, %v3481
      %v3530 = vsub.f32 %v3290, %v3482
      %v3531 = vsub.f32 %v3291, %v3483
      %v3532 = vsub.f32 %v3292, %v3484
      %v3533 = vsub.f32 %v3293, %v3485
      %v3534 = vsub.f32 %v3294, %v3486
      %v3535 = vsub.f32 %v3295, %v3487
      %v3536 = vsub.f32 %v3296, %v3488
      %v3537 = vsub.f32 %v3297, %v3489
      %v3538 = vsub.f32 %v3298, %v3490
      %v3539 = vsub.f32 %v3299, %v3491
      %v3540 = vsub.f32 %v3300, %v3492
      %v3541 = vsub.f32 %v3301, %v3493
      %v3542 = vsub.f32 %v3302, %v3494
      %v3543 = vsub.f32 %v3303, %v3495
      %v3544 = vsub.f32 %v3304, %v3496
      %v3545 = vsub.f32 %v3305, %v3497
      %v3546 = vsub.f32 %v3306, %v3498
      %v3547 = vsub.f32 %v3307, %v3499
      %v3548 = vsub.f32 %v3308, %v3500
      %v3549 = vsub.f32 %v3309, %v3501
      %v3550 = vsub.f32 %v3310, %v3502
      %v3551 = vsub.f32 %v3311, %v3503
      %v3552 = vsub.f32 %v3312, %v3504
      %v3553 = vsub.f32 %v3313, %v3505
      %v3554 = vsub.f32 %v3314, %v3506
      %v3555 = vsub.f32 %v3315, %v3507
      %v3556 = vsub.f32 %v3316, %v3508
      %v3557 = vsub.f32 %v3317, %v3509
      %v3558 = vsub.f32 %v3318, %v3510
      %v3559 = vsub.f32 %v3319, %v3511
      %v3560 = vsub.f32 %v3320, %v3512
      %v3561 = vsub.f32 %v3321, %v3513
      %v3562 = vsub.f32 %v3322, %v3514
      %v3563 = vsub.f32 %v3323, %v3515
      %v3564 = vmul.f32 %v3516, %v3516
      %v3565 = vmul.f32 %v3517, %v3517
      %v3566 = vmul.f32 %v3518, %v3518
      %v3567 = vmul.f32 %v3519, %v3519
      %v3568 = vmul.f32 %v3520, %v3520
      %v3569 = vmul.f32 %v3521, %v3521
      %v3570 = vmul.f32 %v3522, %v3522
      %v3571 = vmul.f32 %v3523, %v3523
      %v3572 = vmul.f32 %v3524, %v3524
      %v3573 = vmul.f32 %v3525, %v3525
      %v3574 = vmul.f32 %v3526, %v3526
      %v3575 = vmul.f32 %v3527, %v3527
      %v3576 = vmul.f32 %v3528, %v3528
      %v3577 = vmul.f32 %v3529, %v3529
      %v3578 = vmul.f32 %v3530, %v3530
      %v3579 = vmul.f32 %v3531, %v3531
      %v3580 = vmul.f32 %v3532, %v3532
      %v3581 = vmul.f32 %v3533, %v3533
      %v3582 = vmul.f32 %v3534, %v3534
      %v3583 = vmul.f32 %v3535, %v3535
      %v3584 = vmul.f32 %v3536, %v3536
      %v3585 = vmul.f32 %v3537, %v3537
      %v3586 = vmul.f32 %v3538, %v3538
      %v3587 = vmul.f32 %v3539, %v3539
      %v3588 = vmul.f32 %v3540, %v3540
      %v3589 = vmul.f32 %v3541, %v3541
      %v3590 = vmul.f32 %v3542, %v3542
      %v3591 = vmul.f32 %v3543, %v3543
      %v3592 = vmul.f32 %v3544, %v3544
      %v3593 = vmul.f32 %v3545, %v3545
      %v3594 = vmul.f32 %v3546, %v3546
      %v3595 = vmul.f32 %v3547, %v3547
      %v3596 = vmul.f32 %v3548, %v3548
      %v3597 = vmul.f32 %v3549, %v3549
      %v3598 = vmul.f32 %v3550, %v3550
      %v3599 = vmul.f32 %v3551, %v3551
      %v3600 = vmul.f32 %v3552, %v3552
      %v3601 = vmul.f32 %v3553, %v3553
      %v3602 = vmul.f32 %v3554, %v3554
      %v3603 = vmul.f32 %v3555, %v3555
      %v3604 = vmul.f32 %v3556, %v3556
      %v3605 = vmul.f32 %v3557, %v3557
      %v3606 = vmul.f32 %v3558, %v3558
      %v3607 = vmul.f32 %v3559, %v3559
      %v3608 = vmul.f32 %v3560, %v3560
      %v3609 = vmul.f32 %v3561, %v3561
      %v3610 = vmul.f32 %v3562, %v3562
      %v3611 = vmul.f32 %v3563, %v3563
      %v3612 = vmul.f32 %v3564, 1.6059044e-10
      %v3613 = vmul.f32 %v3565, 1.6059044e-10
      %v3614 = vmul.f32 %v3566, 1.6059044e-10
      %v3615 = vmul.f32 %v3567, 1.6059044e-10
      %v3616 = vmul.f32 %v3568, 1.6059044e-10
      %v3617 = vmul.f32 %v3569, 1.6059044e-10
      %v3618 = vmul.f32 %v3570, 1.6059044e-10
      %v3619 = vmul.f32 %v3571, 1.6059044e-10
      %v3620 = vmul.f32 %v3572, 1.6059044e-10
      %v3621 = vmul.f32 %v3573, 1.6059044e-10
      %v3622 = vmul.f32 %v3574, 1.6059044e-10
      %v3623 = vmul.f32 %v3575, 1.6059044e-10
      %v3624 = vmul.f32 %v3576, 1.6059044e-10
      %v3625 = vmul.f32 %v3577, 1.6059044e-10
      %v3626 = vmul.f32 %v3578, 1.6059044e-10
      %v3627 = vmul.f32 %v3579, 1.6059044e-10
      %v3628 = vmul.f32 %v3580, 1.6059044e-10
      %v3629 = vmul.f32 %v3581, 1.6059044e-10
      %v3630 = vmul.f32 %v3582, 1.6059044e-10
      %v3631 = vmul.f32 %v3583, 1.6059044e-10
      %v3632 = vmul.f32 %v3584, 1.6059044e-10
      %v3633 = vmul.f32 %v3585, 1.6059044e-10
      %v3634 = vmul.f32 %v3586, 1.6059044e-10
      %v3635 = vmul.f32 %v3587, 1.6059044e-10
      %v3636 = vmul.f32 %v3588, 1.6059044e-10
      %v3637 = vmul.f32 %v3589, 1.6059044e-10
      %v3638 = vmul.f32 %v3590, 1.6059044e-10
      %v3639 = vmul.f32 %v3591, 1.6059044e-10
      %v3640 = vmul.f32 %v3592, 1.6059044e-10
      %v3641 = vmul.f32 %v3593, 1.6059044e-10
      %v3642 = vmul.f32 %v3594, 1.6059044e-10
      %v3643 = vmul.f32 %v3595, 1.6059044e-10
      %v3644 = vmul.f32 %v3596, 1.6059044e-10
      %v3645 = vmul.f32 %v3597, 1.6059044e-10
      %v3646 = vmul.f32 %v3598, 1.6059044e-10
      %v3647 = vmul.f32 %v3599, 1.6059044e-10
      %v3648 = vmul.f32 %v3600, 1.6059044e-10
      %v3649 = vmul.f32 %v3601, 1.6059044e-10
      %v3650 = vmul.f32 %v3602, 1.6059044e-10
      %v3651 = vmul.f32 %v3603, 1.6059044e-10
      %v3652 = vmul.f32 %v3604, 1.6059044e-10
      %v3653 = vmul.f32 %v3605, 1.6059044e-10
      %v3654 = vmul.f32 %v3606, 1.6059044e-10
      %v3655 = vmul.f32 %v3607, 1.6059044e-10
      %v3656 = vmul.f32 %v3608, 1.6059044e-10
      %v3657 = vmul.f32 %v3609, 1.6059044e-10
      %v3658 = vmul.f32 %v3610, 1.6059044e-10
      %v3659 = vmul.f32 %v3611, 1.6059044e-10
      %v3660 = vadd.f32 %v3612, -2.5052108e-08
      %v3661 = vadd.f32 %v3613, -2.5052108e-08
      %v3662 = vadd.f32 %v3614, -2.5052108e-08
      %v3663 = vadd.f32 %v3615, -2.5052108e-08
      %v3664 = vadd.f32 %v3616, -2.5052108e-08
      %v3665 = vadd.f32 %v3617, -2.5052108e-08
      %v3666 = vadd.f32 %v3618, -2.5052108e-08
      %v3667 = vadd.f32 %v3619, -2.5052108e-08
      %v3668 = vadd.f32 %v3620, -2.5052108e-08
      %v3669 = vadd.f32 %v3621, -2.5052108e-08
      %v3670 = vadd.f32 %v3622, -2.5052108e-08
      %v3671 = vadd.f32 %v3623, -2.5052108e-08
      %v3672 = vadd.f32 %v3624, -2.5052108e-08
      %v3673 = vadd.f32 %v3625, -2.5052108e-08
      %v3674 = vadd.f32 %v3626, -2.5052108e-08
      %v3675 = vadd.f32 %v3627, -2.5052108e-08
      %v3676 = vadd.f32 %v3628, -2.5052108e-08
      %v3677 = vadd.f32 %v3629, -2.5052108e-08
      %v3678 = vadd.f32 %v3630, -2.5052108e-08
      %v3679 = vadd.f32 %v3631, -2.5052108e-08
      %v3680 = vadd.f32 %v3632, -2.5052108e-08
      %v3681 = vadd.f32 %v3633, -2.5052108e-08
      %v3682 = vadd.f32 %v3634, -2.5052108e-08
      %v3683 = vadd.f32 %v3635, -2.5052108e-08
      %v3684 = vadd.f32 %v3636, -2.5052108e-08
      %v3685 = vadd.f32 %v3637, -2.5052108e-08
      %v3686 = vadd.f32 %v3638, -2.5052108e-08
      %v3687 = vadd.f32 %v3639, -2.5052108e-08
      %v3688 = vadd.f32 %v3640, -2.5052108e-08
      %v3689 = vadd.f32 %v3641, -2.5052108e-08
      %v3690 = vadd.f32 %v3642, -2.5052108e-08
      %v3691 = vadd.f32 %v3643, -2.5052108e-08
      %v3692 = vadd.f32 %v3644, -2.5052108e-08
      %v3693 = vadd.f32 %v3645, -2.5052108e-08
      %v3694 = vadd.f32 %v3646, -2.5052108e-08
      %v3695 = vadd.f32 %v3647, -2.5052108e-08
      %v3696 = vadd.f32 %v3648, -2.5052108e-08
      %v3697 = vadd.f32 %v3649, -2.5052108e-08
      %v3698 = vadd.f32 %v3650, -2.5052108e-08
      %v3699 = vadd.f32 %v3651, -2.5052108e-08
      %v3700 = vadd.f32 %v3652, -2.5052108e-08
      %v3701 = vadd.f32 %v3653, -2.5052108e-08
      %v3702 = vadd.f32 %v3654, -2.5052108e-08
      %v3703 = vadd.f32 %v3655, -2.5052108e-08
      %v3704 = vadd.f32 %v3656, -2.5052108e-08
      %v3705 = vadd.f32 %v3657, -2.5052108e-08
      %v3706 = vadd.f32 %v3658, -2.5052108e-08
      %v3707 = vadd.f32 %v3659, -2.5052108e-08
      %v3708 = vmul.f32 %v3660, %v3564
      %v3709 = vmul.f32 %v3661, %v3565
      %v3710 = vmul.f32 %v3662, %v3566
      %v3711 = vmul.f32 %v3663, %v3567
      %v3712 = vmul.f32 %v3664, %v3568
      %v3713 = vmul.f32 %v3665, %v3569
      %v3714 = vmul.f32 %v3666, %v3570
      %v3715 = vmul.f32 %v3667, %v3571
      %v3716 = vmul.f32 %v3668, %v3572
      %v3717 = vmul.f32 %v3669, %v3573
      %v3718 = vmul.f32 %v3670, %v3574
      %v3719 = vmul.f32 %v3671, %v3575
      %v3720 = vmul.f32 %v3672, %v3576
      %v3721 = vmul.f32 %v3673, %v3577
      %v3722 = vmul.f32 %v3674, %v3578
      %v3723 = vmul.f32 %v3675, %v3579
      %v3724 = vmul.f32 %v3676, %v3580
      %v3725 = vmul.f32 %v3677, %v3581
      %v3726 = vmul.f32 %v3678, %v3582
      %v3727 = vmul.f32 %v3679, %v3583
      %v3728 = vmul.f32 %v3680, %v3584
      %v3729 = vmul.f32 %v3681, %v3585
      %v3730 = vmul.f32 %v3682, %v3586
      %v3731 = vmul.f32 %v3683, %v3587
      %v3732 = vmul.f32 %v3684, %v3588
      %v3733 = vmul.f32 %v3685, %v3589
      %v3734 = vmul.f32 %v3686, %v3590
      %v3735 = vmul.f32 %v3687, %v3591
      %v3736 = vmul.f32 %v3688, %v3592
      %v3737 = vmul.f32 %v3689, %v3593
      %v3738 = vmul.f32 %v3690, %v3594
      %v3739 = vmul.f32 %v3691, %v3595
      %v3740 = vmul.f32 %v3692, %v3596
      %v3741 = vmul.f32 %v3693, %v3597
      %v3742 = vmul.f32 %v3694, %v3598
      %v3743 = vmul.f32 %v3695, %v3599
      %v3744 = vmul.f32 %v3696, %v3600
      %v3745 = vmul.f32 %v3697, %v3601
      %v3746 = vmul.f32 %v3698, %v3602
      %v3747 = vmul.f32 %v3699, %v3603
      %v3748 = vmul.f32 %v3700, %v3604
      %v3749 = vmul.f32 %v3701, %v3605
      %v3750 = vmul.f32 %v3702, %v3606
      %v3751 = vmul.f32 %v3703, %v3607
      %v3752 = vmul.f32 %v3704, %v3608
      %v3753 = vmul.f32 %v3705, %v3609
      %v3754 = vmul.f32 %v3706, %v3610
      %v3755 = vmul.f32 %v3707, %v3611
      %v3756 = vadd.f32 %v3708, 2.7557319e-06
      %v3757 = vadd.f32 %v3709, 2.7557319e-06
      %v3758 = vadd.f32 %v3710, 2.7557319e-06
      %v3759 = vadd.f32 %v3711, 2.7557319e-06
      %v3760 = vadd.f32 %v3712, 2.7557319e-06
      %v3761 = vadd.f32 %v3713, 2.7557319e-06
      %v3762 = vadd.f32 %v3714, 2.7557319e-06
      %v3763 = vadd.f32 %v3715, 2.7557319e-06
      %v3764 = vadd.f32 %v3716, 2.7557319e-06
      %v3765 = vadd.f32 %v3717, 2.7557319e-06
      %v3766 = vadd.f32 %v3718, 2.7557319e-06
      %v3767 = vadd.f32 %v3719, 2.7557319e-06
      %v3768 = vadd.f32 %v3720, 2.7557319e-06
      %v3769 = vadd.f32 %v3721, 2.7557319e-06
      %v3770 = vadd.f32 %v3722, 2.7557319e-06
      %v3771 = vadd.f32 %v3723, 2.7557319e-06
      %v3772 = vadd.f32 %v3724, 2.7557319e-06
      %v3773 = vadd.f32 %v3725, 2.7557319e-06
      %v3774 = vadd.f32 %v3726, 2.7557319e-06
      %v3775 = vadd.f32 %v3727, 2.7557319e-06
      %v3776 = vadd.f32 %v3728, 2.7557319e-06
      %v3777 = vadd.f32 %v3729, 2.7557319e-06
      %v3778 = vadd.f32 %v3730, 2.7557319e-06
      %v3779 = vadd.f32 %v3731, 2.7557319e-06
      %v3780 = vadd.f32 %v3732, 2.7557319e-06
      %v3781 = vadd.f32 %v3733, 2.7557319e-06
      %v3782 = vadd.f32 %v3734, 2.7557319e-06
      %v3783 = vadd.f32 %v3735, 2.7557319e-06
      %v3784 = vadd.f32 %v3736, 2.7557319e-06
      %v3785 = vadd.f32 %v3737, 2.7557319e-06
      %v3786 = vadd.f32 %v3738, 2.7557319e-06
      %v3787 = vadd.f32 %v3739, 2.7557319e-06
      %v3788 = vadd.f32 %v3740, 2.7557319e-06
      %v3789 = vadd.f32 %v3741, 2.7557319e-06
      %v3790 = vadd.f32 %v3742, 2.7557319e-06
      %v3791 = vadd.f32 %v3743, 2.7557319e-06
      %v3792 = vadd.f32 %v3744, 2.7557319e-06
      %v3793 = vadd.f32 %v3745, 2.7557319e-06
      %v3794 = vadd.f32 %v3746, 2.7557319e-06
      %v3795 = vadd.f32 %v3747, 2.7557319e-06
      %v3796 = vadd.f32 %v3748, 2.7557319e-06
      %v3797 = vadd.f32 %v3749, 2.7557319e-06
      %v3798 = vadd.f32 %v3750, 2.7557319e-06
      %v3799 = vadd.f32 %v3751, 2.7557319e-06
      %v3800 = vadd.f32 %v3752, 2.7557319e-06
      %v3801 = vadd.f32 %v3753, 2.7557319e-06
      %v3802 = vadd.f32 %v3754, 2.7557319e-06
      %v3803 = vadd.f32 %v3755, 2.7557319e-06
      %v3804 = vmul.f32 %v3756, %v3564
      %v3805 = vmul.f32 %v3757, %v3565
      %v3806 = vmul.f32 %v3758, %v3566
      %v3807 = vmul.f32 %v3759, %v3567
      %v3808 = vmul.f32 %v3760, %v3568
      %v3809 = vmul.f32 %v3761, %v3569
      %v3810 = vmul.f32 %v3762, %v3570
      %v3811 = vmul.f32 %v3763, %v3571
      %v3812 = vmul.f32 %v3764, %v3572
      %v3813 = vmul.f32 %v3765, %v3573
      %v3814 = vmul.f32 %v3766, %v3574
      %v3815 = vmul.f32 %v3767, %v3575
      %v3816 = vmul.f32 %v3768, %v3576
      %v3817 = vmul.f32 %v3769, %v3577
      %v3818 = vmul.f32 %v3770, %v3578
      %v3819 = vmul.f32 %v3771, %v3579
      %v3820 = vmul.f32 %v3772, %v3580
      %v3821 = vmul.f32 %v3773, %v3581
      %v3822 = vmul.f32 %v3774, %v3582
      %v3823 = vmul.f32 %v3775, %v3583
      %v3824 = vmul.f32 %v3776, %v3584
      %v3825 = vmul.f32 %v3777, %v3585
      %v3826 = vmul.f32 %v3778, %v3586
      %v3827 = vmul.f32 %v3779, %v3587
      %v3828 = vmul.f32 %v3780, %v3588
      %v3829 = vmul.f32 %v3781, %v3589
      %v3830 = vmul.f32 %v3782, %v3590
      %v3831 = vmul.f32 %v3783, %v3591
      %v3832 = vmul.f32 %v3784, %v3592
      %v3833 = vmul.f32 %v3785, %v3593
      %v3834 = vmul.f32 %v3786, %v3594
      %v3835 = vmul.f32 %v3787, %v3595
      %v3836 = vmul.f32 %v3788, %v3596
      %v3837 = vmul.f32 %v3789, %v3597
      %v3838 = vmul.f32 %v3790, %v3598
      %v3839 = vmul.f32 %v3791, %v3599
      %v3840 = vmul.f32 %v3792, %v3600
      %v3841 = vmul.f32 %v3793, %v3601
      %v3842 = vmul.f32 %v3794, %v3602
      %v3843 = vmul.f32 %v3795, %v3603
      %v3844 = vmul.f32 %v3796, %v3604
      %v3845 = vmul.f32 %v3797, %v3605
      %v3846 = vmul.f32 %v3798, %v3606
      %v3847 = vmul.f32 %v3799, %v3607
      %v3848 = vmul.f32 %v3800, %v3608
      %v3849 = vmul.f32 %v3801, %v3609
      %v3850 = vmul.f32 %v3802, %v3610
      %v3851 = vmul.f32 %v3803, %v3611
      %v3852 = vadd.f32 %v3804, -0.0001984127
      %v3853 = vadd.f32 %v3805, -0.0001984127
      %v3854 = vadd.f32 %v3806, -0.0001984127
      %v3855 = vadd.f32 %v3807, -0.0001984127
      %v3856 = vadd.f32 %v3808, -0.0001984127
      %v3857 = vadd.f32 %v3809, -0.0001984127
      %v3858 = vadd.f32 %v3810, -0.0001984127
      %v3859 = vadd.f32 %v3811, -0.0001984127
      %v3860 = vadd.f32 %v3812, -0.0001984127
      %v3861 = vadd.f32 %v3813, -0.0001984127
      %v3862 = vadd.f32 %v3814, -0.0001984127
      %v3863 = vadd.f32 %v3815, -0.0001984127
      %v3864 = vadd.f32 %v3816, -0.0001984127
      %v3865 = vadd.f32 %v3817, -0.0001984127
      %v3866 = vadd.f32 %v3818, -0.0001984127
      %v3867 = vadd.f32 %v3819, -0.0001984127
      %v3868 = vadd.f32 %v3820, -0.0001984127
      %v3869 = vadd.f32 %v3821, -0.0001984127
      %v3870 = vadd.f32 %v3822, -0.0001984127
      %v3871 = vadd.f32 %v3823, -0.0001984127
      %v3872 = vadd.f32 %v3824, -0.0001984127
      %v3873 = vadd.f32 %v3825, -0.0001984127
      %v3874 = vadd.f32 %v3826, -0.0001984127
      %v3875 = vadd.f32 %v3827, -0.0001984127
      %v3876 = vadd.f32 %v3828, -0.0001984127
      %v3877 = vadd.f32 %v3829, -0.0001984127
      %v3878 = vadd.f32 %v3830, -0.0001984127
      %v3879 = vadd.f32 %v3831, -0.0001984127
      %v3880 = vadd.f32 %v3832, -0.0001984127
      %v3881 = vadd.f32 %v3833, -0.0001984127
      %v3882 = vadd.f32 %v3834, -0.0001984127
      %v3883 = vadd.f32 %v3835, -0.0001984127
      %v3884 = vadd.f32 %v3836, -0.0001984127
      %v3885 = vadd.f32 %v3837, -0.0001984127
      %v3886 = vadd.f32 %v3838, -0.0001984127
      %v3887 = vadd.f32 %v3839, -0.0001984127
      %v3888 = vadd.f32 %v3840, -0.0001984127
      %v3889 = vadd.f32 %v3841, -0.0001984127
      %v3890 = vadd.f32 %v3842, -0.0001984127
      %v3891 = vadd.f32 %v3843, -0.0001984127
      %v3892 = vadd.f32 %v3844, -0.0001984127
      %v3893 = vadd.f32 %v3845, -0.0001984127
      %v3894 = vadd.f32 %v3846, -0.0001984127
      %v3895 = vadd.f32 %v3847, -0.0001984127
      %v3896 = vadd.f32 %v3848, -0.0001984127
      %v3897 = vadd.f32 %v3849, -0.0001984127
      %v3898 = vadd.f32 %v3850, -0.0001984127
      %v3899 = vadd.f32 %v3851, -0.0001984127
      %v3900 = vmul.f32 %v3852, %v3564
      %v3901 = vmul.f32 %v3853, %v3565
      %v3902 = vmul.f32 %v3854, %v3566
      %v3903 = vmul.f32 %v3855, %v3567
      %v3904 = vmul.f32 %v3856, %v3568
      %v3905 = vmul.f32 %v3857, %v3569
      %v3906 = vmul.f32 %v3858, %v3570
      %v3907 = vmul.f32 %v3859, %v3571
      %v3908 = vmul.f32 %v3860, %v3572
      %v3909 = vmul.f32 %v3861, %v3573
      %v3910 = vmul.f32 %v3862, %v3574
      %v3911 = vmul.f32 %v3863, %v3575
      %v3912 = vmul.f32 %v3864, %v3576
      %v3913 = vmul.f32 %v3865, %v3577
      %v3914 = vmul.f32 %v3866, %v3578
      %v3915 = vmul.f32 %v3867, %v3579
      %v3916 = vmul.f32 %v3868, %v3580
      %v3917 = vmul.f32 %v3869, %v3581
      %v3918 = vmul.f32 %v3870, %v3582
      %v3919 = vmul.f32 %v3871, %v3583
      %v3920 = vmul.f32 %v3872, %v3584
      %v3921 = vmul.f32 %v3873, %v3585
      %v3922 = vmul.f32 %v3874, %v3586
      %v3923 = vmul.f32 %v3875, %v3587
      %v3924 = vmul.f32 %v3876, %v3588
      %v3925 = vmul.f32 %v3877, %v3589
      %v3926 = vmul.f32 %v3878, %v3590
      %v3927 = vmul.f32 %v3879, %v3591
      %v3928 = vmul.f32 %v3880, %v3592
      %v3929 = vmul.f32 %v3881, %v3593
      %v3930 = vmul.f32 %v3882, %v3594
      %v3931 = vmul.f32 %v3883, %v3595
      %v3932 = vmul.f32 %v3884, %v3596
      %v3933 = vmul.f32 %v3885, %v3597
      %v3934 = vmul.f32 %v3886, %v3598
      %v3935 = vmul.f32 %v3887, %v3599
      %v3936 = vmul.f32 %v3888, %v3600
      %v3937 = vmul.f32 %v3889, %v3601
      %v3938 = vmul.f32 %v3890, %v3602
      %v3939 = vmul.f32 %v3891, %v3603
      %v3940 = vmul.f32 %v3892, %v3604
      %v3941 = vmul.f32 %v3893, %v3605
      %v3942 = vmul.f32 %v3894, %v3606
      %v3943 = vmul.f32 %v3895, %v3607
      %v3944 = vmul.f32 %v3896, %v3608
      %v3945 = vmul.f32 %v3897, %v3609
      %v3946 = vmul.f32 %v3898, %v3610
      %v3947 = vmul.f32 %v3899, %v3611
      %v3948 = vadd.f32 %v3900, 0.008333334
      %v3949 = vadd.f32 %v3901, 0.008333334
      %v3950 = vadd.f32 %v3902, 0.008333334
      %v3951 = vadd.f32 %v3903, 0.008333334
      %v3952 = vadd.f32 %v3904, 0.008333334
      %v3953 = vadd.f32 %v3905, 0.008333334
      %v3954 = vadd.f32 %v3906, 0.008333334
      %v3955 = vadd.f32 %v3907, 0.008333334
      %v3956 = vadd.f32 %v3908, 0.008333334
      %v3957 = vadd.f32 %v3909, 0.008333334
      %v3958 = vadd.f32 %v3910, 0.008333334
      %v3959 = vadd.f32 %v3911, 0.008333334
      %v3960 = vadd.f32 %v3912, 0.008333334
      %v3961 = vadd.f32 %v3913, 0.008333334
      %v3962 = vadd.f32 %v3914, 0.008333334
      %v3963 = vadd.f32 %v3915, 0.008333334
      %v3964 = vadd.f32 %v3916, 0.008333334
      %v3965 = vadd.f32 %v3917, 0.008333334
      %v3966 = vadd.f32 %v3918, 0.008333334
      %v3967 = vadd.f32 %v3919, 0.008333334
      %v3968 = vadd.f32 %v3920, 0.008333334
      %v3969 = vadd.f32 %v3921, 0.008333334
      %v3970 = vadd.f32 %v3922, 0.008333334
      %v3971 = vadd.f32 %v3923, 0.008333334
      %v3972 = vadd.f32 %v3924, 0.008333334
      %v3973 = vadd.f32 %v3925, 0.008333334
      %v3974 = vadd.f32 %v3926, 0.008333334
      %v3975 = vadd.f32 %v3927, 0.008333334
      %v3976 = vadd.f32 %v3928, 0.008333334
      %v3977 = vadd.f32 %v3929, 0.008333334
      %v3978 = vadd.f32 %v3930, 0.008333334
      %v3979 = vadd.f32 %v3931, 0.008333334
      %v3980 = vadd.f32 %v3932, 0.008333334
      %v3981 = vadd.f32 %v3933, 0.008333334
      %v3982 = vadd.f32 %v3934, 0.008333334
      %v3983 = vadd.f32 %v3935, 0.008333334
      %v3984 = vadd.f32 %v3936, 0.008333334
      %v3985 = vadd.f32 %v3937, 0.008333334
      %v3986 = vadd.f32 %v3938, 0.008333334
      %v3987 = vadd.f32 %v3939, 0.008333334
      %v3988 = vadd.f32 %v3940, 0.008333334
      %v3989 = vadd.f32 %v3941, 0.008333334
      %v3990 = vadd.f32 %v3942, 0.008333334
      %v3991 = vadd.f32 %v3943, 0.008333334
      %v3992 = vadd.f32 %v3944, 0.008333334
      %v3993 = vadd.f32 %v3945, 0.008333334
      %v3994 = vadd.f32 %v3946, 0.008333334
      %v3995 = vadd.f32 %v3947, 0.008333334
      %v3996 = vmul.f32 %v3948, %v3564
      %v3997 = vmul.f32 %v3949, %v3565
      %v3998 = vmul.f32 %v3950, %v3566
      %v3999 = vmul.f32 %v3951, %v3567
      %v4000 = vmul.f32 %v3952, %v3568
      %v4001 = vmul.f32 %v3953, %v3569
      %v4002 = vmul.f32 %v3954, %v3570
      %v4003 = vmul.f32 %v3955, %v3571
      %v4004 = vmul.f32 %v3956, %v3572
      %v4005 = vmul.f32 %v3957, %v3573
      %v4006 = vmul.f32 %v3958, %v3574
      %v4007 = vmul.f32 %v3959, %v3575
      %v4008 = vmul.f32 %v3960, %v3576
      %v4009 = vmul.f32 %v3961, %v3577
      %v4010 = vmul.f32 %v3962, %v3578
      %v4011 = vmul.f32 %v3963, %v3579
      %v4012 = vmul.f32 %v3964, %v3580
      %v4013 = vmul.f32 %v3965, %v3581
      %v4014 = vmul.f32 %v3966, %v3582
      %v4015 = vmul.f32 %v3967, %v3583
      %v4016 = vmul.f32 %v3968, %v3584
      %v4017 = vmul.f32 %v3969, %v3585
      %v4018 = vmul.f32 %v3970, %v3586
      %v4019 = vmul.f32 %v3971, %v3587
      %v4020 = vmul.f32 %v3972, %v3588
      %v4021 = vmul.f32 %v3973, %v3589
      %v4022 = vmul.f32 %v3974, %v3590
      %v4023 = vmul.f32 %v3975, %v3591
      %v4024 = vmul.f32 %v3976, %v3592
      %v4025 = vmul.f32 %v3977, %v3593
      %v4026 = vmul.f32 %v3978, %v3594
      %v4027 = vmul.f32 %v3979, %v3595
      %v4028 = vmul.f32 %v3980, %v3596
      %v4029 = vmul.f32 %v3981, %v3597
      %v4030 = vmul.f32 %v3982, %v3598
      %v4031 = vmul.f32 %v3983, %v3599
      %v4032 = vmul.f32 %v3984, %v3600
      %v4033 = vmul.f32 %v3985, %v3601
      %v4034 = vmul.f32 %v3986, %v3602
      %v4035 = vmul.f32 %v3987, %v3603
      %v4036 = vmul.f32 %v3988, %v3604
      %v4037 = vmul.f32 %v3989, %v3605
      %v4038 = vmul.f32 %v3990, %v3606
      %v4039 = vmul.f32 %v3991, %v3607
      %v4040 = vmul.f32 %v3992, %v3608
      %v4041 = vmul.f32 %v3993, %v3609
      %v4042 = vmul.f32 %v3994, %v3610
      %v4043 = vmul.f32 %v3995, %v3611
      %v4044 = vadd.f32 %v3996, -0.16666667
      %v4045 = vadd.f32 %v3997, -0.16666667
      %v4046 = vadd.f32 %v3998, -0.16666667
      %v4047 = vadd.f32 %v3999, -0.16666667
      %v4048 = vadd.f32 %v4000, -0.16666667
      %v4049 = vadd.f32 %v4001, -0.16666667
      %v4050 = vadd.f32 %v4002, -0.16666667
      %v4051 = vadd.f32 %v4003, -0.16666667
      %v4052 = vadd.f32 %v4004, -0.16666667
      %v4053 = vadd.f32 %v4005, -0.16666667
      %v4054 = vadd.f32 %v4006, -0.16666667
      %v4055 = vadd.f32 %v4007, -0.16666667
      %v4056 = vadd.f32 %v4008, -0.16666667
      %v4057 = vadd.f32 %v4009, -0.16666667
      %v4058 = vadd.f32 %v4010, -0.16666667
      %v4059 = vadd.f32 %v4011, -0.16666667
      %v4060 = vadd.f32 %v4012, -0.16666667
      %v4061 = vadd.f32 %v4013, -0.16666667
      %v4062 = vadd.f32 %v4014, -0.16666667
      %v4063 = vadd.f32 %v4015, -0.16666667
      %v4064 = vadd.f32 %v4016, -0.16666667
      %v4065 = vadd.f32 %v4017, -0.16666667
      %v4066 = vadd.f32 %v4018, -0.16666667
      %v4067 = vadd.f32 %v4019, -0.16666667
      %v4068 = vadd.f32 %v4020, -0.16666667
      %v4069 = vadd.f32 %v4021, -0.16666667
      %v4070 = vadd.f32 %v4022, -0.16666667
      %v4071 = vadd.f32 %v4023, -0.16666667
      %v4072 = vadd.f32 %v4024, -0.16666667
      %v4073 = vadd.f32 %v4025, -0.16666667
      %v4074 = vadd.f32 %v4026, -0.16666667
      %v4075 = vadd.f32 %v4027, -0.16666667
      %v4076 = vadd.f32 %v4028, -0.16666667
      %v4077 = vadd.f32 %v4029, -0.16666667
      %v4078 = vadd.f32 %v4030, -0.16666667
      %v4079 = vadd.f32 %v4031, -0.16666667
      %v4080 = vadd.f32 %v4032, -0.16666667
      %v4081 = vadd.f32 %v4033, -0.16666667
      %v4082 = vadd.f32 %v4034, -0.16666667
      %v4083 = vadd.f32 %v4035, -0.16666667
      %v4084 = vadd.f32 %v4036, -0.16666667
      %v4085 = vadd.f32 %v4037, -0.16666667
      %v4086 = vadd.f32 %v4038, -0.16666667
      %v4087 = vadd.f32 %v4039, -0.16666667
      %v4088 = vadd.f32 %v4040, -0.16666667
      %v4089 = vadd.f32 %v4041, -0.16666667
      %v4090 = vadd.f32 %v4042, -0.16666667
      %v4091 = vadd.f32 %v4043, -0.16666667
      %v4092 = vmul.f32 %v4044, %v3564
      %v4093 = vmul.f32 %v4045, %v3565
      %v4094 = vmul.f32 %v4046, %v3566
      %v4095 = vmul.f32 %v4047, %v3567
      %v4096 = vmul.f32 %v4048, %v3568
      %v4097 = vmul.f32 %v4049, %v3569
      %v4098 = vmul.f32 %v4050, %v3570
      %v4099 = vmul.f32 %v4051, %v3571
      %v4100 = vmul.f32 %v4052, %v3572
      %v4101 = vmul.f32 %v4053, %v3573
      %v4102 = vmul.f32 %v4054, %v3574
      %v4103 = vmul.f32 %v4055, %v3575
      %v4104 = vmul.f32 %v4056, %v3576
      %v4105 = vmul.f32 %v4057, %v3577
      %v4106 = vmul.f32 %v4058, %v3578
      %v4107 = vmul.f32 %v4059, %v3579
      %v4108 = vmul.f32 %v4060, %v3580
      %v4109 = vmul.f32 %v4061, %v3581
      %v4110 = vmul.f32 %v4062, %v3582
      %v4111 = vmul.f32 %v4063, %v3583
      %v4112 = vmul.f32 %v4064, %v3584
      %v4113 = vmul.f32 %v4065, %v3585
      %v4114 = vmul.f32 %v4066, %v3586
      %v4115 = vmul.f32 %v4067, %v3587
      %v4116 = vmul.f32 %v4068, %v3588
      %v4117 = vmul.f32 %v4069, %v3589
      %v4118 = vmul.f32 %v4070, %v3590
      %v4119 = vmul.f32 %v4071, %v3591
      %v4120 = vmul.f32 %v4072, %v3592
      %v4121 = vmul.f32 %v4073, %v3593
      %v4122 = vmul.f32 %v4074, %v3594
      %v4123 = vmul.f32 %v4075, %v3595
      %v4124 = vmul.f32 %v4076, %v3596
      %v4125 = vmul.f32 %v4077, %v3597
      %v4126 = vmul.f32 %v4078, %v3598
      %v4127 = vmul.f32 %v4079, %v3599
      %v4128 = vmul.f32 %v4080, %v3600
      %v4129 = vmul.f32 %v4081, %v3601
      %v4130 = vmul.f32 %v4082, %v3602
      %v4131 = vmul.f32 %v4083, %v3603
      %v4132 = vmul.f32 %v4084, %v3604
      %v4133 = vmul.f32 %v4085, %v3605
      %v4134 = vmul.f32 %v4086, %v3606
      %v4135 = vmul.f32 %v4087, %v3607
      %v4136 = vmul.f32 %v4088, %v3608
      %v4137 = vmul.f32 %v4089, %v3609
      %v4138 = vmul.f32 %v4090, %v3610
      %v4139 = vmul.f32 %v4091, %v3611
      %v4140 = vadd.f32 %v4092, 1.0
      %v4141 = vadd.f32 %v4093, 1.0
      %v4142 = vadd.f32 %v4094, 1.0
      %v4143 = vadd.f32 %v4095, 1.0
      %v4144 = vadd.f32 %v4096, 1.0
      %v4145 = vadd.f32 %v4097, 1.0
      %v4146 = vadd.f32 %v4098, 1.0
      %v4147 = vadd.f32 %v4099, 1.0
      %v4148 = vadd.f32 %v4100, 1.0
      %v4149 = vadd.f32 %v4101, 1.0
      %v4150 = vadd.f32 %v4102, 1.0
      %v4151 = vadd.f32 %v4103, 1.0
      %v4152 = vadd.f32 %v4104, 1.0
      %v4153 = vadd.f32 %v4105, 1.0
      %v4154 = vadd.f32 %v4106, 1.0
      %v4155 = vadd.f32 %v4107, 1.0
      %v4156 = vadd.f32 %v4108, 1.0
      %v4157 = vadd.f32 %v4109, 1.0
      %v4158 = vadd.f32 %v4110, 1.0
      %v4159 = vadd.f32 %v4111, 1.0
      %v4160 = vadd.f32 %v4112, 1.0
      %v4161 = vadd.f32 %v4113, 1.0
      %v4162 = vadd.f32 %v4114, 1.0
      %v4163 = vadd.f32 %v4115, 1.0
      %v4164 = vadd.f32 %v4116, 1.0
      %v4165 = vadd.f32 %v4117, 1.0
      %v4166 = vadd.f32 %v4118, 1.0
      %v4167 = vadd.f32 %v4119, 1.0
      %v4168 = vadd.f32 %v4120, 1.0
      %v4169 = vadd.f32 %v4121, 1.0
      %v4170 = vadd.f32 %v4122, 1.0
      %v4171 = vadd.f32 %v4123, 1.0
      %v4172 = vadd.f32 %v4124, 1.0
      %v4173 = vadd.f32 %v4125, 1.0
      %v4174 = vadd.f32 %v4126, 1.0
      %v4175 = vadd.f32 %v4127, 1.0
      %v4176 = vadd.f32 %v4128, 1.0
      %v4177 = vadd.f32 %v4129, 1.0
      %v4178 = vadd.f32 %v4130, 1.0
      %v4179 = vadd.f32 %v4131, 1.0
      %v4180 = vadd.f32 %v4132, 1.0
      %v4181 = vadd.f32 %v4133, 1.0
      %v4182 = vadd.f32 %v4134, 1.0
      %v4183 = vadd.f32 %v4135, 1.0
      %v4184 = vadd.f32 %v4136, 1.0
      %v4185 = vadd.f32 %v4137, 1.0
      %v4186 = vadd.f32 %v4138, 1.0
      %v4187 = vadd.f32 %v4139, 1.0
      %v4188 = vmul.f32 %v3516, %v4140
      %v4189 = vmul.f32 %v3517, %v4141
      %v4190 = vmul.f32 %v3518, %v4142
      %v4191 = vmul.f32 %v3519, %v4143
      %v4192 = vmul.f32 %v3520, %v4144
      %v4193 = vmul.f32 %v3521, %v4145
      %v4194 = vmul.f32 %v3522, %v4146
      %v4195 = vmul.f32 %v3523, %v4147
      %v4196 = vmul.f32 %v3524, %v4148
      %v4197 = vmul.f32 %v3525, %v4149
      %v4198 = vmul.f32 %v3526, %v4150
      %v4199 = vmul.f32 %v3527, %v4151
      %v4200 = vmul.f32 %v3528, %v4152
      %v4201 = vmul.f32 %v3529, %v4153
      %v4202 = vmul.f32 %v3530, %v4154
      %v4203 = vmul.f32 %v3531, %v4155
      %v4204 = vmul.f32 %v3532, %v4156
      %v4205 = vmul.f32 %v3533, %v4157
      %v4206 = vmul.f32 %v3534, %v4158
      %v4207 = vmul.f32 %v3535, %v4159
      %v4208 = vmul.f32 %v3536, %v4160
      %v4209 = vmul.f32 %v3537, %v4161
      %v4210 = vmul.f32 %v3538, %v4162
      %v4211 = vmul.f32 %v3539, %v4163
      %v4212 = vmul.f32 %v3540, %v4164
      %v4213 = vmul.f32 %v3541, %v4165
      %v4214 = vmul.f32 %v3542, %v4166
      %v4215 = vmul.f32 %v3543, %v4167
      %v4216 = vmul.f32 %v3544, %v4168
      %v4217 = vmul.f32 %v3545, %v4169
      %v4218 = vmul.f32 %v3546, %v4170
      %v4219 = vmul.f32 %v3547, %v4171
      %v4220 = vmul.f32 %v3548, %v4172
      %v4221 = vmul.f32 %v3549, %v4173
      %v4222 = vmul.f32 %v3550, %v4174
      %v4223 = vmul.f32 %v3551, %v4175
      %v4224 = vmul.f32 %v3552, %v4176
      %v4225 = vmul.f32 %v3553, %v4177
      %v4226 = vmul.f32 %v3554, %v4178
      %v4227 = vmul.f32 %v3555, %v4179
      %v4228 = vmul.f32 %v3556, %v4180
      %v4229 = vmul.f32 %v3557, %v4181
      %v4230 = vmul.f32 %v3558, %v4182
      %v4231 = vmul.f32 %v3559, %v4183
      %v4232 = vmul.f32 %v3560, %v4184
      %v4233 = vmul.f32 %v3561, %v4185
      %v4234 = vmul.f32 %v3562, %v4186
      %v4235 = vmul.f32 %v3563, %v4187
      %v4236 = vld [vmem:[%s6] sm:$0x3]
      %v4237 = vpack.c.bf16 %v4200, %v4188
      %v4238 = vpack.c.bf16 %v4201, %v4189
      %v4239 = vpack.c.bf16 %v4202, %v4190
      %v4240 = vpack.c.bf16 %v4203, %v4191
      %v4241 = vpack.c.bf16 %v4204, %v4192
      %v4242 = vpack.c.bf16 %v4205, %v4193
      %v4243 = vpack.c.bf16 %v4206, %v4194
      %v4244 = vpack.c.bf16 %v4207, %v4195
      %v4245 = vpack.c.bf16 %v4208, %v4196
      %v4246 = vpack.c.bf16 %v4209, %v4197
      %v4247 = vpack.c.bf16 %v4210, %v4198
      %v4248 = vpack.c.bf16 %v4211, %v4199
      %v4249 = vpack.c.bf16 %v4224, %v4212
      %v4250 = vpack.c.bf16 %v4225, %v4213
      %v4251 = vpack.c.bf16 %v4226, %v4214
      %v4252 = vpack.c.bf16 %v4227, %v4215
      %v4253 = vpack.c.bf16 %v4228, %v4216
      %v4254 = vpack.c.bf16 %v4229, %v4217
      %v4255 = vpack.c.bf16 %v4230, %v4218
      %v4256 = vpack.c.bf16 %v4231, %v4219
      %v4257 = vpack.c.bf16 %v4232, %v4220
      %v4258 = vpack.c.bf16 %v4233, %v4221
      %v4259 = vpack.c.bf16 %v4234, %v4222
      %v4260 = vpack.c.bf16 %v4235, %v4223
      %v4261 = vld [vmem:[%s7] sm:$0x7]
      %4263 = vset.pattern.permute.xlu0 0
      %4264 = vperm.xlu0 %4263, %v4261
      %v4265 = vpop.permute.xlu0 %4264
      %v4268 = vsel %vm2865, %v4236, 0
      %4270 = vmatpush.bf16.msra.mxu0 0
      %4271 = vmatpush.bf16.msra.mxu0 0
      %4272 = vmatpush.bf16.msra.mxu0 0
      %4273 = vmatpush.bf16.msra.mxu0 0
      %4274 = vmatpush.bf16.msra.mxu0 0
      %4275 = vmatpush.bf16.msra.mxu0 0
      %4276 = vmatpush.bf16.msra.mxu0 %v4249
      %4277 = vmatpush.bf16.msra.mxu0 %v4237
      %4278 = vmatmul.bf16.gmra.mxu0 %v4268
      %v4279 = vpop.f32.mrf.mxu0
      %v4280 = vadd.f32 %v4265, %v4279
      %v4281 = vpop.f32.mrf.mxu0
      %4282 = vdwg.mxu0
      %4283 = vmatpush.bf16.msra.mxu0 0
      %4284 = vmatpush.bf16.msra.mxu0 0
      %4285 = vmatpush.bf16.msra.mxu0 0
      %4286 = vmatpush.bf16.msra.mxu0 0
      %4287 = vmatpush.bf16.msra.mxu0 0
      %4288 = vmatpush.bf16.msra.mxu0 0
      %4289 = vmatpush.bf16.msra.mxu0 %v4250
      %4290 = vmatpush.bf16.msra.mxu0 %v4238
      %4291 = vmatmul.bf16.gmra.mxu0 %v4268
      %v4292 = vpop.f32.mrf.mxu0
      %v4293 = vadd.f32 %v4265, %v4292
      %v4294 = vpop.f32.mrf.mxu0
      %4295 = vdwg.mxu0
      %4296 = vmatpush.bf16.msra.mxu0 0
      %4297 = vmatpush.bf16.msra.mxu0 0
      %4298 = vmatpush.bf16.msra.mxu0 0
      %4299 = vmatpush.bf16.msra.mxu0 0
      %4300 = vmatpush.bf16.msra.mxu0 0
      %4301 = vmatpush.bf16.msra.mxu0 0
      %4302 = vmatpush.bf16.msra.mxu0 %v4251
      %4303 = vmatpush.bf16.msra.mxu0 %v4239
      %4304 = vmatmul.bf16.gmra.mxu0 %v4268
      %v4305 = vpop.f32.mrf.mxu0
      %v4306 = vadd.f32 %v4265, %v4305
      %v4307 = vpop.f32.mrf.mxu0
      %4308 = vdwg.mxu0
      %4309 = vmatpush.bf16.msra.mxu0 0
      %4310 = vmatpush.bf16.msra.mxu0 0
      %4311 = vmatpush.bf16.msra.mxu0 0
      %4312 = vmatpush.bf16.msra.mxu0 0
      %4313 = vmatpush.bf16.msra.mxu0 0
      %4314 = vmatpush.bf16.msra.mxu0 0
      %4315 = vmatpush.bf16.msra.mxu0 %v4252
      %4316 = vmatpush.bf16.msra.mxu0 %v4240
      %4317 = vmatmul.bf16.gmra.mxu0 %v4268
      %v4318 = vpop.f32.mrf.mxu0
      %v4319 = vadd.f32 %v4265, %v4318
      %v4320 = vpop.f32.mrf.mxu0
      %4321 = vdwg.mxu0
      %4322 = vmatpush.bf16.msra.mxu0 0
      %4323 = vmatpush.bf16.msra.mxu0 0
      %4324 = vmatpush.bf16.msra.mxu0 0
      %4325 = vmatpush.bf16.msra.mxu0 0
      %4326 = vmatpush.bf16.msra.mxu0 0
      %4327 = vmatpush.bf16.msra.mxu0 0
      %4328 = vmatpush.bf16.msra.mxu0 %v4253
      %4329 = vmatpush.bf16.msra.mxu0 %v4241
      %4330 = vmatmul.bf16.gmra.mxu0 %v4268
      %v4331 = vpop.f32.mrf.mxu0
      %v4332 = vadd.f32 %v4265, %v4331
      %v4333 = vpop.f32.mrf.mxu0
      %4334 = vdwg.mxu0
      %4335 = vmatpush.bf16.msra.mxu0 0
      %4336 = vmatpush.bf16.msra.mxu0 0
      %4337 = vmatpush.bf16.msra.mxu0 0
      %4338 = vmatpush.bf16.msra.mxu0 0
      %4339 = vmatpush.bf16.msra.mxu0 0
      %4340 = vmatpush.bf16.msra.mxu0 0
      %4341 = vmatpush.bf16.msra.mxu0 %v4254
      %4342 = vmatpush.bf16.msra.mxu0 %v4242
      %4343 = vmatmul.bf16.gmra.mxu0 %v4268
      %v4344 = vpop.f32.mrf.mxu0
      %v4345 = vadd.f32 %v4265, %v4344
      %v4346 = vpop.f32.mrf.mxu0
      %4347 = vdwg.mxu0
      %4348 = vmatpush.bf16.msra.mxu0 0
      %4349 = vmatpush.bf16.msra.mxu0 0
      %4350 = vmatpush.bf16.msra.mxu0 0
      %4351 = vmatpush.bf16.msra.mxu0 0
      %4352 = vmatpush.bf16.msra.mxu0 0
      %4353 = vmatpush.bf16.msra.mxu0 0
      %4354 = vmatpush.bf16.msra.mxu0 %v4255
      %4355 = vmatpush.bf16.msra.mxu0 %v4243
      %4356 = vmatmul.bf16.gmra.mxu0 %v4268
      %v4357 = vpop.f32.mrf.mxu0
      %v4358 = vadd.f32 %v4265, %v4357
      %v4359 = vpop.f32.mrf.mxu0
      %4360 = vdwg.mxu0
      %4361 = vmatpush.bf16.msra.mxu0 0
      %4362 = vmatpush.bf16.msra.mxu0 0
      %4363 = vmatpush.bf16.msra.mxu0 0
      %4364 = vmatpush.bf16.msra.mxu0 0
      %4365 = vmatpush.bf16.msra.mxu0 0
      %4366 = vmatpush.bf16.msra.mxu0 0
      %4367 = vmatpush.bf16.msra.mxu0 %v4256
      %4368 = vmatpush.bf16.msra.mxu0 %v4244
      %4369 = vmatmul.bf16.gmra.mxu0 %v4268
      %v4370 = vpop.f32.mrf.mxu0
      %v4371 = vadd.f32 %v4265, %v4370
      %v4372 = vpop.f32.mrf.mxu0
      %4373 = vdwg.mxu0
      %4374 = vmatpush.bf16.msra.mxu0 0
      %4375 = vmatpush.bf16.msra.mxu0 0
      %4376 = vmatpush.bf16.msra.mxu0 0
      %4377 = vmatpush.bf16.msra.mxu0 0
      %4378 = vmatpush.bf16.msra.mxu0 0
      %4379 = vmatpush.bf16.msra.mxu0 0
      %4380 = vmatpush.bf16.msra.mxu0 %v4257
      %4381 = vmatpush.bf16.msra.mxu0 %v4245
      %4382 = vmatmul.bf16.gmra.mxu0 %v4268
      %v4383 = vpop.f32.mrf.mxu0
      %v4384 = vadd.f32 %v4265, %v4383
      %v4385 = vpop.f32.mrf.mxu0
      %4386 = vdwg.mxu0
      %4387 = vmatpush.bf16.msra.mxu0 0
      %4388 = vmatpush.bf16.msra.mxu0 0
      %4389 = vmatpush.bf16.msra.mxu0 0
      %4390 = vmatpush.bf16.msra.mxu0 0
      %4391 = vmatpush.bf16.msra.mxu0 0
      %4392 = vmatpush.bf16.msra.mxu0 0
      %4393 = vmatpush.bf16.msra.mxu0 %v4258
      %4394 = vmatpush.bf16.msra.mxu0 %v4246
      %4395 = vmatmul.bf16.gmra.mxu0 %v4268
      %v4396 = vpop.f32.mrf.mxu0
      %v4397 = vadd.f32 %v4265, %v4396
      %v4398 = vpop.f32.mrf.mxu0
      %4399 = vdwg.mxu0
      %4400 = vmatpush.bf16.msra.mxu0 0
      %4401 = vmatpush.bf16.msra.mxu0 0
      %4402 = vmatpush.bf16.msra.mxu0 0
      %4403 = vmatpush.bf16.msra.mxu0 0
      %4404 = vmatpush.bf16.msra.mxu0 0
      %4405 = vmatpush.bf16.msra.mxu0 0
      %4406 = vmatpush.bf16.msra.mxu0 %v4259
      %4407 = vmatpush.bf16.msra.mxu0 %v4247
      %4408 = vmatmul.bf16.gmra.mxu0 %v4268
      %v4409 = vpop.f32.mrf.mxu0
      %v4410 = vadd.f32 %v4265, %v4409
      %v4411 = vpop.f32.mrf.mxu0
      %4412 = vdwg.mxu0
      %4413 = vmatpush.bf16.msra.mxu0 0
      %4414 = vmatpush.bf16.msra.mxu0 0
      %4415 = vmatpush.bf16.msra.mxu0 0
      %4416 = vmatpush.bf16.msra.mxu0 0
      %4417 = vmatpush.bf16.msra.mxu0 0
      %4418 = vmatpush.bf16.msra.mxu0 0
      %4419 = vmatpush.bf16.msra.mxu0 %v4260
      %4420 = vmatpush.bf16.msra.mxu0 %v4248
      %4421 = vmatmul.bf16.gmra.mxu0 %v4268
      %v4422 = vpop.f32.mrf.mxu0
      %v4423 = vadd.f32 %v4265, %v4422
      %v4424 = vpop.f32.mrf.mxu0
      %4425 = vdwg.mxu0
      %v4426 = vxor.u32 %v4280, 2147483648
      %v4427 = vxor.u32 %v4293, 2147483648
      %v4428 = vxor.u32 %v4306, 2147483648
      %v4429 = vxor.u32 %v4319, 2147483648
      %v4430 = vxor.u32 %v4332, 2147483648
      %v4431 = vxor.u32 %v4345, 2147483648
      %v4432 = vxor.u32 %v4358, 2147483648
      %v4433 = vxor.u32 %v4371, 2147483648
      %v4434 = vxor.u32 %v4384, 2147483648
      %v4435 = vxor.u32 %v4397, 2147483648
      %v4436 = vxor.u32 %v4410, 2147483648
      %v4437 = vxor.u32 %v4423, 2147483648
      %v4438 = vmul.f32 %v4426, 1.442695
      %v4439 = vpow.pop %v4438
      %v4440 = vmul.f32 %v4427, 1.442695
      %v4441 = vpow.pop %v4440
      %v4442 = vmul.f32 %v4428, 1.442695
      %v4443 = vpow.pop %v4442
      %v4444 = vmul.f32 %v4429, 1.442695
      %v4445 = vpow.pop %v4444
      %v4446 = vmul.f32 %v4430, 1.442695
      %v4447 = vpow.pop %v4446
      %v4448 = vmul.f32 %v4431, 1.442695
      %v4449 = vpow.pop %v4448
      %v4450 = vmul.f32 %v4432, 1.442695
      %v4451 = vpow.pop %v4450
      %v4452 = vmul.f32 %v4433, 1.442695
      %v4453 = vpow.pop %v4452
      %v4454 = vmul.f32 %v4434, 1.442695
      %v4455 = vpow.pop %v4454
      %v4456 = vmul.f32 %v4435, 1.442695
      %v4457 = vpow.pop %v4456
      %v4458 = vmul.f32 %v4436, 1.442695
      %v4459 = vpow.pop %v4458
      %v4460 = vmul.f32 %v4437, 1.442695
      %v4461 = vpow.pop %v4460
      %v4462 = vadd.f32 %v4439, 1.0
      %v4463 = vadd.f32 %v4441, 1.0
      %v4464 = vadd.f32 %v4443, 1.0
      %v4465 = vadd.f32 %v4445, 1.0
      %v4466 = vadd.f32 %v4447, 1.0
      %v4467 = vadd.f32 %v4449, 1.0
      %v4468 = vadd.f32 %v4451, 1.0
      %v4469 = vadd.f32 %v4453, 1.0
      %v4470 = vadd.f32 %v4455, 1.0
      %v4471 = vadd.f32 %v4457, 1.0
      %v4472 = vadd.f32 %v4459, 1.0
      %v4473 = vadd.f32 %v4461, 1.0
      %v4474 = vrcp.pop %v4462
      %v4475 = vmul.f32 %v4462, %v4474
      %v4476 = vsub.f32 1.0, %v4475
      %v4477 = vmul.f32 %v4474, %v4476
      %v4478 = vadd.f32 %v4474, %v4477
      %vm4479 = vweird.f32 %v4462
      %vm4480 = vweird.f32 %v4474
      %vm4481 = vmor %vm4479, %vm4480
      %v4482 = vsel %vm4481, %v4474, %v4478
      %v4483 = vand.u32 2147483647, %v4462
      %vm4484 = vcmp.eq.f32.partialorder %v4483, 8.507059e+37
      %v4485 = vand.u32 %v4462, 2147483648
      %v4486 = vor.u32 1.1754944e-38, %v4485
      %v4487 = vsel %vm4484, %v4486, %v4482
      %v4488 = vmul.f32 1.0, %v4487
      %v4489 = vrcp.pop %v4463
      %v4490 = vmul.f32 %v4463, %v4489
      %v4491 = vsub.f32 1.0, %v4490
      %v4492 = vmul.f32 %v4489, %v4491
      %v4493 = vadd.f32 %v4489, %v4492
      %vm4494 = vweird.f32 %v4463
      %vm4495 = vweird.f32 %v4489
      %vm4496 = vmor %vm4494, %vm4495
      %v4497 = vsel %vm4496, %v4489, %v4493
      %v4498 = vand.u32 2147483647, %v4463
      %vm4499 = vcmp.eq.f32.partialorder %v4498, 8.507059e+37
      %v4500 = vand.u32 %v4463, 2147483648
      %v4501 = vor.u32 1.1754944e-38, %v4500
      %v4502 = vsel %vm4499, %v4501, %v4497
      %v4503 = vmul.f32 1.0, %v4502
      %v4504 = vrcp.pop %v4464
      %v4505 = vmul.f32 %v4464, %v4504
      %v4506 = vsub.f32 1.0, %v4505
      %v4507 = vmul.f32 %v4504, %v4506
      %v4508 = vadd.f32 %v4504, %v4507
      %vm4509 = vweird.f32 %v4464
      %vm4510 = vweird.f32 %v4504
      %vm4511 = vmor %vm4509, %vm4510
      %v4512 = vsel %vm4511, %v4504, %v4508
      %v4513 = vand.u32 2147483647, %v4464
      %vm4514 = vcmp.eq.f32.partialorder %v4513, 8.507059e+37
      %v4515 = vand.u32 %v4464, 2147483648
      %v4516 = vor.u32 1.1754944e-38, %v4515
      %v4517 = vsel %vm4514, %v4516, %v4512
      %v4518 = vmul.f32 1.0, %v4517
      %v4519 = vrcp.pop %v4465
      %v4520 = vmul.f32 %v4465, %v4519
      %v4521 = vsub.f32 1.0, %v4520
      %v4522 = vmul.f32 %v4519, %v4521
      %v4523 = vadd.f32 %v4519, %v4522
      %vm4524 = vweird.f32 %v4465
      %vm4525 = vweird.f32 %v4519
      %vm4526 = vmor %vm4524, %vm4525
      %v4527 = vsel %vm4526, %v4519, %v4523
      %v4528 = vand.u32 2147483647, %v4465
      %vm4529 = vcmp.eq.f32.partialorder %v4528, 8.507059e+37
      %v4530 = vand.u32 %v4465, 2147483648
      %v4531 = vor.u32 1.1754944e-38, %v4530
      %v4532 = vsel %vm4529, %v4531, %v4527
      %v4533 = vmul.f32 1.0, %v4532
      %v4534 = vrcp.pop %v4466
      %v4535 = vmul.f32 %v4466, %v4534
      %v4536 = vsub.f32 1.0, %v4535
      %v4537 = vmul.f32 %v4534, %v4536
      %v4538 = vadd.f32 %v4534, %v4537
      %vm4539 = vweird.f32 %v4466
      %vm4540 = vweird.f32 %v4534
      %vm4541 = vmor %vm4539, %vm4540
      %v4542 = vsel %vm4541, %v4534, %v4538
      %v4543 = vand.u32 2147483647, %v4466
      %vm4544 = vcmp.eq.f32.partialorder %v4543, 8.507059e+37
      %v4545 = vand.u32 %v4466, 2147483648
      %v4546 = vor.u32 1.1754944e-38, %v4545
      %v4547 = vsel %vm4544, %v4546, %v4542
      %v4548 = vmul.f32 1.0, %v4547
      %v4549 = vrcp.pop %v4467
      %v4550 = vmul.f32 %v4467, %v4549
      %v4551 = vsub.f32 1.0, %v4550
      %v4552 = vmul.f32 %v4549, %v4551
      %v4553 = vadd.f32 %v4549, %v4552
      %vm4554 = vweird.f32 %v4467
      %vm4555 = vweird.f32 %v4549
      %vm4556 = vmor %vm4554, %vm4555
      %v4557 = vsel %vm4556, %v4549, %v4553
      %v4558 = vand.u32 2147483647, %v4467
      %vm4559 = vcmp.eq.f32.partialorder %v4558, 8.507059e+37
      %v4560 = vand.u32 %v4467, 2147483648
      %v4561 = vor.u32 1.1754944e-38, %v4560
      %v4562 = vsel %vm4559, %v4561, %v4557
      %v4563 = vmul.f32 1.0, %v4562
      %v4564 = vrcp.pop %v4468
      %v4565 = vmul.f32 %v4468, %v4564
      %v4566 = vsub.f32 1.0, %v4565
      %v4567 = vmul.f32 %v4564, %v4566
      %v4568 = vadd.f32 %v4564, %v4567
      %vm4569 = vweird.f32 %v4468
      %vm4570 = vweird.f32 %v4564
      %vm4571 = vmor %vm4569, %vm4570
      %v4572 = vsel %vm4571, %v4564, %v4568
      %v4573 = vand.u32 2147483647, %v4468
      %vm4574 = vcmp.eq.f32.partialorder %v4573, 8.507059e+37
      %v4575 = vand.u32 %v4468, 2147483648
      %v4576 = vor.u32 1.1754944e-38, %v4575
      %v4577 = vsel %vm4574, %v4576, %v4572
      %v4578 = vmul.f32 1.0, %v4577
      %v4579 = vrcp.pop %v4469
      %v4580 = vmul.f32 %v4469, %v4579
      %v4581 = vsub.f32 1.0, %v4580
      %v4582 = vmul.f32 %v4579, %v4581
      %v4583 = vadd.f32 %v4579, %v4582
      %vm4584 = vweird.f32 %v4469
      %vm4585 = vweird.f32 %v4579
      %vm4586 = vmor %vm4584, %vm4585
      %v4587 = vsel %vm4586, %v4579, %v4583
      %v4588 = vand.u32 2147483647, %v4469
      %vm4589 = vcmp.eq.f32.partialorder %v4588, 8.507059e+37
      %v4590 = vand.u32 %v4469, 2147483648
      %v4591 = vor.u32 1.1754944e-38, %v4590
      %v4592 = vsel %vm4589, %v4591, %v4587
      %v4593 = vmul.f32 1.0, %v4592
      %v4594 = vrcp.pop %v4470
      %v4595 = vmul.f32 %v4470, %v4594
      %v4596 = vsub.f32 1.0, %v4595
      %v4597 = vmul.f32 %v4594, %v4596
      %v4598 = vadd.f32 %v4594, %v4597
      %vm4599 = vweird.f32 %v4470
      %vm4600 = vweird.f32 %v4594
      %vm4601 = vmor %vm4599, %vm4600
      %v4602 = vsel %vm4601, %v4594, %v4598
      %v4603 = vand.u32 2147483647, %v4470
      %vm4604 = vcmp.eq.f32.partialorder %v4603, 8.507059e+37
      %v4605 = vand.u32 %v4470, 2147483648
      %v4606 = vor.u32 1.1754944e-38, %v4605
      %v4607 = vsel %vm4604, %v4606, %v4602
      %v4608 = vmul.f32 1.0, %v4607
      %v4609 = vrcp.pop %v4471
      %v4610 = vmul.f32 %v4471, %v4609
      %v4611 = vsub.f32 1.0, %v4610
      %v4612 = vmul.f32 %v4609, %v4611
      %v4613 = vadd.f32 %v4609, %v4612
      %vm4614 = vweird.f32 %v4471
      %vm4615 = vweird.f32 %v4609
      %vm4616 = vmor %vm4614, %vm4615
      %v4617 = vsel %vm4616, %v4609, %v4613
      %v4618 = vand.u32 2147483647, %v4471
      %vm4619 = vcmp.eq.f32.partialorder %v4618, 8.507059e+37
      %v4620 = vand.u32 %v4471, 2147483648
      %v4621 = vor.u32 1.1754944e-38, %v4620
      %v4622 = vsel %vm4619, %v4621, %v4617
      %v4623 = vmul.f32 1.0, %v4622
      %v4624 = vrcp.pop %v4472
      %v4625 = vmul.f32 %v4472, %v4624
      %v4626 = vsub.f32 1.0, %v4625
      %v4627 = vmul.f32 %v4624, %v4626
      %v4628 = vadd.f32 %v4624, %v4627
      %vm4629 = vweird.f32 %v4472
      %vm4630 = vweird.f32 %v4624
      %vm4631 = vmor %vm4629, %vm4630
      %v4632 = vsel %vm4631, %v4624, %v4628
      %v4633 = vand.u32 2147483647, %v4472
      %vm4634 = vcmp.eq.f32.partialorder %v4633, 8.507059e+37
      %v4635 = vand.u32 %v4472, 2147483648
      %v4636 = vor.u32 1.1754944e-38, %v4635
      %v4637 = vsel %vm4634, %v4636, %v4632
      %v4638 = vmul.f32 1.0, %v4637
      %v4639 = vrcp.pop %v4473
      %v4640 = vmul.f32 %v4473, %v4639
      %v4641 = vsub.f32 1.0, %v4640
      %v4642 = vmul.f32 %v4639, %v4641
      %v4643 = vadd.f32 %v4639, %v4642
      %vm4644 = vweird.f32 %v4473
      %vm4645 = vweird.f32 %v4639
      %vm4646 = vmor %vm4644, %vm4645
      %v4647 = vsel %vm4646, %v4639, %v4643
      %v4648 = vand.u32 2147483647, %v4473
      %vm4649 = vcmp.eq.f32.partialorder %v4648, 8.507059e+37
      %v4650 = vand.u32 %v4473, 2147483648
      %v4651 = vor.u32 1.1754944e-38, %v4650
      %v4652 = vsel %vm4649, %v4651, %v4647
      %v4653 = vmul.f32 1.0, %v4652
      %v4654 = vmul.f32 %v3166, -0.048
      %v4655 = vmul.f32 %v3167, -0.048
      %v4656 = vmul.f32 %v4654, 1.442695
      %v4657 = vpow.pop %v4656
      %v4658 = vmul.f32 %v4655, 1.442695
      %v4659 = vpow.pop %v4658
      %v4660 = vsub.f32 1.0, %v4657
      %v4661 = vsub.f32 1.0, %v4659
      %v4662 = vperm.slane %v4660, 0
      %v4663 = vperm.slane %v4661, 0
      %v4664 = vmul.f32 %v4662, %v4488
      %v4665 = vmul.f32 %v4663, %v4503
      %v4666 = vadd.f32 %v4664, 0.0
      %v4667 = vadd.f32 %v4665, 0.0
      %v4668 = vmul.f32 %v4660, 0.88
      %v4669 = vmul.f32 %v4661, 0.88
      %v4670 = vadd.f32 %v4668, 0.0
      %v4671 = vadd.f32 %v4669, 0.0
      %v4672 = vadd.f32 %v4660, 0.0
      %v4673 = vadd.f32 %v4661, 0.0
      %v4674 = vsub.f32 1.0, %v4660
      %v4675 = vsub.f32 1.0, %v4661
      %v4676 = vadd.f32 %v4674, 1e-10
      %v4677 = vadd.f32 %v4675, 1e-10
      %v4678 = vmul.f32 %v3168, -0.048
      %v4679 = vmul.f32 %v3169, -0.048
      %v4680 = vmul.f32 %v4678, 1.442695
      %v4681 = vpow.pop %v4680
      %v4682 = vmul.f32 %v4679, 1.442695
      %v4683 = vpow.pop %v4682
      %v4684 = vsub.f32 1.0, %v4681
      %v4685 = vsub.f32 1.0, %v4683
      %v4686 = vmul.f32 %v4684, %v4676
      %v4687 = vmul.f32 %v4685, %v4677
      %v4688 = vperm.slane %v4686, 0
      %v4689 = vperm.slane %v4687, 0
      %v4690 = vmul.f32 %v4688, %v4518
      %v4691 = vmul.f32 %v4689, %v4533
      %v4692 = vadd.f32 %v4666, %v4690
      %v4693 = vadd.f32 %v4667, %v4691
      %v4694 = vmul.f32 %v4686, 0.928
      %v4695 = vmul.f32 %v4687, 0.928
      %v4696 = vadd.f32 %v4670, %v4694
      %v4697 = vadd.f32 %v4671, %v4695
      %v4698 = vadd.f32 %v4672, %v4686
      %v4699 = vadd.f32 %v4673, %v4687
      %v4700 = vsub.f32 1.0, %v4684
      %v4701 = vsub.f32 1.0, %v4685
      %v4702 = vadd.f32 %v4700, 1e-10
      %v4703 = vadd.f32 %v4701, 1e-10
      %v4704 = vmul.f32 %v4676, %v4702
      %v4705 = vmul.f32 %v4677, %v4703
      %v4706 = vmul.f32 %v3170, -0.048
      %v4707 = vmul.f32 %v3171, -0.048
      %v4708 = vmul.f32 %v4706, 1.442695
      %v4709 = vpow.pop %v4708
      %v4710 = vmul.f32 %v4707, 1.442695
      %v4711 = vpow.pop %v4710
      %v4712 = vsub.f32 1.0, %v4709
      %v4713 = vsub.f32 1.0, %v4711
      %v4714 = vmul.f32 %v4712, %v4704
      %v4715 = vmul.f32 %v4713, %v4705
      %v4716 = vperm.slane %v4714, 0
      %v4717 = vperm.slane %v4715, 0
      %v4718 = vmul.f32 %v4716, %v4548
      %v4719 = vmul.f32 %v4717, %v4563
      %v4720 = vadd.f32 %v4692, %v4718
      %v4721 = vadd.f32 %v4693, %v4719
      %v4722 = vmul.f32 %v4714, 0.976
      %v4723 = vmul.f32 %v4715, 0.976
      %v4724 = vadd.f32 %v4696, %v4722
      %v4725 = vadd.f32 %v4697, %v4723
      %v4726 = vadd.f32 %v4698, %v4714
      %v4727 = vadd.f32 %v4699, %v4715
      %v4728 = vsub.f32 1.0, %v4712
      %v4729 = vsub.f32 1.0, %v4713
      %v4730 = vadd.f32 %v4728, 1e-10
      %v4731 = vadd.f32 %v4729, 1e-10
      %v4732 = vmul.f32 %v4704, %v4730
      %v4733 = vmul.f32 %v4705, %v4731
      %v4734 = vmul.f32 %v3172, -0.048
      %v4735 = vmul.f32 %v3173, -0.048
      %v4736 = vmul.f32 %v4734, 1.442695
      %v4737 = vpow.pop %v4736
      %v4738 = vmul.f32 %v4735, 1.442695
      %v4739 = vpow.pop %v4738
      %v4740 = vsub.f32 1.0, %v4737
      %v4741 = vsub.f32 1.0, %v4739
      %v4742 = vmul.f32 %v4740, %v4732
      %v4743 = vmul.f32 %v4741, %v4733
      %v4744 = vperm.slane %v4742, 0
      %v4745 = vperm.slane %v4743, 0
      %v4746 = vmul.f32 %v4744, %v4578
      %v4747 = vmul.f32 %v4745, %v4593
      %v4748 = vadd.f32 %v4720, %v4746
      %v4749 = vadd.f32 %v4721, %v4747
      %v4750 = vmul.f32 %v4742, 1.024
      %v4751 = vmul.f32 %v4743, 1.024
      %v4752 = vadd.f32 %v4724, %v4750
      %v4753 = vadd.f32 %v4725, %v4751
      %v4754 = vadd.f32 %v4726, %v4742
      %v4755 = vadd.f32 %v4727, %v4743
      %v4756 = vsub.f32 1.0, %v4740
      %v4757 = vsub.f32 1.0, %v4741
      %v4758 = vadd.f32 %v4756, 1e-10
      %v4759 = vadd.f32 %v4757, 1e-10
      %v4760 = vmul.f32 %v4732, %v4758
      %v4761 = vmul.f32 %v4733, %v4759
      %v4762 = vmul.f32 %v3174, -0.048
      %v4763 = vmul.f32 %v3175, -0.048
      %v4764 = vmul.f32 %v4762, 1.442695
      %v4765 = vpow.pop %v4764
      %v4766 = vmul.f32 %v4763, 1.442695
      %v4767 = vpow.pop %v4766
      %v4768 = vsub.f32 1.0, %v4765
      %v4769 = vsub.f32 1.0, %v4767
      %v4770 = vmul.f32 %v4768, %v4760
      %v4771 = vmul.f32 %v4769, %v4761
      %v4772 = vperm.slane %v4770, 0
      %v4773 = vperm.slane %v4771, 0
      %v4774 = vmul.f32 %v4772, %v4608
      %v4775 = vmul.f32 %v4773, %v4623
      %v4776 = vadd.f32 %v4748, %v4774
      %v4777 = vadd.f32 %v4749, %v4775
      %v4778 = vmul.f32 %v4770, 1.072
      %v4779 = vmul.f32 %v4771, 1.072
      %v4780 = vadd.f32 %v4752, %v4778
      %v4781 = vadd.f32 %v4753, %v4779
      %v4782 = vadd.f32 %v4754, %v4770
      %v4783 = vadd.f32 %v4755, %v4771
      %v4784 = vsub.f32 1.0, %v4768
      %v4785 = vsub.f32 1.0, %v4769
      %v4786 = vadd.f32 %v4784, 1e-10
      %v4787 = vadd.f32 %v4785, 1e-10
      %v4788 = vmul.f32 %v4760, %v4786
      %v4789 = vmul.f32 %v4761, %v4787
      %v4790 = vmul.f32 %v3176, -1e+10
      %v4791 = vmul.f32 %v3177, -1e+10
      %v4792 = vmul.f32 %v4790, 1.442695
      %v4793 = vpow.pop %v4792
      %v4794 = vmul.f32 %v4791, 1.442695
      %v4795 = vpow.pop %v4794
      %v4796 = vsub.f32 1.0, %v4793
      %v4797 = vsub.f32 1.0, %v4795
      %v4798 = vmul.f32 %v4796, %v4788
      %v4799 = vmul.f32 %v4797, %v4789
      %v4800 = vperm.slane %v4798, 0
      %v4801 = vperm.slane %v4799, 0
      %v4802 = vmul.f32 %v4800, %v4638
      %v4803 = vmul.f32 %v4801, %v4653
      %v4804 = vadd.f32 %v4776, %v4802
      %v4805 = vadd.f32 %v4777, %v4803
      %v4806 = vmul.f32 %v4798, 1.12
      %v4807 = vmul.f32 %v4799, 1.12
      %v4808 = vadd.f32 %v4780, %v4806
      %v4809 = vadd.f32 %v4781, %v4807
      %v4810 = vadd.f32 %v4782, %v4798
      %v4811 = vadd.f32 %v4783, %v4799
      %v4812 = vsub.f32 1.0, %v4810
      %v4813 = vsub.f32 1.0, %v4811
      %v4814 = vperm.slane %v4812, 0
      %v4815 = vperm.slane %v4813, 0
      %v4816 = vmul.f32 %v4814, %v4638
      %v4817 = vmul.f32 %v4815, %v4653
      %v4818 = vadd.f32 %v4804, %v4816
      %v4819 = vadd.f32 %v4805, %v4817
      %v4820 = vmul.f32 %v4812, 1.12
      %v4821 = vmul.f32 %v4813, 1.12
      %v4822 = vadd.f32 %v4808, %v4820
      %v4823 = vadd.f32 %v4809, %v4821
      %v4824 = vmul.f32 %v4818, 2.0
      %v4825 = vmul.f32 %v4819, 2.0
      %v4826 = vsub.f32 %v4824, 1.0
      %v4827 = vsub.f32 %v4825, 1.0
      %v4830 = vrot.slane %v4827, 4
      %vm4831 = vcmask 1043456
      %v4832 = vsel %vm4831, %v4826, %v4830
      %4834 = vst [vmem:[%s327] sm:$0x77] %v4832
      %v4837 = vrot.slane %v4823, 7
      %vm4838 = vcmask 1040384
      %v4839 = vsel %vm4838, %v4822, %v4837
      %v4841 = vlaneseq
      %vm4842 = vcmp.ge.s32.totalorder %v4841, 0
      %vm4843 = vcmp.lt.s32.totalorder %v4841, 256
      %vm4844 = vmand %vm4842, %vm4843
      %s4845 = scalar_lea.vmem %s327, 3
      %4846 = vst.msk [vmem:[%s4845] ss:$4 sm:$0x3] %vm4844, %v4839
      %p4847 = scmp.lt.s32.totalorder %s21, 1
      %s4848 = scalar_select %p4847, %s21, 1
      %s4849 = smul.addr %s4848, 2
      %s4850 = smul.addr %s4849, 4
      %s4851 = scalar_lea.vmem %s8, %s4850
      // Predicated region
      $region60: #{implicit_generator_forward.1} parent=51 // pred_check
        %p4852 = pneg %p217
      $region61: #{implicit_generator_forward.1} parent=51 // pred_check_branch
        %4854 = sbr.rel (%p4852) target = $region63
      $region62: #{implicit_generator_forward.1} parent=51 // pred_region
        _
      $region63: #{implicit_generator_forward.1} parent=51 // pred_fallthru
        _
    $region52: #{implicit_generator_forward.1} parent=5 // pred_fallthru
      _
    %p4855 = scmp.le.s32.totalorder 2, %s16
    // Predicated region
    $region64: #{implicit_generator_forward.1} parent=5 // pred_check
      %p4856 = pneg %p4855
    $region65: #{implicit_generator_forward.1} parent=5 // pred_check_branch
      %4858 = sbr.rel (%p4856) target = $region67
    $region66: #{implicit_generator_forward.1} parent=5 // pred_region
      %s4859 = ssub.s32 %s16, 2
      // Predicated region
      $region68: #{implicit_generator_forward.1} parent=66 // pred_check
        %p4860 = pneg %p223
      $region69: #{implicit_generator_forward.1} parent=66 // pred_check_branch
        %4862 = sbr.rel (%p4860) target = $region71
      $region70: #{implicit_generator_forward.1} parent=66 // pred_region
        %p4863 = scmp.lt.s32.totalorder %s22, 1
        %s4864 = scalar_select %p4863, %s22, 1
        %s4865 = smul.addr %s4864, 2
        %s4866 = smul.addr %s4865, 4
        %s4867 = scalar_lea.vmem %s8, %s4866
      $region71: #{implicit_generator_forward.1} parent=66 // pred_fallthru
        _
    $region67: #{implicit_generator_forward.1} parent=5 // pred_fallthru
      _
  $region6: #{implicit_generator_forward.1} parent=0 // loop_footer
    %s20 = sadd.s32 1, %s16
  $region7: #{implicit_generator_forward.1} parent=0 // loop_footer_branch
    %15 = sbr.rel target = $region3
  $region8: #{implicit_generator_forward.1} parent=0 // loop_exit
    _

</llo_original>
